<compile_context>
chip_gen: v7x
topology: tpu7x:2x2x1
jax: 0.10.0
libtpu: 0.0.40
codegen_flags: <defaults>
</compile_context>

<pallas_src>
import functools

import jax
import jax.numpy as jnp
from jax.experimental import pallas as pl
from jax.experimental.pallas import tpu as pltpu


# ----------------------------------------------------------------------------
# Encoder GRU: streamed grid=(T,).  Hidden state is carried in the resident
# output block (constant out index) across grid steps.
# ----------------------------------------------------------------------------
def enc_gru_kernel(pe_ref, vtd_ref, scal_ref, bias_ref, whh_ref, bhn_ref,
                   hn_ref, *, H):
    t = pl.program_id(0)

    @pl.when(t == 0)
    def _():
        hn_ref[...] = jnp.zeros_like(hn_ref)

    h = hn_ref[...]
    # Input gates: gathered pre-projected pitch rows + (vel,time,dur) @ folded
    # scalar weight + folded bias (b_ih + b_sum@Wih^T + [b_hr, b_hz, 0]).
    gx = (pe_ref[...] + bias_ref[...]
          + jnp.dot(vtd_ref[...], scal_ref[...],
                    preferred_element_type=jnp.float32))
    gh = jnp.dot(h.astype(jnp.bfloat16), whh_ref[...],
                 preferred_element_type=jnp.float32)
    r = jax.nn.sigmoid(gx[:, 0:H] + gh[:, 0:H])
    z = jax.nn.sigmoid(gx[:, H:2 * H] + gh[:, H:2 * H])
    n = jnp.tanh(gx[:, 2 * H:3 * H] + r * (gh[:, 2 * H:3 * H] + bhn_ref[...]))
    hn_ref[...] = (1.0 - z) * n + z * h


def pallas_enc_gru(pe_proj, vtd, dp, *, T, H, B_pad):
    G = 3 * H
    const = lambda t: (0, 0)
    kern = functools.partial(enc_gru_kernel, H=H)
    return pl.pallas_call(
        kern,
        out_shape=jax.ShapeDtypeStruct((B_pad, H), jnp.float32),
        grid=(T,),
        in_specs=[
            pl.BlockSpec((B_pad, G), lambda t: (t, 0)),   # pre-projected pitch rows
            pl.BlockSpec((B_pad, 8), lambda t: (t, 0)),   # vel/time/dur (K padded to 8)
            pl.BlockSpec((8, G), const),                  # folded scalar-proj weight
            pl.BlockSpec((1, G), const),                  # folded input-gate bias
            pl.BlockSpec((H, G), const),                  # W_hh^T (bf16)
            pl.BlockSpec((1, H), const),                  # b_hn
        ],
        out_specs=pl.BlockSpec((B_pad, H), const),
        compiler_params=pltpu.CompilerParams(
            dimension_semantics=("arbitrary",)),
    )(pe_proj, vtd, dp["enc_scal_proj"], dp["enc_bias"],
      dp["enc_whh_bf16"], dp["enc_bhn"])


# ----------------------------------------------------------------------------
# Decoder: latent block fused at t == 0, streamed GRU recurrence over grid=(T,),
# per-timestep lane-dense output-head matmul.
# ----------------------------------------------------------------------------
def dec_gru_kernel(pe_ref, vtd_ref, scal_ref, bias_ref, hn_ref, eps_ref,
                   wmulv_ref, bmulv_ref, wl2h_ref, bl2h_ref, wzg_ref,
                   whh_ref, bhn_ref, wh_ref, bh_ref,
                   mulv_ref, out_ref, h_sc, zg_sc, *, H, L):
    t = pl.program_id(0)

    @pl.when(t == 0)
    def _():
        hn = hn_ref[...]
        mulv = (jnp.dot(hn, wmulv_ref[...], preferred_element_type=jnp.float32)
                + bmulv_ref[...])                        # (B, 2L) = [mu | logvar]
        mu = mulv[:, 0:L]
        logvar = mulv[:, L:2 * L]
        zlat = mu + eps_ref[...] * jnp.exp(0.5 * logvar)  # reparameterize
        mulv_ref[...] = mulv
        h_sc[...] = (jnp.dot(zlat, wl2h_ref[...],
                             preferred_element_type=jnp.float32)
                     + bl2h_ref[...])                     # latent_to_hidden
        zg_sc[...] = jnp.dot(zlat, wzg_ref[...],
                             preferred_element_type=jnp.float32)  # z @ W_L^T

    h = h_sc[...]
    gx = (pe_ref[...] + bias_ref[...] + zg_sc[...]
          + jnp.dot(vtd_ref[...], scal_ref[...],
                    preferred_element_type=jnp.float32))
    gh = jnp.dot(h.astype(jnp.bfloat16), whh_ref[...],
                 preferred_element_type=jnp.float32)
    r = jax.nn.sigmoid(gx[:, 0:H] + gh[:, 0:H])
    zg = jax.nn.sigmoid(gx[:, H:2 * H] + gh[:, H:2 * H])
    n = jnp.tanh(gx[:, 2 * H:3 * H] + r * (gh[:, 2 * H:3 * H] + bhn_ref[...]))
    h_new = (1.0 - zg) * n + zg * h
    h_sc[...] = h_new
    # Fused output heads, lane-dense (B_pad, 128), overlapped with recurrence.
    out_ref[...] = (jnp.dot(h_new.astype(jnp.bfloat16), wh_ref[...],
                            preferred_element_type=jnp.float32)
                    + bh_ref[...])


def pallas_dec_gru(pe_proj, vtd, h_n, eps_p, dp, *, T, H, L, B_pad):
    G = 3 * H
    HEAD_N = dp["w_heads_bf16"].shape[1]
    const = lambda t: (0, 0)
    kern = functools.partial(dec_gru_kernel, H=H, L=L)
    return pl.pallas_call(
        kern,
        out_shape=(jax.ShapeDtypeStruct((B_pad, 2 * L), jnp.float32),
                   jax.ShapeDtypeStruct((B_pad, T * HEAD_N), jnp.float32)),
        grid=(T,),
        in_specs=[
            pl.BlockSpec((B_pad, G), lambda t: (t, 0)),   # pre-projected pitch rows
            pl.BlockSpec((B_pad, 8), lambda t: (t, 0)),   # vel/time/dur (K padded)
            pl.BlockSpec((8, G), const),                  # folded scalar-proj weight
            pl.BlockSpec((1, G), const),                  # folded input-gate bias
            pl.BlockSpec((B_pad, H), const),              # encoder h_n
            pl.BlockSpec((B_pad, L), const),              # eps
            pl.BlockSpec((H, 2 * L), const),              # [W_mu | W_lv]^T
            pl.BlockSpec((1, 2 * L), const),              # [b_mu | b_lv]
            pl.BlockSpec((L, H), const),                  # latent_to_hidden W^T
            pl.BlockSpec((1, H), const),                  # latent_to_hidden b
            pl.BlockSpec((L, G), const),                  # decoder W_ih (z part)^T
            pl.BlockSpec((H, G), const),                  # decoder W_hh^T (bf16)
            pl.BlockSpec((1, H), const),                  # decoder b_hn
            pl.BlockSpec((H, HEAD_N), const),             # fused head weights (bf16)
            pl.BlockSpec((1, HEAD_N), const),             # fused head bias
        ],
        out_specs=(pl.BlockSpec((B_pad, 2 * L), const),
                   pl.BlockSpec((B_pad, HEAD_N), lambda t: (0, t))),
        scratch_shapes=[pltpu.VMEM((B_pad, H), jnp.float32),   # h carry
                        pltpu.VMEM((B_pad, G), jnp.float32)],  # z @ W_L^T
        compiler_params=pltpu.CompilerParams(
            dimension_semantics=("arbitrary",)),
    )(pe_proj, vtd, dp["dec_scal_proj"], dp["dec_bias"], h_n, eps_p,
      dp["w_mulv_t"], dp["b_mulv"], dp["w_l2h_t"], dp["b_l2h"],
      dp["dec_wihL_t"], dp["dec_whh_bf16"], dp["dec_bhn"],
      dp["w_heads_bf16"], dp["b_heads"])


# ----------------------------------------------------------------------------
# Parameter init (PyTorch-convention shapes) + one-time kernel-ready prep
# ----------------------------------------------------------------------------
def init_params(key, pitch_dim, embed_dim, hidden_dim, latent_dim):
    ks = jax.random.split(key, 32)
    s = 0.05
    i = iter(range(32))

    def nrm(shape):
        return s * jax.random.normal(ks[next(i)], shape, dtype=jnp.float32)

    H3 = 3 * hidden_dim
    return {
        "emb_table": nrm((pitch_dim, embed_dim)),
        "w_vel": nrm((embed_dim, 1)), "b_vel": nrm((embed_dim,)),
        "w_time": nrm((embed_dim, 1)), "b_time": nrm((embed_dim,)),
        "w_dur": nrm((embed_dim, 1)), "b_dur": nrm((embed_dim,)),
        "enc_w_ih": nrm((H3, embed_dim)), "enc_b_ih": nrm((H3,)),
        "enc_w_hh": nrm((H3, hidden_dim)), "enc_b_hh": nrm((H3,)),
        "w_mu": nrm((latent_dim, hidden_dim)), "b_mu": nrm((latent_dim,)),
        "w_lv": nrm((latent_dim, hidden_dim)), "b_lv": nrm((latent_dim,)),
        "w_l2h": nrm((hidden_dim, latent_dim)), "b_l2h": nrm((hidden_dim,)),
        "dec_w_ih": nrm((H3, latent_dim + embed_dim)), "dec_b_ih": nrm((H3,)),
        "dec_w_hh": nrm((H3, hidden_dim)), "dec_b_hh": nrm((H3,)),
        "w_op": nrm((pitch_dim, hidden_dim)), "b_op": nrm((pitch_dim,)),
        "w_ov": nrm((1, hidden_dim)), "b_ov": nrm((1,)),
        "w_ot": nrm((1, hidden_dim)), "b_ot": nrm((1,)),
        "w_od": nrm((1, hidden_dim)), "b_od": nrm((1,)),
    }


def prepare_params(p, hidden_dim, latent_dim):
    """One-time (outside jit): fold the embedding projection into the tables,
    pre-transpose/concatenate weights, fold GRU r/z hidden biases into the
    input-gate biases, and cast recurrence/head matmul weights to bf16."""
    E = p["emb_table"].shape[1]
    H, L = hidden_dim, latent_dim
    G = 3 * H
    pitch_dim = p["w_op"].shape[0]
    n_heads = pitch_dim + 3
    head_n = ((n_heads + 127) // 128) * 128

    # fused scalar projections (rows: vel, time, dur) and summed bias
    w_scal = jnp.concatenate([p["w_vel"].reshape(1, E),
                              p["w_time"].reshape(1, E),
                              p["w_dur"].reshape(1, E)], axis=0)      # (3, E)
    b_sum = (p["b_vel"] + p["b_time"] + p["b_dur"]).reshape(1, E)

    enc_wih_t = p["enc_w_ih"].T            # (E, 3H)
    # decoder input is concat([emb, z]) -> first E cols multiply emb, last L cols z
    dec_wihE_t = p["dec_w_ih"][:, :E].T    # (E, 3H)
    dec_wihL_t = p["dec_w_ih"][:, E:].T    # (L, 3H)

    def fold(wih_t, b_ih, b_hh):
        table = p["emb_table"] @ wih_t                              # (pitch, 3H)
        scal = jnp.pad(w_scal @ wih_t, ((0, 5), (0, 0)))            # (8, 3H)
        rz_bias = jnp.concatenate(
            [b_hh[0:H], b_hh[H:2 * H], jnp.zeros((H,), jnp.float32)])
        bias = b_sum @ wih_t + b_ih.reshape(1, G) + rz_bias.reshape(1, G)
        bhn = b_hh[2 * H:3 * H].reshape(1, H)
        return table, scal, bias, bhn

    enc_table, enc_scal, enc_bias, enc_bhn = fold(
        enc_wih_t, p["enc_b_ih"], p["enc_b_hh"])
    dec_table, dec_scal, dec_bias, dec_bhn = fold(
        dec_wihE_t, p["dec_b_ih"], p["dec_b_hh"])

    w_heads = jnp.concatenate(
        [p["w_op"], p["w_ov"], p["w_ot"], p["w_od"]], axis=0)       # (87, H)
    w_heads = jnp.pad(w_heads, ((0, head_n - n_heads), (0, 0)))     # (128, H)
    b_heads = jnp.concatenate([p["b_op"], p["b_ov"], p["b_ot"], p["b_od"]])
    b_heads = jnp.pad(b_heads, (0, head_n - n_heads)).reshape(1, head_n)

    return {
        # encoder (folded)
        "enc_table_proj": enc_table, "enc_scal_proj": enc_scal,
        "enc_bias": enc_bias, "enc_bhn": enc_bhn,
        "enc_whh_bf16": p["enc_w_hh"].T.astype(jnp.bfloat16),
        # decoder (folded)
        "dec_table_proj": dec_table, "dec_scal_proj": dec_scal,
        "dec_bias": dec_bias, "dec_bhn": dec_bhn,
        "dec_whh_bf16": p["dec_w_hh"].T.astype(jnp.bfloat16),
        "dec_wihL_t": dec_wihL_t,
        # latent heads fused
        "w_mulv_t": jnp.concatenate([p["w_mu"], p["w_lv"]], axis=0).T,  # (H, 2L)
        "b_mulv": jnp.concatenate([p["b_mu"], p["b_lv"]]).reshape(1, 2 * L),
        "w_l2h_t": p["w_l2h"].T, "b_l2h": p["b_l2h"].reshape(1, H),
        # output heads fused + lane-padded
        "w_heads_bf16": w_heads.T.astype(jnp.bfloat16),             # (H, 128)
        "b_heads": b_heads,                                         # (1, 128)
    }


# ----------------------------------------------------------------------------
# Forward pass
# ----------------------------------------------------------------------------
@functools.partial(jax.jit, static_argnames=("pitch_dim",))
def gruvae_forward(x, dp, eps, *, pitch_dim):
    B, T, _ = x.shape
    H = dp["enc_whh_bf16"].shape[0]
    L = dp["dec_wihL_t"].shape[0]
    G = 3 * H
    HEAD_N = dp["w_heads_bf16"].shape[1]
    B_pad = ((B + 15) // 16) * 16            # 16-row padding (bf16 sublane tile)
    M = T * B_pad

    # pad batch, switch to time-major (tiny glue transpose of (B,T,4))
    x_p = jnp.pad(x, ((0, B_pad - B), (0, 0), (0, 0)))
    eps_p = jnp.pad(eps, ((0, B_pad - B), (0, 0)))
    x_t = jnp.transpose(x_p, (1, 0, 2))                   # (T, B_pad, 4)
    pitch = x_t[:, :, 0].astype(jnp.int32)                # (T, B_pad)
    vtd = jnp.pad(x_t[:, :, 1:4].reshape(M, 3), ((0, 0), (0, 5)))   # (M, 8)

    # TODO(synk): data-dependent embedding gather stays in XLA glue; it now
    # gathers from the pre-projected (pitch_dim, 3H) tables directly.
    pe_enc = jnp.take(dp["enc_table_proj"], pitch, axis=0).reshape(M, G)
    pe_dec = jnp.take(dp["dec_table_proj"], pitch, axis=0).reshape(M, G)

    # K1: encoder recurrence (streamed over T) -> h_n
    h_n = pallas_enc_gru(pe_enc, vtd, dp, T=T, H=H, B_pad=B_pad)

    # K2: latent block (t==0) + decoder recurrence + fused output heads
    mulv, head = pallas_dec_gru(pe_dec, vtd, h_n, eps_p, dp,
                                T=T, H=H, L=L, B_pad=B_pad)

    mu = mulv[:B, 0:L]
    logvar = mulv[:B, L:2 * L]
    head = head.reshape(B_pad, T, HEAD_N)[:B]             # (B, T, 128), no transpose

    return {
        "pitch": head[..., 0:pitch_dim],
        "velocity": head[..., pitch_dim:pitch_dim + 1],
        "time": head[..., pitch_dim + 1:pitch_dim + 2],
        "duration": head[..., pitch_dim + 2:pitch_dim + 3],
        "mu": mu,
        "logvar": logvar,
    }


# ----------------------------------------------------------------------------
if __name__ == "__main__":
    PITCH_DIM, EMBED_DIM, HIDDEN_DIM, LATENT_DIM = 84, 128, 256, 64
    B, T = 2, 8

    root = jax.random.PRNGKey(0)
    k_param, k_pitch, k_feat, k_eps = jax.random.split(root, 4)

    params = init_params(k_param, PITCH_DIM, EMBED_DIM, HIDDEN_DIM, LATENT_DIM)
    dparams = prepare_params(params, HIDDEN_DIM, LATENT_DIM)

    pitch_ids = jax.random.randint(k_pitch, (B, T), 0, PITCH_DIM).astype(jnp.float32)
    feats = jax.random.normal(k_feat, (B, T, 3), dtype=jnp.float32)
    x = jnp.concatenate([pitch_ids[..., None], feats], axis=-1)   # (B, T, 4)
    eps = jax.random.normal(k_eps, (B, LATENT_DIM), dtype=jnp.float32)

    out = gruvae_forward(x, dparams, eps, pitch_dim=PITCH_DIM)
    out = jax.block_until_ready(out)

    assert out["pitch"].shape == (B, T, PITCH_DIM)
    assert out["velocity"].shape == (B, T, 1)
    assert out["time"].shape == (B, T, 1)
    assert out["duration"].shape == (B, T, 1)
    assert out["mu"].shape == (B, LATENT_DIM)
    assert out["logvar"].shape == (B, LATENT_DIM)
    for v in out.values():
        assert bool(jnp.all(jnp.isfinite(v)))

    print("KERNEL_OK")
</pallas_src>

<mosaic_0001>
module attributes {stable_mosaic.version = 11 : i64} {
  func.func @enc_gru_kernel(%arg0: i32, %arg1: memref<16x768xf32, #tpu.memory_space<vmem>>, %arg2: memref<16x8xf32, #tpu.memory_space<vmem>>, %arg3: memref<8x768xf32, #tpu.memory_space<vmem>>, %arg4: memref<1x768xf32, #tpu.memory_space<vmem>>, %arg5: memref<256x768xbf16, #tpu.memory_space<vmem>>, %arg6: memref<1x256xf32, #tpu.memory_space<vmem>>, %arg7: memref<16x256xf32, #tpu.memory_space<vmem>>) attributes {dimension_semantics = [#tpu.dimension_semantics<arbitrary>], iteration_bounds = array<i64: 8>, scalar_prefetch = 0 : i64, scratch_operands = 0 : i64, tpu.core_type = #tpu.core_type<tc>, window_params = [{transform_indices = @transform_0, window_bounds = array<i64: 16, 768>}, {transform_indices = @transform_1, window_bounds = array<i64: 16, 8>}, {pipeline_mode = #tpu.pipeline_mode<synchronous>, transform_indices = @transform_2, window_bounds = array<i64: 8, 768>}, {pipeline_mode = #tpu.pipeline_mode<synchronous>, transform_indices = @transform_3, window_bounds = array<i64: 1, 768>}, {pipeline_mode = #tpu.pipeline_mode<synchronous>, transform_indices = @transform_4, window_bounds = array<i64: 256, 768>}, {pipeline_mode = #tpu.pipeline_mode<synchronous>, transform_indices = @transform_5, window_bounds = array<i64: 1, 256>}, {pipeline_mode = #tpu.pipeline_mode<synchronous>, transform_indices = @transform_6, window_bounds = array<i64: 16, 256>}]} {
    %c0_i32 = arith.constant 0 : i32
    %0 = arith.cmpi eq, %arg0, %c0_i32 : i32
    %1 = arith.extui %0 : i1 to i32
    %c0_i32_0 = arith.constant 0 : i32
    %2 = arith.cmpi ne, %1, %c0_i32_0 : i32
    scf.if %2 {
      %cst_20 = arith.constant 0.000000e+00 : f32
      %45 = vector.broadcast %cst_20 : f32 to vector<16x256xf32>
      %c0_21 = arith.constant 0 : index
      %c0_22 = arith.constant 0 : index
      %46 = vector.load %arg7[%c0_21, %c0_22] : memref<16x256xf32, #tpu.memory_space<vmem>>, vector<16x256xf32>
      tpu.vector_store %arg7[%c0_21, %c0_22], %45 {strides = array<i32>} : memref<16x256xf32, #tpu.memory_space<vmem>>, vector<16x256xf32>,
    } else {
    }
    %c0 = arith.constant 0 : index
    %c0_1 = arith.constant 0 : index
    %3 = vector.load %arg7[%c0, %c0_1] : memref<16x256xf32, #tpu.memory_space<vmem>>, vector<16x256xf32>
    %c0_2 = arith.constant 0 : index
    %c0_3 = arith.constant 0 : index
    %4 = vector.load %arg1[%c0_2, %c0_3] : memref<16x768xf32, #tpu.memory_space<vmem>>, vector<16x768xf32>
    %c0_4 = arith.constant 0 : index
    %c0_5 = arith.constant 0 : index
    %5 = vector.load %arg4[%c0_4, %c0_5] : memref<1x768xf32, #tpu.memory_space<vmem>>, vector<1x768xf32>
    %6 = vector.broadcast %5 : vector<1x768xf32> to vector<16x768xf32>
    %7 = arith.addf %4, %6 : vector<16x768xf32>
    %c0_6 = arith.constant 0 : index
    %c0_7 = arith.constant 0 : index
    %8 = vector.load %arg2[%c0_6, %c0_7] : memref<16x8xf32, #tpu.memory_space<vmem>>, vector<16x8xf32>
    %c0_8 = arith.constant 0 : index
    %c0_9 = arith.constant 0 : index
    %9 = vector.load %arg3[%c0_8, %c0_9] : memref<8x768xf32, #tpu.memory_space<vmem>>, vector<8x768xf32>
    %cst = arith.constant dense<0.000000e+00> : vector<16x768xf32>
    %10 = tpu.matmul %8, %9, %cst {dimension_numbers = #tpu.dot_dimension_numbers<[1], [0], [0], [1], [0, 0, 1, 1], [], []>} : vector<16x8xf32>, vector<8x768xf32>, vector<16x768xf32> -> vector<16x768xf32>
    %11 = arith.addf %7, %10 : vector<16x768xf32>
    %12 = arith.truncf %3 : vector<16x256xf32> to vector<16x256xbf16>
    %c0_10 = arith.constant 0 : index
    %c0_11 = arith.constant 0 : index
    %13 = vector.load %arg5[%c0_10, %c0_11] : memref<256x768xbf16, #tpu.memory_space<vmem>>, vector<256x768xbf16>
    %cst_12 = arith.constant dense<0.000000e+00> : vector<16x768xf32>
    %14 = tpu.matmul %12, %13, %cst_12 {dimension_numbers = #tpu.dot_dimension_numbers<[1], [0], [0], [1], [0, 0, 1, 1], [], []>} : vector<16x256xbf16>, vector<256x768xbf16>, vector<16x768xf32> -> vector<16x768xf32>
    %15 = vector.extract_strided_slice %11 {offsets = [0, 0], sizes = [16, 256], strides = [1, 1]} : vector<16x768xf32> to vector<16x256xf32>
    %16 = vector.extract_strided_slice %14 {offsets = [0, 0], sizes = [16, 256], strides = [1, 1]} : vector<16x768xf32> to vector<16x256xf32>
    %17 = arith.addf %15, %16 : vector<16x256xf32>
    %18 = arith.negf %17 : vector<16x256xf32>
    %19 = math.exp %18 : vector<16x256xf32>
    %cst_13 = arith.constant 1.000000e+00 : f32
    %20 = vector.broadcast %cst_13 : f32 to vector<16x256xf32>
    %21 = arith.addf %20, %19 : vector<16x256xf32>
    %22 = arith.divf %20, %21 : vector<16x256xf32>
    %23 = vector.extract_strided_slice %11 {offsets = [0, 256], sizes = [16, 256], strides = [1, 1]} : vector<16x768xf32> to vector<16x256xf32>
    %24 = vector.extract_strided_slice %14 {offsets = [0, 256], sizes = [16, 256], strides = [1, 1]} : vector<16x768xf32> to vector<16x256xf32>
    %25 = arith.addf %23, %24 : vector<16x256xf32>
    %26 = arith.negf %25 : vector<16x256xf32>
    %27 = math.exp %26 : vector<16x256xf32>
    %cst_14 = arith.constant 1.000000e+00 : f32
    %28 = vector.broadcast %cst_14 : f32 to vector<16x256xf32>
    %29 = arith.addf %28, %27 : vector<16x256xf32>
    %30 = arith.divf %28, %29 : vector<16x256xf32>
    %31 = vector.extract_strided_slice %11 {offsets = [0, 512], sizes = [16, 256], strides = [1, 1]} : vector<16x768xf32> to vector<16x256xf32>
    %32 = vector.extract_strided_slice %14 {offsets = [0, 512], sizes = [16, 256], strides = [1, 1]} : vector<16x768xf32> to vector<16x256xf32>
    %c0_15 = arith.constant 0 : index
    %c0_16 = arith.constant 0 : index
    %33 = vector.load %arg6[%c0_15, %c0_16] : memref<1x256xf32, #tpu.memory_space<vmem>>, vector<1x256xf32>
    %34 = vector.broadcast %33 : vector<1x256xf32> to vector<16x256xf32>
    %35 = arith.addf %32, %34 : vector<16x256xf32>
    %36 = arith.mulf %22, %35 : vector<16x256xf32>
    %37 = arith.addf %31, %36 : vector<16x256xf32>
    %38 = math.tanh %37 : vector<16x256xf32>
    %cst_17 = arith.constant 1.000000e+00 : f32
    %39 = vector.broadcast %cst_17 : f32 to vector<16x256xf32>
    %40 = arith.subf %39, %30 : vector<16x256xf32>
    %41 = arith.mulf %40, %38 : vector<16x256xf32>
    %42 = arith.mulf %30, %3 : vector<16x256xf32>
    %43 = arith.addf %41, %42 : vector<16x256xf32>
    %c0_18 = arith.constant 0 : index
    %c0_19 = arith.constant 0 : index
    %44 = vector.load %arg7[%c0_18, %c0_19] : memref<16x256xf32, #tpu.memory_space<vmem>>, vector<16x256xf32>
    tpu.vector_store %arg7[%c0_18, %c0_19], %43 {strides = array<i32>} : memref<16x256xf32, #tpu.memory_space<vmem>>, vector<16x256xf32>,
    return
  }
  func.func @transform_0(%arg0: i32) -> (i32, i32) {
    %c0_i32 = arith.constant 0 : i32
    %c0_i32_0 = arith.constant 0 : i32
    return %arg0, %c0_i32 : i32, i32
  }
  func.func @transform_1(%arg0: i32) -> (i32, i32) {
    %c0_i32 = arith.constant 0 : i32
    %c0_i32_0 = arith.constant 0 : i32
    return %arg0, %c0_i32 : i32, i32
  }
  func.func @transform_2(%arg0: i32) -> (i32, i32) {
    %c0_i32 = arith.constant 0 : i32
    %c0_i32_0 = arith.constant 0 : i32
    %c0_i32_1 = arith.constant 0 : i32
    return %c0_i32, %c0_i32_0 : i32, i32
  }
  func.func @transform_3(%arg0: i32) -> (i32, i32) {
    %c0_i32 = arith.constant 0 : i32
    %c0_i32_0 = arith.constant 0 : i32
    %c0_i32_1 = arith.constant 0 : i32
    return %c0_i32, %c0_i32_0 : i32, i32
  }
  func.func @transform_4(%arg0: i32) -> (i32, i32) {
    %c0_i32 = arith.constant 0 : i32
    %c0_i32_0 = arith.constant 0 : i32
    %c0_i32_1 = arith.constant 0 : i32
    return %c0_i32, %c0_i32_0 : i32, i32
  }
  func.func @transform_5(%arg0: i32) -> (i32, i32) {
    %c0_i32 = arith.constant 0 : i32
    %c0_i32_0 = arith.constant 0 : i32
    %c0_i32_1 = arith.constant 0 : i32
    return %c0_i32, %c0_i32_0 : i32, i32
  }
  func.func @transform_6(%arg0: i32) -> (i32, i32) {
    %c0_i32 = arith.constant 0 : i32
    %c0_i32_0 = arith.constant 0 : i32
    %c0_i32_1 = arith.constant 0 : i32
    return %c0_i32, %c0_i32_0 : i32, i32
  }
}

module attributes {stable_mosaic.version = 11 : i64} {
  func.func @dec_gru_kernel(%arg0: i32, %arg1: memref<16x768xf32, #tpu.memory_space<vmem>>, %arg2: memref<16x8xf32, #tpu.memory_space<vmem>>, %arg3: memref<8x768xf32, #tpu.memory_space<vmem>>, %arg4: memref<1x768xf32, #tpu.memory_space<vmem>>, %arg5: memref<16x256xf32, #tpu.memory_space<vmem>>, %arg6: memref<16x64xf32, #tpu.memory_space<vmem>>, %arg7: memref<256x128xf32, #tpu.memory_space<vmem>>, %arg8: memref<1x128xf32, #tpu.memory_space<vmem>>, %arg9: memref<64x256xf32, #tpu.memory_space<vmem>>, %arg10: memref<1x256xf32, #tpu.memory_space<vmem>>, %arg11: memref<64x768xf32, #tpu.memory_space<vmem>>, %arg12: memref<256x768xbf16, #tpu.memory_space<vmem>>, %arg13: memref<1x256xf32, #tpu.memory_space<vmem>>, %arg14: memref<256x128xbf16, #tpu.memory_space<vmem>>, %arg15: memref<1x128xf32, #tpu.memory_space<vmem>>, %arg16: memref<16x128xf32, #tpu.memory_space<vmem>>, %arg17: memref<16x128xf32, #tpu.memory_space<vmem>>, %arg18: memref<16x256xf32, #tpu.memory_space<vmem>>, %arg19: memref<16x768xf32, #tpu.memory_space<vmem>>) attributes {dimension_semantics = [#tpu.dimension_semantics<arbitrary>], iteration_bounds = array<i64: 8>, scalar_prefetch = 0 : i64, scratch_operands = 2 : i64, tpu.core_type = #tpu.core_type<tc>, window_params = [{transform_indices = @transform_0, window_bounds = array<i64: 16, 768>}, {transform_indices = @transform_1, window_bounds = array<i64: 16, 8>}, {pipeline_mode = #tpu.pipeline_mode<synchronous>, transform_indices = @transform_2, window_bounds = array<i64: 8, 768>}, {pipeline_mode = #tpu.pipeline_mode<synchronous>, transform_indices = @transform_3, window_bounds = array<i64: 1, 768>}, {pipeline_mode = #tpu.pipeline_mode<synchronous>, transform_indices = @transform_4, window_bounds = array<i64: 16, 256>}, {pipeline_mode = #tpu.pipeline_mode<synchronous>, transform_indices = @transform_5, window_bounds = array<i64: 16, 64>}, {pipeline_mode = #tpu.pipeline_mode<synchronous>, transform_indices = @transform_6, window_bounds = array<i64: 256, 128>}, {pipeline_mode = #tpu.pipeline_mode<synchronous>, transform_indices = @transform_7, window_bounds = array<i64: 1, 128>}, {pipeline_mode = #tpu.pipeline_mode<synchronous>, transform_indices = @transform_8, window_bounds = array<i64: 64, 256>}, {pipeline_mode = #tpu.pipeline_mode<synchronous>, transform_indices = @transform_9, window_bounds = array<i64: 1, 256>}, {pipeline_mode = #tpu.pipeline_mode<synchronous>, transform_indices = @transform_10, window_bounds = array<i64: 64, 768>}, {pipeline_mode = #tpu.pipeline_mode<synchronous>, transform_indices = @transform_11, window_bounds = array<i64: 256, 768>}, {pipeline_mode = #tpu.pipeline_mode<synchronous>, transform_indices = @transform_12, window_bounds = array<i64: 1, 256>}, {pipeline_mode = #tpu.pipeline_mode<synchronous>, transform_indices = @transform_13, window_bounds = array<i64: 256, 128>}, {pipeline_mode = #tpu.pipeline_mode<synchronous>, transform_indices = @transform_14, window_bounds = array<i64: 1, 128>}, {pipeline_mode = #tpu.pipeline_mode<synchronous>, transform_indices = @transform_15, window_bounds = array<i64: 16, 128>}, {transform_indices = @transform_16, window_bounds = array<i64: 16, 128>}]} {
    %c0_i32 = arith.constant 0 : i32
    %0 = arith.cmpi eq, %arg0, %c0_i32 : i32
    %1 = arith.extui %0 : i1 to i32
    %c0_i32_0 = arith.constant 0 : i32
    %2 = arith.cmpi ne, %1, %c0_i32_0 : i32
    scf.if %2 {
      %c0_29 = arith.constant 0 : index
      %c0_30 = arith.constant 0 : index
      %54 = vector.load %arg5[%c0_29, %c0_30] : memref<16x256xf32, #tpu.memory_space<vmem>>, vector<16x256xf32>
      %c0_31 = arith.constant 0 : index
      %c0_32 = arith.constant 0 : index
      %55 = vector.load %arg7[%c0_31, %c0_32] : memref<256x128xf32, #tpu.memory_space<vmem>>, vector<256x128xf32>
      %cst_33 = arith.constant dense<0.000000e+00> : vector<16x128xf32>
      %56 = tpu.matmul %54, %55, %cst_33 {dimension_numbers = #tpu.dot_dimension_numbers<[1], [0], [0], [1], [0, 0, 1, 1], [], []>} : vector<16x256xf32>, vector<256x128xf32>, vector<16x128xf32> -> vector<16x128xf32>
      %c0_34 = arith.constant 0 : index
      %c0_35 = arith.constant 0 : index
      %57 = vector.load %arg8[%c0_34, %c0_35] : memref<1x128xf32, #tpu.memory_space<vmem>>, vector<1x128xf32>
      %58 = vector.broadcast %57 : vector<1x128xf32> to vector<16x128xf32>
      %59 = arith.addf %56, %58 : vector<16x128xf32>
      %60 = vector.extract_strided_slice %59 {offsets = [0, 0], sizes = [16, 64], strides = [1, 1]} : vector<16x128xf32> to vector<16x64xf32>
      %61 = vector.extract_strided_slice %59 {offsets = [0, 64], sizes = [16, 64], strides = [1, 1]} : vector<16x128xf32> to vector<16x64xf32>
      %c0_36 = arith.constant 0 : index
      %c0_37 = arith.constant 0 : index
      %62 = vector.load %arg6[%c0_36, %c0_37] : memref<16x64xf32, #tpu.memory_space<vmem>>, vector<16x64xf32>
      %cst_38 = arith.constant 5.000000e-01 : f32
      %63 = vector.broadcast %cst_38 : f32 to vector<16x64xf32>
      %64 = arith.mulf %63, %61 : vector<16x64xf32>
      %65 = math.exp %64 : vector<16x64xf32>
      %66 = arith.mulf %62, %65 : vector<16x64xf32>
      %67 = arith.addf %60, %66 : vector<16x64xf32>
      %c0_39 = arith.constant 0 : index
      %c0_40 = arith.constant 0 : index
      %68 = vector.load %arg16[%c0_39, %c0_40] : memref<16x128xf32, #tpu.memory_space<vmem>>, vector<16x128xf32>
      tpu.vector_store %arg16[%c0_39, %c0_40], %59 {strides = array<i32>} : memref<16x128xf32, #tpu.memory_space<vmem>>, vector<16x128xf32>,
      %c0_41 = arith.constant 0 : index
      %c0_42 = arith.constant 0 : index
      %69 = vector.load %arg9[%c0_41, %c0_42] : memref<64x256xf32, #tpu.memory_space<vmem>>, vector<64x256xf32>
      %cst_43 = arith.constant dense<0.000000e+00> : vector<16x256xf32>
      %70 = tpu.matmul %67, %69, %cst_43 {dimension_numbers = #tpu.dot_dimension_numbers<[1], [0], [0], [1], [0, 0, 1, 1], [], []>} : vector<16x64xf32>, vector<64x256xf32>, vector<16x256xf32> -> vector<16x256xf32>
      %c0_44 = arith.constant 0 : index
      %c0_45 = arith.constant 0 : index
      %71 = vector.load %arg10[%c0_44, %c0_45] : memref<1x256xf32, #tpu.memory_space<vmem>>, vector<1x256xf32>
      %72 = vector.broadcast %71 : vector<1x256xf32> to vector<16x256xf32>
      %73 = arith.addf %70, %72 : vector<16x256xf32>
      %c0_46 = arith.constant 0 : index
      %c0_47 = arith.constant 0 : index
      %74 = vector.load %arg18[%c0_46, %c0_47] : memref<16x256xf32, #tpu.memory_space<vmem>>, vector<16x256xf32>
      tpu.vector_store %arg18[%c0_46, %c0_47], %73 {strides = array<i32>} : memref<16x256xf32, #tpu.memory_space<vmem>>, vector<16x256xf32>,
      %c0_48 = arith.constant 0 : index
      %c0_49 = arith.constant 0 : index
      %75 = vector.load %arg11[%c0_48, %c0_49] : memref<64x768xf32, #tpu.memory_space<vmem>>, vector<64x768xf32>
      %cst_50 = arith.constant dense<0.000000e+00> : vector<16x768xf32>
      %76 = tpu.matmul %67, %75, %cst_50 {dimension_numbers = #tpu.dot_dimension_numbers<[1], [0], [0], [1], [0, 0, 1, 1], [], []>} : vector<16x64xf32>, vector<64x768xf32>, vector<16x768xf32> -> vector<16x768xf32>
      %c0_51 = arith.constant 0 : index
      %c0_52 = arith.constant 0 : index
      %77 = vector.load %arg19[%c0_51, %c0_52] : memref<16x768xf32, #tpu.memory_space<vmem>>, vector<16x768xf32>
      tpu.vector_store %arg19[%c0_51, %c0_52], %76 {strides = array<i32>} : memref<16x768xf32, #tpu.memory_space<vmem>>, vector<16x768xf32>,
    } else {
    }
    %c0 = arith.constant 0 : index
    %c0_1 = arith.constant 0 : index
    %3 = vector.load %arg18[%c0, %c0_1] : memref<16x256xf32, #tpu.memory_space<vmem>>, vector<16x256xf32>
    %c0_2 = arith.constant 0 : index
    %c0_3 = arith.constant 0 : index
    %4 = vector.load %arg1[%c0_2, %c0_3] : memref<16x768xf32, #tpu.memory_space<vmem>>, vector<16x768xf32>
    %c0_4 = arith.constant 0 : index
    %c0_5 = arith.constant 0 : index
    %5 = vector.load %arg4[%c0_4, %c0_5] : memref<1x768xf32, #tpu.memory_space<vmem>>, vector<1x768xf32>
    %6 = vector.broadcast %5 : vector<1x768xf32> to vector<16x768xf32>
    %7 = arith.addf %4, %6 : vector<16x768xf32>
    %c0_6 = arith.constant 0 : index
    %c0_7 = arith.constant 0 : index
    %8 = vector.load %arg19[%c0_6, %c0_7] : memref<16x768xf32, #tpu.memory_space<vmem>>, vector<16x768xf32>
    %9 = arith.addf %7, %8 : vector<16x768xf32>
    %c0_8 = arith.constant 0 : index
    %c0_9 = arith.constant 0 : index
    %10 = vector.load %arg2[%c0_8, %c0_9] : memref<16x8xf32, #tpu.memory_space<vmem>>, vector<16x8xf32>
    %c0_10 = arith.constant 0 : index
    %c0_11 = arith.constant 0 : index
    %11 = vector.load %arg3[%c0_10, %c0_11] : memref<8x768xf32, #tpu.memory_space<vmem>>, vector<8x768xf32>
    %cst = arith.constant dense<0.000000e+00> : vector<16x768xf32>
    %12 = tpu.matmul %10, %11, %cst {dimension_numbers = #tpu.dot_dimension_numbers<[1], [0], [0], [1], [0, 0, 1, 1], [], []>} : vector<16x8xf32>, vector<8x768xf32>, vector<16x768xf32> -> vector<16x768xf32>
    %13 = arith.addf %9, %12 : vector<16x768xf32>
    %14 = arith.truncf %3 : vector<16x256xf32> to vector<16x256xbf16>
    %c0_12 = arith.constant 0 : index
    %c0_13 = arith.constant 0 : index
    %15 = vector.load %arg12[%c0_12, %c0_13] : memref<256x768xbf16, #tpu.memory_space<vmem>>, vector<256x768xbf16>
    %cst_14 = arith.constant dense<0.000000e+00> : vector<16x768xf32>
    %16 = tpu.matmul %14, %15, %cst_14 {dimension_numbers = #tpu.dot_dimension_numbers<[1], [0], [0], [1], [0, 0, 1, 1], [], []>} : vector<16x256xbf16>, vector<256x768xbf16>, vector<16x768xf32> -> vector<16x768xf32>
    %17 = vector.extract_strided_slice %13 {offsets = [0, 0], sizes = [16, 256], strides = [1, 1]} : vector<16x768xf32> to vector<16x256xf32>
    %18 = vector.extract_strided_slice %16 {offsets = [0, 0], sizes = [16, 256], strides = [1, 1]} : vector<16x768xf32> to vector<16x256xf32>
    %19 = arith.addf %17, %18 : vector<16x256xf32>
    %20 = arith.negf %19 : vector<16x256xf32>
    %21 = math.exp %20 : vector<16x256xf32>
    %cst_15 = arith.constant 1.000000e+00 : f32
    %22 = vector.broadcast %cst_15 : f32 to vector<16x256xf32>
    %23 = arith.addf %22, %21 : vector<16x256xf32>
    %24 = arith.divf %22, %23 : vector<16x256xf32>
    %25 = vector.extract_strided_slice %13 {offsets = [0, 256], sizes = [16, 256], strides = [1, 1]} : vector<16x768xf32> to vector<16x256xf32>
    %26 = vector.extract_strided_slice %16 {offsets = [0, 256], sizes = [16, 256], strides = [1, 1]} : vector<16x768xf32> to vector<16x256xf32>
    %27 = arith.addf %25, %26 : vector<16x256xf32>
    %28 = arith.negf %27 : vector<16x256xf32>
    %29 = math.exp %28 : vector<16x256xf32>
    %cst_16 = arith.constant 1.000000e+00 : f32
    %30 = vector.broadcast %cst_16 : f32 to vector<16x256xf32>
    %31 = arith.addf %30, %29 : vector<16x256xf32>
    %32 = arith.divf %30, %31 : vector<16x256xf32>
    %33 = vector.extract_strided_slice %13 {offsets = [0, 512], sizes = [16, 256], strides = [1, 1]} : vector<16x768xf32> to vector<16x256xf32>
    %34 = vector.extract_strided_slice %16 {offsets = [0, 512], sizes = [16, 256], strides = [1, 1]} : vector<16x768xf32> to vector<16x256xf32>
    %c0_17 = arith.constant 0 : index
    %c0_18 = arith.constant 0 : index
    %35 = vector.load %arg13[%c0_17, %c0_18] : memref<1x256xf32, #tpu.memory_space<vmem>>, vector<1x256xf32>
    %36 = vector.broadcast %35 : vector<1x256xf32> to vector<16x256xf32>
    %37 = arith.addf %34, %36 : vector<16x256xf32>
    %38 = arith.mulf %24, %37 : vector<16x256xf32>
    %39 = arith.addf %33, %38 : vector<16x256xf32>
    %40 = math.tanh %39 : vector<16x256xf32>
    %cst_19 = arith.constant 1.000000e+00 : f32
    %41 = vector.broadcast %cst_19 : f32 to vector<16x256xf32>
    %42 = arith.subf %41, %32 : vector<16x256xf32>
    %43 = arith.mulf %42, %40 : vector<16x256xf32>
    %44 = arith.mulf %32, %3 : vector<16x256xf32>
    %45 = arith.addf %43, %44 : vector<16x256xf32>
    %c0_20 = arith.constant 0 : index
    %c0_21 = arith.constant 0 : index
    %46 = vector.load %arg18[%c0_20, %c0_21] : memref<16x256xf32, #tpu.memory_space<vmem>>, vector<16x256xf32>
    tpu.vector_store %arg18[%c0_20, %c0_21], %45 {strides = array<i32>} : memref<16x256xf32, #tpu.memory_space<vmem>>, vector<16x256xf32>,
    %47 = arith.truncf %45 : vector<16x256xf32> to vector<16x256xbf16>
    %c0_22 = arith.constant 0 : index
    %c0_23 = arith.constant 0 : index
    %48 = vector.load %arg14[%c0_22, %c0_23] : memref<256x128xbf16, #tpu.memory_space<vmem>>, vector<256x128xbf16>
    %cst_24 = arith.constant dense<0.000000e+00> : vector<16x128xf32>
    %49 = tpu.matmul %47, %48, %cst_24 {dimension_numbers = #tpu.dot_dimension_numbers<[1], [0], [0], [1], [0, 0, 1, 1], [], []>} : vector<16x256xbf16>, vector<256x128xbf16>, vector<16x128xf32> -> vector<16x128xf32>
    %c0_25 = arith.constant 0 : index
    %c0_26 = arith.constant 0 : index
    %50 = vector.load %arg15[%c0_25, %c0_26] : memref<1x128xf32, #tpu.memory_space<vmem>>, vector<1x128xf32>
    %51 = vector.broadcast %50 : vector<1x128xf32> to vector<16x128xf32>
    %52 = arith.addf %49, %51 : vector<16x128xf32>
    %c0_27 = arith.constant 0 : index
    %c0_28 = arith.constant 0 : index
    %53 = vector.load %arg17[%c0_27, %c0_28] : memref<16x128xf32, #tpu.memory_space<vmem>>, vector<16x128xf32>
    tpu.vector_store %arg17[%c0_27, %c0_28], %52 {strides = array<i32>} : memref<16x128xf32, #tpu.memory_space<vmem>>, vector<16x128xf32>,
    return
  }
  func.func @transform_0(%arg0: i32) -> (i32, i32) {
    %c0_i32 = arith.constant 0 : i32
    %c0_i32_0 = arith.constant 0 : i32
    return %arg0, %c0_i32 : i32, i32
  }
  func.func @transform_1(%arg0: i32) -> (i32, i32) {
    %c0_i32 = arith.constant 0 : i32
    %c0_i32_0 = arith.constant 0 : i32
    return %arg0, %c0_i32 : i32, i32
  }
  func.func @transform_2(%arg0: i32) -> (i32, i32) {
    %c0_i32 = arith.constant 0 : i32
    %c0_i32_0 = arith.constant 0 : i32
    %c0_i32_1 = arith.constant 0 : i32
    return %c0_i32, %c0_i32_0 : i32, i32
  }
  func.func @transform_3(%arg0: i32) -> (i32, i32) {
    %c0_i32 = arith.constant 0 : i32
    %c0_i32_0 = arith.constant 0 : i32
    %c0_i32_1 = arith.constant 0 : i32
    return %c0_i32, %c0_i32_0 : i32, i32
  }
  func.func @transform_4(%arg0: i32) -> (i32, i32) {
    %c0_i32 = arith.constant 0 : i32
    %c0_i32_0 = arith.constant 0 : i32
    %c0_i32_1 = arith.constant 0 : i32
    return %c0_i32, %c0_i32_0 : i32, i32
  }
  func.func @transform_5(%arg0: i32) -> (i32, i32) {
    %c0_i32 = arith.constant 0 : i32
    %c0_i32_0 = arith.constant 0 : i32
    %c0_i32_1 = arith.constant 0 : i32
    return %c0_i32, %c0_i32_0 : i32, i32
  }
  func.func @transform_6(%arg0: i32) -> (i32, i32) {
    %c0_i32 = arith.constant 0 : i32
    %c0_i32_0 = arith.constant 0 : i32
    %c0_i32_1 = arith.constant 0 : i32
    return %c0_i32, %c0_i32_0 : i32, i32
  }
  func.func @transform_7(%arg0: i32) -> (i32, i32) {
    %c0_i32 = arith.constant 0 : i32
    %c0_i32_0 = arith.constant 0 : i32
    %c0_i32_1 = arith.constant 0 : i32
    return %c0_i32, %c0_i32_0 : i32, i32
  }
  func.func @transform_8(%arg0: i32) -> (i32, i32) {
    %c0_i32 = arith.constant 0 : i32
    %c0_i32_0 = arith.constant 0 : i32
    %c0_i32_1 = arith.constant 0 : i32
    return %c0_i32, %c0_i32_0 : i32, i32
  }
  func.func @transform_9(%arg0: i32) -> (i32, i32) {
    %c0_i32 = arith.constant 0 : i32
    %c0_i32_0 = arith.constant 0 : i32
    %c0_i32_1 = arith.constant 0 : i32
    return %c0_i32, %c0_i32_0 : i32, i32
  }
  func.func @transform_10(%arg0: i32) -> (i32, i32) {
    %c0_i32 = arith.constant 0 : i32
    %c0_i32_0 = arith.constant 0 : i32
    %c0_i32_1 = arith.constant 0 : i32
    return %c0_i32, %c0_i32_0 : i32, i32
  }
  func.func @transform_11(%arg0: i32) -> (i32, i32) {
    %c0_i32 = arith.constant 0 : i32
    %c0_i32_0 = arith.constant 0 : i32
    %c0_i32_1 = arith.constant 0 : i32
    return %c0_i32, %c0_i32_0 : i32, i32
  }
  func.func @transform_12(%arg0: i32) -> (i32, i32) {
    %c0_i32 = arith.constant 0 : i32
    %c0_i32_0 = arith.constant 0 : i32
    %c0_i32_1 = arith.constant 0 : i32
    return %c0_i32, %c0_i32_0 : i32, i32
  }
  func.func @transform_13(%arg0: i32) -> (i32, i32) {
    %c0_i32 = arith.constant 0 : i32
    %c0_i32_0 = arith.constant 0 : i32
    %c0_i32_1 = arith.constant 0 : i32
    return %c0_i32, %c0_i32_0 : i32, i32
  }
  func.func @transform_14(%arg0: i32) -> (i32, i32) {
    %c0_i32 = arith.constant 0 : i32
    %c0_i32_0 = arith.constant 0 : i32
    %c0_i32_1 = arith.constant 0 : i32
    return %c0_i32, %c0_i32_0 : i32, i32
  }
  func.func @transform_15(%arg0: i32) -> (i32, i32) {
    %c0_i32 = arith.constant 0 : i32
    %c0_i32_0 = arith.constant 0 : i32
    %c0_i32_1 = arith.constant 0 : i32
    return %c0_i32, %c0_i32_0 : i32, i32
  }
  func.func @transform_16(%arg0: i32) -> (i32, i32) {
    %c0_i32 = arith.constant 0 : i32
    %c0_i32_0 = arith.constant 0 : i32
    return %c0_i32, %arg0 : i32, i32
  }
}

</mosaic_0001>

<llo_original>
// kernel: gruvae_forward.2
$region0: #{gruvae_forward.2}
  #allocation0 [shape = 'u32[]', space=smem, size = 0x4, offset = 0x4, fixed_abs, tag = 'smem constant byte address 0x4 - core index']
  #allocation1 [shape = 'u32[144,128]{1,0:T(1,128)}', space=vmem, size = 0x12000, scoped, tag = 'internal scratch']
  %s0 = inlined_call_operand.vmem [shape: f32[128,768], index: 0, kind: input, shape index: {}]
  %s1 = inlined_call_operand.vmem [shape: f32[128,8], index: 1, kind: input, shape index: {}]
  %s2 = inlined_call_operand.vmem [shape: f32[8,768], index: 2, kind: input, shape index: {}]
  %s3 = inlined_call_operand.vmem [shape: f32[1,768], index: 3, kind: input, shape index: {}]
  %s4 = inlined_call_operand.vmem [shape: bf16[256,768], index: 4, kind: input, shape index: {}]
  %s5 = inlined_call_operand.vmem [shape: f32[1,256], index: 5, kind: input, shape index: {}]
  %s6 = inlined_call_operand.vmem [shape: f32[16,256], index: 6, kind: output, shape index: {}]
  %s7 = sld [smem:[#allocation0]]
  $region61: #{gruvae_forward.2} parent=0
    _
  %s9 = ssub.s32 1, %s7
  %s10 = scalar_select 0, %s9, %s7
  loop: start=0, step=1, limit=10
  $region2: #{gruvae_forward.2} parent=0 // loop_pre_header
    _
  $region3: #{gruvae_forward.2} parent=0 // loop_header
    %s12 = sphi 0, %s16
    %p13 = scmp.ge.s32.totalorder %s12, 10
    %s22 = sphi 0, %s24
    %s25 = sphi 0, %s22
    %s26 = sphi 0, %s25
    %s42 = sphi 0, %s26
    %s48 = sphi 0, %s50
    %s51 = sphi 0, %s48
    %s52 = sphi 0, %s51
    %s68 = sphi 0, %s52
    %s72 = sphi 0, %s72
    %s74 = sphi 0, %s72
    %s75 = sphi 0, %s74
    %s89 = sphi 0, %s75
    %s93 = sphi 0, %s93
    %s95 = sphi 0, %s93
    %s96 = sphi 0, %s95
    %s110 = sphi 0, %s96
    %s114 = sphi 0, %s114
    %s116 = sphi 0, %s114
    %s117 = sphi 0, %s116
    %s131 = sphi 0, %s117
    %s135 = sphi 0, %s135
    %s137 = sphi 0, %s135
    %s138 = sphi 0, %s137
    %s152 = sphi 0, %s138
    %s156 = sphi 0, %s156
    %s158 = sphi 0, %s156
    %s159 = sphi 0, %s158
    %s173 = sphi 0, %s159
  $region4: #{gruvae_forward.2} parent=0 // loop_header_branch
    %15 = sbr.rel (%p13) target = $region8
  $region5: #{gruvae_forward.2} parent=0 // loop_body
    %s17 = ssub.s32 %s12, 1
    %s18 = ssub.s32 %s12, 2
    %s19 = sadd.s32 %s12, 1
    %s20 = ssub.s32 %s12, %s19
    %p21 = scmp.eq.s32.totalorder %s20, 0
    %s23 = sadd.s32 %s22, 1
    %s24 = scalar_select %p21, %s22, %s23
    %p27 = pneg %p21
    %p28 = scmp.eq.s32.totalorder %s12, 7
    %p29 = por %p27, %p28
    %p30 = scmp.ne.s32.totalorder %s22, %s25
    %p31 = scmp.eq.s32.totalorder %s12, 0
    %p32 = por %p30, %p31
    %p33 = scmp.ne.s32.totalorder %s22, %s25
    %p34 = scmp.eq.s32.totalorder %s17, 7
    %p35 = por %p33, %p34
    %p36 = scmp.ne.s32.totalorder %s25, %s26
    %p37 = scmp.eq.s32.totalorder %s17, 0
    %p38 = por %p36, %p37
    %p39 = scmp.ne.s32.totalorder %s25, %s26
    %p40 = scmp.eq.s32.totalorder %s18, 7
    %p41 = por %p39, %p40
    %p43 = scmp.ne.s32.totalorder %s26, %s42
    %p44 = scmp.eq.s32.totalorder %s18, 0
    %p45 = por %p43, %p44
    %s46 = ssub.s32 %s12, %s19
    %p47 = scmp.eq.s32.totalorder %s46, 0
    %s49 = sadd.s32 %s48, 1
    %s50 = scalar_select %p47, %s48, %s49
    %p53 = pneg %p47
    %p54 = scmp.eq.s32.totalorder %s12, 7
    %p55 = por %p53, %p54
    %p56 = scmp.ne.s32.totalorder %s48, %s51
    %p57 = scmp.eq.s32.totalorder %s12, 0
    %p58 = por %p56, %p57
    %p59 = scmp.ne.s32.totalorder %s48, %s51
    %p60 = scmp.eq.s32.totalorder %s17, 7
    %p61 = por %p59, %p60
    %p62 = scmp.ne.s32.totalorder %s51, %s52
    %p63 = scmp.eq.s32.totalorder %s17, 0
    %p64 = por %p62, %p63
    %p65 = scmp.ne.s32.totalorder %s51, %s52
    %p66 = scmp.eq.s32.totalorder %s18, 7
    %p67 = por %p65, %p66
    %p69 = scmp.ne.s32.totalorder %s52, %s68
    %p70 = scmp.eq.s32.totalorder %s18, 0
    %p71 = por %p69, %p70
    %s73 = sadd.s32 %s72, 1
    %p76 = scmp.eq.s32.totalorder %s12, 7
    %p77 = scmp.ne.s32.totalorder %s72, %s74
    %p78 = scmp.eq.s32.totalorder %s12, 0
    %p79 = por %p77, %p78
    %p80 = scmp.ne.s32.totalorder %s72, %s74
    %p81 = scmp.eq.s32.totalorder %s17, 7
    %p82 = por %p80, %p81
    %p83 = scmp.ne.s32.totalorder %s74, %s75
    %p84 = scmp.eq.s32.totalorder %s17, 0
    %p85 = por %p83, %p84
    %p86 = scmp.ne.s32.totalorder %s74, %s75
    %p87 = scmp.eq.s32.totalorder %s18, 7
    %p88 = por %p86, %p87
    %p90 = scmp.ne.s32.totalorder %s75, %s89
    %p91 = scmp.eq.s32.totalorder %s18, 0
    %p92 = por %p90, %p91
    %s94 = sadd.s32 %s93, 1
    %p97 = scmp.eq.s32.totalorder %s12, 7
    %p98 = scmp.ne.s32.totalorder %s93, %s95
    %p99 = scmp.eq.s32.totalorder %s12, 0
    %p100 = por %p98, %p99
    %p101 = scmp.ne.s32.totalorder %s93, %s95
    %p102 = scmp.eq.s32.totalorder %s17, 7
    %p103 = por %p101, %p102
    %p104 = scmp.ne.s32.totalorder %s95, %s96
    %p105 = scmp.eq.s32.totalorder %s17, 0
    %p106 = por %p104, %p105
    %p107 = scmp.ne.s32.totalorder %s95, %s96
    %p108 = scmp.eq.s32.totalorder %s18, 7
    %p109 = por %p107, %p108
    %p111 = scmp.ne.s32.totalorder %s96, %s110
    %p112 = scmp.eq.s32.totalorder %s18, 0
    %p113 = por %p111, %p112
    %s115 = sadd.s32 %s114, 1
    %p118 = scmp.eq.s32.totalorder %s12, 7
    %p119 = scmp.ne.s32.totalorder %s114, %s116
    %p120 = scmp.eq.s32.totalorder %s12, 0
    %p121 = por %p119, %p120
    %p122 = scmp.ne.s32.totalorder %s114, %s116
    %p123 = scmp.eq.s32.totalorder %s17, 7
    %p124 = por %p122, %p123
    %p125 = scmp.ne.s32.totalorder %s116, %s117
    %p126 = scmp.eq.s32.totalorder %s17, 0
    %p127 = por %p125, %p126
    %p128 = scmp.ne.s32.totalorder %s116, %s117
    %p129 = scmp.eq.s32.totalorder %s18, 7
    %p130 = por %p128, %p129
    %p132 = scmp.ne.s32.totalorder %s117, %s131
    %p133 = scmp.eq.s32.totalorder %s18, 0
    %p134 = por %p132, %p133
    %s136 = sadd.s32 %s135, 1
    %p139 = scmp.eq.s32.totalorder %s12, 7
    %p140 = scmp.ne.s32.totalorder %s135, %s137
    %p141 = scmp.eq.s32.totalorder %s12, 0
    %p142 = por %p140, %p141
    %p143 = scmp.ne.s32.totalorder %s135, %s137
    %p144 = scmp.eq.s32.totalorder %s17, 7
    %p145 = por %p143, %p144
    %p146 = scmp.ne.s32.totalorder %s137, %s138
    %p147 = scmp.eq.s32.totalorder %s17, 0
    %p148 = por %p146, %p147
    %p149 = scmp.ne.s32.totalorder %s137, %s138
    %p150 = scmp.eq.s32.totalorder %s18, 7
    %p151 = por %p149, %p150
    %p153 = scmp.ne.s32.totalorder %s138, %s152
    %p154 = scmp.eq.s32.totalorder %s18, 0
    %p155 = por %p153, %p154
    %s157 = sadd.s32 %s156, 1
    %p160 = scmp.eq.s32.totalorder %s12, 7
    %p161 = scmp.ne.s32.totalorder %s156, %s158
    %p162 = scmp.eq.s32.totalorder %s12, 0
    %p163 = por %p161, %p162
    %p164 = scmp.ne.s32.totalorder %s156, %s158
    %p165 = scmp.eq.s32.totalorder %s17, 7
    %p166 = por %p164, %p165
    %p167 = scmp.ne.s32.totalorder %s158, %s159
    %p168 = scmp.eq.s32.totalorder %s17, 0
    %p169 = por %p167, %p168
    %p170 = scmp.ne.s32.totalorder %s158, %s159
    %p171 = scmp.eq.s32.totalorder %s18, 7
    %p172 = por %p170, %p171
    %p174 = scmp.ne.s32.totalorder %s159, %s173
    %p175 = scmp.eq.s32.totalorder %s18, 0
    %p176 = por %p174, %p175
    %p177 = scmp.le.s32.totalorder 1, %s12
    %p178 = scmp.lt.s32.totalorder %s12, 9
    %p179 = pnand %p177, %p178
    %p180 = pneg %p179
    // Predicated region
    $region9: #{gruvae_forward.2} parent=5 // pred_check
      _
    $region10: #{gruvae_forward.2} parent=5 // pred_check_branch
      %182 = sbr.rel (%p179) target = $region12
    $region11: #{gruvae_forward.2} parent=5 // pred_region
      %s183 = ssub.s32 %s12, 1
      // Predicated region
      $region13: #{gruvae_forward.2} parent=11 // pred_check
        %p184 = pneg %p85
      $region14: #{gruvae_forward.2} parent=11 // pred_check_branch
        %186 = sbr.rel (%p184) target = $region16
      $region15: #{gruvae_forward.2} parent=11 // pred_region
        _
      $region16: #{gruvae_forward.2} parent=11 // pred_fallthru
        _
      // Predicated region
      $region17: #{gruvae_forward.2} parent=11 // pred_check
        %p187 = pneg %p106
      $region18: #{gruvae_forward.2} parent=11 // pred_check_branch
        %189 = sbr.rel (%p187) target = $region20
      $region19: #{gruvae_forward.2} parent=11 // pred_region
        _
      $region20: #{gruvae_forward.2} parent=11 // pred_fallthru
        _
      // Predicated region
      $region21: #{gruvae_forward.2} parent=11 // pred_check
        %p190 = pneg %p127
      $region22: #{gruvae_forward.2} parent=11 // pred_check_branch
        %192 = sbr.rel (%p190) target = $region24
      $region23: #{gruvae_forward.2} parent=11 // pred_region
        _
      $region24: #{gruvae_forward.2} parent=11 // pred_fallthru
        _
      // Predicated region
      $region25: #{gruvae_forward.2} parent=11 // pred_check
        %p193 = pneg %p148
      $region26: #{gruvae_forward.2} parent=11 // pred_check_branch
        %195 = sbr.rel (%p193) target = $region28
      $region27: #{gruvae_forward.2} parent=11 // pred_region
        _
      $region28: #{gruvae_forward.2} parent=11 // pred_fallthru
        _
    $region12: #{gruvae_forward.2} parent=5 // pred_fallthru
      _
    %p196 = scmp.lt.s32.totalorder %s12, 8
    // Predicated region
    $region29: #{gruvae_forward.2} parent=5 // pred_check
      %p197 = pneg %p196
    $region30: #{gruvae_forward.2} parent=5 // pred_check_branch
      %199 = sbr.rel (%p197) target = $region32
    $region31: #{gruvae_forward.2} parent=5 // pred_region
      // Predicated region
      $region33: #{gruvae_forward.2} parent=31 // pred_check
        %p200 = pneg %p32
      $region34: #{gruvae_forward.2} parent=31 // pred_check_branch
        %202 = sbr.rel (%p200) target = $region36
      $region35: #{gruvae_forward.2} parent=31 // pred_region
        %s203 = smul.u32 2, %s12
        %p204 = scmp.lt.s32.totalorder %s203, 15
        %s205 = scalar_select %p204, %s203, 15
        %s206 = smul.addr %s205, 6
        %s207 = smul.addr %s206, 8
        %s208 = scalar_lea.vmem %s0, %s207
        %s209 = smul.u32 2, %s12
      $region36: #{gruvae_forward.2} parent=31 // pred_fallthru
        _
      // Predicated region
      $region37: #{gruvae_forward.2} parent=31 // pred_check
        %p210 = pneg %p58
      $region38: #{gruvae_forward.2} parent=31 // pred_check_branch
        %212 = sbr.rel (%p210) target = $region40
      $region39: #{gruvae_forward.2} parent=31 // pred_region
        %s213 = smul.u32 2, %s12
        %p214 = scmp.lt.s32.totalorder %s213, 15
        %s215 = scalar_select %p214, %s213, 15
        %s216 = smul.addr %s215, 8
        %s217 = scalar_lea.vmem %s1, %s216
        %s218 = smul.u32 2, %s12
      $region40: #{gruvae_forward.2} parent=31 // pred_fallthru
        _
    $region32: #{gruvae_forward.2} parent=5 // pred_fallthru
      _
    %p219 = scmp.le.s32.totalorder 1, %s12
    %p220 = scmp.lt.s32.totalorder %s12, 9
    %p221 = pnand %p219, %p220
    %p222 = pneg %p221
    // Predicated region
    $region41: #{gruvae_forward.2} parent=5 // pred_check
      _
    $region42: #{gruvae_forward.2} parent=5 // pred_check_branch
      %224 = sbr.rel (%p221) target = $region44
    $region43: #{gruvae_forward.2} parent=5 // pred_region
      %s225 = ssub.s32 %s12, 1
      %s226 = smul.u32 2, %s17
      %p227 = scmp.lt.s32.totalorder %s226, 15
      %s228 = scalar_select %p227, %s226, 15
      %s229 = smul.addr %s228, 6
      %s230 = smul.addr %s229, 8
      %s231 = scalar_lea.vmem %s0, %s230
      %p232 = pneg %p38
      %p233 = pneg %p35
      %s234 = smul.u32 2, %s17
      %p235 = scmp.lt.s32.totalorder %s234, 15
      %s236 = scalar_select %p235, %s234, 15
      %s237 = smul.addr %s236, 8
      %s238 = scalar_lea.vmem %s1, %s237
      %p239 = pneg %p64
      %p240 = pneg %p61
      %p241 = pneg %p85
      %p242 = pneg %p82
      %p243 = pneg %p106
      %p244 = pneg %p103
      %p245 = pneg %p127
      %p246 = pneg %p124
      %p247 = pneg %p148
      %p248 = pneg %p145
      %p249 = pneg %p169
      %p250 = pneg %p166
      %s251 = smul.u32 2, %s17
      %p252 = scmp.lt.s32.totalorder %s251, 15
      %s253 = scalar_select %p252, %s251, 15
      %s254 = smul.addr %s253, 6
      %s255 = smul.addr %s254, 8
      %s256 = scalar_lea.vmem %s0, %s255
      %s257 = smul.u32 2, %s17
      %s258 = smul.u32 2, %s17
      %p259 = scmp.lt.s32.totalorder %s258, 15
      %s260 = scalar_select %p259, %s258, 15
      %s261 = smul.addr %s260, 8
      %s262 = scalar_lea.vmem %s1, %s261
      %s263 = smul.u32 2, %s17
      %p264 = scmp.eq.s32.totalorder %s17, 0
      // Predicated region
      $region45: #{gruvae_forward.2} parent=43 // pred_check
        %p265 = pneg %p264
      $region46: #{gruvae_forward.2} parent=43 // pred_check_branch
        %267 = sbr.rel (%p265) target = $region48
      $region47: #{gruvae_forward.2} parent=43 // pred_region
        %268 = vst [vmem:[%s6] sm:$0xff] 0.0
        %269 = vst [vmem:[%s6 + $0x8] sm:$0xff] 0.0
        %270 = vst [vmem:[%s6 + $0x10] sm:$0xff] 0.0
        %271 = vst [vmem:[%s6 + $0x18] sm:$0xff] 0.0
      $region48: #{gruvae_forward.2} parent=43 // pred_fallthru
        _
      %v272 = vld [vmem:[%s6] sm:$0xff]
      %v273 = vld [vmem:[%s6 + $0x8] sm:$0xff]
      %v274 = vld [vmem:[%s6 + $0x10] sm:$0xff]
      %v275 = vld [vmem:[%s6 + $0x18] sm:$0xff]
      %v276 = vld [vmem:[%s256] sm:$0xff]
      %v277 = vld [vmem:[%s256 + $0x8] sm:$0xff]
      %v278 = vld [vmem:[%s256 + $0x10] sm:$0xff]
      %v279 = vld [vmem:[%s256 + $0x18] sm:$0xff]
      %v280 = vld [vmem:[%s256 + $0x20] sm:$0xff]
      %v281 = vld [vmem:[%s256 + $0x28] sm:$0xff]
      %v282 = vld [vmem:[%s256 + $0x30] sm:$0xff]
      %v283 = vld [vmem:[%s256 + $0x38] sm:$0xff]
      %v284 = vld [vmem:[%s256 + $0x40] sm:$0xff]
      %v285 = vld [vmem:[%s256 + $0x48] sm:$0xff]
      %v286 = vld [vmem:[%s256 + $0x50] sm:$0xff]
      %v287 = vld [vmem:[%s256 + $0x58] sm:$0xff]
      %v288 = vld [vmem:[%s3] sm:$0x3f]
      %v290 = vlaneseq
      %v291 = vshrl.u32 %v290, 7
      %v292 = vsub.s32 0, %v291
      %v293 = vrot.slane %v288, %v292
      %v294 = vlaneseq
      %v295 = vshrl.u32 %v294, 7
      %v296 = vsub.s32 1, %v295
      %v297 = vrot.slane %v288, %v296
      %v298 = vlaneseq
      %v299 = vshrl.u32 %v298, 7
      %v300 = vsub.s32 2, %v299
      %v301 = vrot.slane %v288, %v300
      %v302 = vlaneseq
      %v303 = vshrl.u32 %v302, 7
      %v304 = vsub.s32 3, %v303
      %v305 = vrot.slane %v288, %v304
      %v306 = vlaneseq
      %v307 = vshrl.u32 %v306, 7
      %v308 = vsub.s32 4, %v307
      %v309 = vrot.slane %v288, %v308
      %v310 = vlaneseq
      %v311 = vshrl.u32 %v310, 7
      %v312 = vsub.s32 5, %v311
      %v313 = vrot.slane %v288, %v312
      %v320 = vadd.f32 %v276, %v293
      %v321 = vadd.f32 %v277, %v297
      %v322 = vadd.f32 %v278, %v301
      %v323 = vadd.f32 %v279, %v305
      %v324 = vadd.f32 %v280, %v309
      %v325 = vadd.f32 %v281, %v313
      %v326 = vadd.f32 %v282, %v293
      %v327 = vadd.f32 %v283, %v297
      %v328 = vadd.f32 %v284, %v301
      %v329 = vadd.f32 %v285, %v305
      %v330 = vadd.f32 %v286, %v309
      %v331 = vadd.f32 %v287, %v313
      %v332 = vld [vmem:[%s262] sm:$0xff]
      %v333 = vld [vmem:[%s262 + $0x8] sm:$0xff]
      %v334 = vld [vmem:[%s2] sm:$0xff]
      %v335 = vld [vmem:[%s2 + $0x8] sm:$0xff]
      %v336 = vld [vmem:[%s2 + $0x10] sm:$0xff]
      %v337 = vld [vmem:[%s2 + $0x18] sm:$0xff]
      %v338 = vld [vmem:[%s2 + $0x20] sm:$0xff]
      %v339 = vld [vmem:[%s2 + $0x28] sm:$0xff]
      %vm340 = vcmask 64512
      %v342 = vsel %vm340, %v332, 0
      %v345 = vsel %vm340, %v333, 0
      %347 = vmatprep.subr.mxu0 %v335
      %348 = vmatpush1.msra.mxu0 %v334
      %349 = vmatprep.subr.mxu0 0.0
      %350 = vmatpush1.msra.mxu0 0.0
      %351 = vmatprep.subr.mxu0 0.0
      %352 = vmatpush1.msra.mxu0 0.0
      %353 = vmatprep.subr.mxu0 0.0
      %354 = vmatpush1.msra.mxu0 0.0
      %355 = vmatprep.subr.mxu0 0.0
      %356 = vmatpush1.msra.mxu0 0.0
      %357 = vmatprep.subr.mxu0 0.0
      %358 = vmatpush1.msra.mxu0 0.0
      %359 = vmatprep.subr.mxu0 0.0
      %360 = vmatpush1.msra.mxu0 0.0
      %361 = vmatprep.subr.mxu0 0.0
      %362 = vmatpush1.msra.mxu0 0.0
      %363 = vmatprep.subr.mxu0 0.0
      %364 = vmatpush1.msra.mxu0 0.0
      %365 = vmatprep.subr.mxu0 0.0
      %366 = vmatpush1.msra.mxu0 0.0
      %367 = vmatprep.subr.mxu0 0.0
      %368 = vmatpush1.msra.mxu0 0.0
      %369 = vmatprep.subr.mxu0 0.0
      %370 = vmatpush1.msra.mxu0 0.0
      %371 = vmatprep.subr.mxu0 0.0
      %372 = vmatpush1.msra.mxu0 0.0
      %373 = vmatprep.subr.mxu0 0.0
      %374 = vmatpush1.msra.mxu0 0.0
      %375 = vmatprep.subr.mxu0 0.0
      %376 = vmatpush1.msra.mxu0 0.0
      %377 = vmatprep.subr.mxu0 0.0
      %378 = vmatpush1.msra.mxu0 0.0
      %379 = vmatprep.subr.mxu0 0.0
      %380 = vmatpush1.msra.mxu0 0.0
      %381 = vmatprep.subr.mxu0 0.0
      %382 = vmatpush1.msra.mxu0 0.0
      %383 = vmatprep.subr.mxu0 0.0
      %384 = vmatpush1.msra.mxu0 0.0
      %385 = vmatprep.subr.mxu0 0.0
      %386 = vmatpush1.msra.mxu0 0.0
      %387 = vmatprep.subr.mxu0 0.0
      %388 = vmatpush1.msra.mxu0 0.0
      %389 = vmatprep.subr.mxu0 0.0
      %390 = vmatpush1.msra.mxu0 0.0
      %391 = vmatprep.subr.mxu0 0.0
      %392 = vmatpush1.msra.mxu0 0.0
      %393 = vmatprep.subr.mxu0 0.0
      %394 = vmatpush1.msra.mxu0 0.0
      %395 = vmatprep.subr.mxu0 0.0
      %396 = vmatpush1.msra.mxu0 0.0
      %397 = vmatprep.subr.mxu0 0.0
      %398 = vmatpush1.msra.mxu0 0.0
      %399 = vmatprep.subr.mxu0 0.0
      %400 = vmatpush1.msra.mxu0 0.0
      %401 = vmatprep.subr.mxu0 0.0
      %402 = vmatpush1.msra.mxu0 0.0
      %403 = vmatprep.subr.mxu0 0.0
      %404 = vmatpush1.msra.mxu0 0.0
      %405 = vmatprep.subr.mxu0 0.0
      %406 = vmatpush1.msra.mxu0 0.0
      %407 = vmatprep.subr.mxu0 0.0
      %408 = vmatpush1.msra.mxu0 0.0
      %409 = vmatprep.subr.mxu0 0.0
      %410 = vmatpush1.msra.mxu0 0.0
      %411 = vmatprep.mubr.f32.mxu0 0.0
      %412 = vmatmul.mubr.f32.gmra.mrb[0].mxu0 %v342
      %v413 = vpop.f32.mrb[0].mxu0
      %v414 = vadd.f32 0.0, %v413
      %v415 = vpop.f32.mrb[0].mxu0
      %v416 = vadd.f32 0.0, %v415
      %417 = vmatprep.mubr.f32.mxu0 0.0
      %418 = vmatmul.mubr.f32.gmra.mrb[0].mxu0 %v345
      %v419 = vpop.f32.mrb[0].mxu0
      %v420 = vadd.f32 0.0, %v419
      %v421 = vpop.f32.mrb[0].mxu0
      %v422 = vadd.f32 0.0, %v421
      %423 = vdwg.mxu0
      %424 = vmatprep.subr.mxu0 %v337
      %425 = vmatpush1.msra.mxu0 %v336
      %426 = vmatprep.subr.mxu0 0.0
      %427 = vmatpush1.msra.mxu0 0.0
      %428 = vmatprep.subr.mxu0 0.0
      %429 = vmatpush1.msra.mxu0 0.0
      %430 = vmatprep.subr.mxu0 0.0
      %431 = vmatpush1.msra.mxu0 0.0
      %432 = vmatprep.subr.mxu0 0.0
      %433 = vmatpush1.msra.mxu0 0.0
      %434 = vmatprep.subr.mxu0 0.0
      %435 = vmatpush1.msra.mxu0 0.0
      %436 = vmatprep.subr.mxu0 0.0
      %437 = vmatpush1.msra.mxu0 0.0
      %438 = vmatprep.subr.mxu0 0.0
      %439 = vmatpush1.msra.mxu0 0.0
      %440 = vmatprep.subr.mxu0 0.0
      %441 = vmatpush1.msra.mxu0 0.0
      %442 = vmatprep.subr.mxu0 0.0
      %443 = vmatpush1.msra.mxu0 0.0
      %444 = vmatprep.subr.mxu0 0.0
      %445 = vmatpush1.msra.mxu0 0.0
      %446 = vmatprep.subr.mxu0 0.0
      %447 = vmatpush1.msra.mxu0 0.0
      %448 = vmatprep.subr.mxu0 0.0
      %449 = vmatpush1.msra.mxu0 0.0
      %450 = vmatprep.subr.mxu0 0.0
      %451 = vmatpush1.msra.mxu0 0.0
      %452 = vmatprep.subr.mxu0 0.0
      %453 = vmatpush1.msra.mxu0 0.0
      %454 = vmatprep.subr.mxu0 0.0
      %455 = vmatpush1.msra.mxu0 0.0
      %456 = vmatprep.subr.mxu0 0.0
      %457 = vmatpush1.msra.mxu0 0.0
      %458 = vmatprep.subr.mxu0 0.0
      %459 = vmatpush1.msra.mxu0 0.0
      %460 = vmatprep.subr.mxu0 0.0
      %461 = vmatpush1.msra.mxu0 0.0
      %462 = vmatprep.subr.mxu0 0.0
      %463 = vmatpush1.msra.mxu0 0.0
      %464 = vmatprep.subr.mxu0 0.0
      %465 = vmatpush1.msra.mxu0 0.0
      %466 = vmatprep.subr.mxu0 0.0
      %467 = vmatpush1.msra.mxu0 0.0
      %468 = vmatprep.subr.mxu0 0.0
      %469 = vmatpush1.msra.mxu0 0.0
      %470 = vmatprep.subr.mxu0 0.0
      %471 = vmatpush1.msra.mxu0 0.0
      %472 = vmatprep.subr.mxu0 0.0
      %473 = vmatpush1.msra.mxu0 0.0
      %474 = vmatprep.subr.mxu0 0.0
      %475 = vmatpush1.msra.mxu0 0.0
      %476 = vmatprep.subr.mxu0 0.0
      %477 = vmatpush1.msra.mxu0 0.0
      %478 = vmatprep.subr.mxu0 0.0
      %479 = vmatpush1.msra.mxu0 0.0
      %480 = vmatprep.subr.mxu0 0.0
      %481 = vmatpush1.msra.mxu0 0.0
      %482 = vmatprep.subr.mxu0 0.0
      %483 = vmatpush1.msra.mxu0 0.0
      %484 = vmatprep.subr.mxu0 0.0
      %485 = vmatpush1.msra.mxu0 0.0
      %486 = vmatprep.subr.mxu0 0.0
      %487 = vmatpush1.msra.mxu0 0.0
      %488 = vmatprep.mubr.f32.mxu0 0.0
      %489 = vmatmul.mubr.f32.gmra.mrb[0].mxu0 %v342
      %v490 = vpop.f32.mrb[0].mxu0
      %v491 = vadd.f32 0.0, %v490
      %v492 = vpop.f32.mrb[0].mxu0
      %v493 = vadd.f32 0.0, %v492
      %494 = vmatprep.mubr.f32.mxu0 0.0
      %495 = vmatmul.mubr.f32.gmra.mrb[0].mxu0 %v345
      %v496 = vpop.f32.mrb[0].mxu0
      %v497 = vadd.f32 0.0, %v496
      %v498 = vpop.f32.mrb[0].mxu0
      %v499 = vadd.f32 0.0, %v498
      %500 = vdwg.mxu0
      %501 = vmatprep.subr.mxu0 %v339
      %502 = vmatpush1.msra.mxu0 %v338
      %503 = vmatprep.subr.mxu0 0.0
      %504 = vmatpush1.msra.mxu0 0.0
      %505 = vmatprep.subr.mxu0 0.0
      %506 = vmatpush1.msra.mxu0 0.0
      %507 = vmatprep.subr.mxu0 0.0
      %508 = vmatpush1.msra.mxu0 0.0
      %509 = vmatprep.subr.mxu0 0.0
      %510 = vmatpush1.msra.mxu0 0.0
      %511 = vmatprep.subr.mxu0 0.0
      %512 = vmatpush1.msra.mxu0 0.0
      %513 = vmatprep.subr.mxu0 0.0
      %514 = vmatpush1.msra.mxu0 0.0
      %515 = vmatprep.subr.mxu0 0.0
      %516 = vmatpush1.msra.mxu0 0.0
      %517 = vmatprep.subr.mxu0 0.0
      %518 = vmatpush1.msra.mxu0 0.0
      %519 = vmatprep.subr.mxu0 0.0
      %520 = vmatpush1.msra.mxu0 0.0
      %521 = vmatprep.subr.mxu0 0.0
      %522 = vmatpush1.msra.mxu0 0.0
      %523 = vmatprep.subr.mxu0 0.0
      %524 = vmatpush1.msra.mxu0 0.0
      %525 = vmatprep.subr.mxu0 0.0
      %526 = vmatpush1.msra.mxu0 0.0
      %527 = vmatprep.subr.mxu0 0.0
      %528 = vmatpush1.msra.mxu0 0.0
      %529 = vmatprep.subr.mxu0 0.0
      %530 = vmatpush1.msra.mxu0 0.0
      %531 = vmatprep.subr.mxu0 0.0
      %532 = vmatpush1.msra.mxu0 0.0
      %533 = vmatprep.subr.mxu0 0.0
      %534 = vmatpush1.msra.mxu0 0.0
      %535 = vmatprep.subr.mxu0 0.0
      %536 = vmatpush1.msra.mxu0 0.0
      %537 = vmatprep.subr.mxu0 0.0
      %538 = vmatpush1.msra.mxu0 0.0
      %539 = vmatprep.subr.mxu0 0.0
      %540 = vmatpush1.msra.mxu0 0.0
      %541 = vmatprep.subr.mxu0 0.0
      %542 = vmatpush1.msra.mxu0 0.0
      %543 = vmatprep.subr.mxu0 0.0
      %544 = vmatpush1.msra.mxu0 0.0
      %545 = vmatprep.subr.mxu0 0.0
      %546 = vmatpush1.msra.mxu0 0.0
      %547 = vmatprep.subr.mxu0 0.0
      %548 = vmatpush1.msra.mxu0 0.0
      %549 = vmatprep.subr.mxu0 0.0
      %550 = vmatpush1.msra.mxu0 0.0
      %551 = vmatprep.subr.mxu0 0.0
      %552 = vmatpush1.msra.mxu0 0.0
      %553 = vmatprep.subr.mxu0 0.0
      %554 = vmatpush1.msra.mxu0 0.0
      %555 = vmatprep.subr.mxu0 0.0
      %556 = vmatpush1.msra.mxu0 0.0
      %557 = vmatprep.subr.mxu0 0.0
      %558 = vmatpush1.msra.mxu0 0.0
      %559 = vmatprep.subr.mxu0 0.0
      %560 = vmatpush1.msra.mxu0 0.0
      %561 = vmatprep.subr.mxu0 0.0
      %562 = vmatpush1.msra.mxu0 0.0
      %563 = vmatprep.subr.mxu0 0.0
      %564 = vmatpush1.msra.mxu0 0.0
      %565 = vmatprep.mubr.f32.mxu0 0.0
      %566 = vmatmul.mubr.f32.gmra.mrb[0].mxu0 %v342
      %v567 = vpop.f32.mrb[0].mxu0
      %v568 = vadd.f32 0.0, %v567
      %v569 = vpop.f32.mrb[0].mxu0
      %v570 = vadd.f32 0.0, %v569
      %571 = vmatprep.mubr.f32.mxu0 0.0
      %572 = vmatmul.mubr.f32.gmra.mrb[0].mxu0 %v345
      %v573 = vpop.f32.mrb[0].mxu0
      %v574 = vadd.f32 0.0, %v573
      %v575 = vpop.f32.mrb[0].mxu0
      %v576 = vadd.f32 0.0, %v575
      %577 = vdwg.mxu0
      %v578 = vadd.f32 %v320, %v414
      %v579 = vadd.f32 %v321, %v416
      %v580 = vadd.f32 %v322, %v491
      %v581 = vadd.f32 %v323, %v493
      %v582 = vadd.f32 %v324, %v568
      %v583 = vadd.f32 %v325, %v570
      %v584 = vadd.f32 %v326, %v420
      %v585 = vadd.f32 %v327, %v422
      %v586 = vadd.f32 %v328, %v497
      %v587 = vadd.f32 %v329, %v499
      %v588 = vadd.f32 %v330, %v574
      %v589 = vadd.f32 %v331, %v576
      %v590 = vpack.c.bf16 %v274, %v272
      %v591 = vpack.c.bf16 %v275, %v273
      %v592 = vld [vmem:[%s4] sm:$0xff]
      %v593 = vld [vmem:[%s4 + $0x8] sm:$0xff]
      %v594 = vld [vmem:[%s4 + $0x10] sm:$0xff]
      %v595 = vld [vmem:[%s4 + $0x18] sm:$0xff]
      %v596 = vld [vmem:[%s4 + $0x20] sm:$0xff]
      %v597 = vld [vmem:[%s4 + $0x28] sm:$0xff]
      %v598 = vld [vmem:[%s4 + $0x30] sm:$0xff]
      %v599 = vld [vmem:[%s4 + $0x38] sm:$0xff]
      %v600 = vld [vmem:[%s4 + $0x40] sm:$0xff]
      %v601 = vld [vmem:[%s4 + $0x48] sm:$0xff]
      %v602 = vld [vmem:[%s4 + $0x50] sm:$0xff]
      %v603 = vld [vmem:[%s4 + $0x58] sm:$0xff]
      %v604 = vld [vmem:[%s4 + $0x60] sm:$0xff]
      %v605 = vld [vmem:[%s4 + $0x68] sm:$0xff]
      %v606 = vld [vmem:[%s4 + $0x70] sm:$0xff]
      %v607 = vld [vmem:[%s4 + $0x78] sm:$0xff]
      %v608 = vld [vmem:[%s4 + $0x80] sm:$0xff]
      %v609 = vld [vmem:[%s4 + $0x88] sm:$0xff]
      %v610 = vld [vmem:[%s4 + $0x90] sm:$0xff]
      %v611 = vld [vmem:[%s4 + $0x98] sm:$0xff]
      %v612 = vld [vmem:[%s4 + $0xa0] sm:$0xff]
      %v613 = vld [vmem:[%s4 + $0xa8] sm:$0xff]
      %v614 = vld [vmem:[%s4 + $0xb0] sm:$0xff]
      %v615 = vld [vmem:[%s4 + $0xb8] sm:$0xff]
      %v616 = vld [vmem:[%s4 + $0xc0] sm:$0xff]
      %v617 = vld [vmem:[%s4 + $0xc8] sm:$0xff]
      %v618 = vld [vmem:[%s4 + $0xd0] sm:$0xff]
      %v619 = vld [vmem:[%s4 + $0xd8] sm:$0xff]
      %v620 = vld [vmem:[%s4 + $0xe0] sm:$0xff]
      %v621 = vld [vmem:[%s4 + $0xe8] sm:$0xff]
      %v622 = vld [vmem:[%s4 + $0xf0] sm:$0xff]
      %v623 = vld [vmem:[%s4 + $0xf8] sm:$0xff]
      %v624 = vld [vmem:[%s4 + $0x100] sm:$0xff]
      %v625 = vld [vmem:[%s4 + $0x108] sm:$0xff]
      %v626 = vld [vmem:[%s4 + $0x110] sm:$0xff]
      %v627 = vld [vmem:[%s4 + $0x118] sm:$0xff]
      %v628 = vld [vmem:[%s4 + $0x120] sm:$0xff]
      %v629 = vld [vmem:[%s4 + $0x128] sm:$0xff]
      %v630 = vld [vmem:[%s4 + $0x130] sm:$0xff]
      %v631 = vld [vmem:[%s4 + $0x138] sm:$0xff]
      %v632 = vld [vmem:[%s4 + $0x140] sm:$0xff]
      %v633 = vld [vmem:[%s4 + $0x148] sm:$0xff]
      %v634 = vld [vmem:[%s4 + $0x150] sm:$0xff]
      %v635 = vld [vmem:[%s4 + $0x158] sm:$0xff]
      %v636 = vld [vmem:[%s4 + $0x160] sm:$0xff]
      %v637 = vld [vmem:[%s4 + $0x168] sm:$0xff]
      %v638 = vld [vmem:[%s4 + $0x170] sm:$0xff]
      %v639 = vld [vmem:[%s4 + $0x178] sm:$0xff]
      %v640 = vld [vmem:[%s4 + $0x180] sm:$0xff]
      %v641 = vld [vmem:[%s4 + $0x188] sm:$0xff]
      %v642 = vld [vmem:[%s4 + $0x190] sm:$0xff]
      %v643 = vld [vmem:[%s4 + $0x198] sm:$0xff]
      %v644 = vld [vmem:[%s4 + $0x1a0] sm:$0xff]
      %v645 = vld [vmem:[%s4 + $0x1a8] sm:$0xff]
      %v646 = vld [vmem:[%s4 + $0x1b0] sm:$0xff]
      %v647 = vld [vmem:[%s4 + $0x1b8] sm:$0xff]
      %v648 = vld [vmem:[%s4 + $0x1c0] sm:$0xff]
      %v649 = vld [vmem:[%s4 + $0x1c8] sm:$0xff]
      %v650 = vld [vmem:[%s4 + $0x1d0] sm:$0xff]
      %v651 = vld [vmem:[%s4 + $0x1d8] sm:$0xff]
      %v652 = vld [vmem:[%s4 + $0x1e0] sm:$0xff]
      %v653 = vld [vmem:[%s4 + $0x1e8] sm:$0xff]
      %v654 = vld [vmem:[%s4 + $0x1f0] sm:$0xff]
      %v655 = vld [vmem:[%s4 + $0x1f8] sm:$0xff]
      %v656 = vld [vmem:[%s4 + $0x200] sm:$0xff]
      %v657 = vld [vmem:[%s4 + $0x208] sm:$0xff]
      %v658 = vld [vmem:[%s4 + $0x210] sm:$0xff]
      %v659 = vld [vmem:[%s4 + $0x218] sm:$0xff]
      %v660 = vld [vmem:[%s4 + $0x220] sm:$0xff]
      %v661 = vld [vmem:[%s4 + $0x228] sm:$0xff]
      %v662 = vld [vmem:[%s4 + $0x230] sm:$0xff]
      %v663 = vld [vmem:[%s4 + $0x238] sm:$0xff]
      %v664 = vld [vmem:[%s4 + $0x240] sm:$0xff]
      %v665 = vld [vmem:[%s4 + $0x248] sm:$0xff]
      %v666 = vld [vmem:[%s4 + $0x250] sm:$0xff]
      %v667 = vld [vmem:[%s4 + $0x258] sm:$0xff]
      %v668 = vld [vmem:[%s4 + $0x260] sm:$0xff]
      %v669 = vld [vmem:[%s4 + $0x268] sm:$0xff]
      %v670 = vld [vmem:[%s4 + $0x270] sm:$0xff]
      %v671 = vld [vmem:[%s4 + $0x278] sm:$0xff]
      %v672 = vld [vmem:[%s4 + $0x280] sm:$0xff]
      %v673 = vld [vmem:[%s4 + $0x288] sm:$0xff]
      %v674 = vld [vmem:[%s4 + $0x290] sm:$0xff]
      %v675 = vld [vmem:[%s4 + $0x298] sm:$0xff]
      %v676 = vld [vmem:[%s4 + $0x2a0] sm:$0xff]
      %v677 = vld [vmem:[%s4 + $0x2a8] sm:$0xff]
      %v678 = vld [vmem:[%s4 + $0x2b0] sm:$0xff]
      %v679 = vld [vmem:[%s4 + $0x2b8] sm:$0xff]
      %v680 = vld [vmem:[%s4 + $0x2c0] sm:$0xff]
      %v681 = vld [vmem:[%s4 + $0x2c8] sm:$0xff]
      %v682 = vld [vmem:[%s4 + $0x2d0] sm:$0xff]
      %v683 = vld [vmem:[%s4 + $0x2d8] sm:$0xff]
      %v684 = vld [vmem:[%s4 + $0x2e0] sm:$0xff]
      %v685 = vld [vmem:[%s4 + $0x2e8] sm:$0xff]
      %v686 = vld [vmem:[%s4 + $0x2f0] sm:$0xff]
      %v687 = vld [vmem:[%s4 + $0x2f8] sm:$0xff]
      %v784 = vunpack.c.l.b16 %v592
      %v785 = vunpack.c.h.b16 %v592
      %v786 = vunpack.c.l.b16 %v593
      %v787 = vunpack.c.h.b16 %v593
      %v788 = vunpack.c.l.b16 %v594
      %v789 = vunpack.c.h.b16 %v594
      %v790 = vunpack.c.l.b16 %v595
      %v791 = vunpack.c.h.b16 %v595
      %v792 = vunpack.c.l.b16 %v596
      %v793 = vunpack.c.h.b16 %v596
      %v794 = vunpack.c.l.b16 %v597
      %v795 = vunpack.c.h.b16 %v597
      %v796 = vunpack.c.l.b16 %v598
      %v797 = vunpack.c.h.b16 %v598
      %v798 = vunpack.c.l.b16 %v599
      %v799 = vunpack.c.h.b16 %v599
      %v800 = vunpack.c.l.b16 %v600
      %v801 = vunpack.c.h.b16 %v600
      %v802 = vunpack.c.l.b16 %v601
      %v803 = vunpack.c.h.b16 %v601
      %v804 = vunpack.c.l.b16 %v602
      %v805 = vunpack.c.h.b16 %v602
      %v806 = vunpack.c.l.b16 %v603
      %v807 = vunpack.c.h.b16 %v603
      %v808 = vunpack.c.l.b16 %v604
      %v809 = vunpack.c.h.b16 %v604
      %v810 = vunpack.c.l.b16 %v605
      %v811 = vunpack.c.h.b16 %v605
      %v812 = vunpack.c.l.b16 %v606
      %v813 = vunpack.c.h.b16 %v606
      %v814 = vunpack.c.l.b16 %v607
      %v815 = vunpack.c.h.b16 %v607
      %v816 = vunpack.c.l.b16 %v608
      %v817 = vunpack.c.h.b16 %v608
      %v818 = vunpack.c.l.b16 %v609
      %v819 = vunpack.c.h.b16 %v609
      %v820 = vunpack.c.l.b16 %v610
      %v821 = vunpack.c.h.b16 %v610
      %v822 = vunpack.c.l.b16 %v611
      %v823 = vunpack.c.h.b16 %v611
      %v824 = vunpack.c.l.b16 %v612
      %v825 = vunpack.c.h.b16 %v612
      %v826 = vunpack.c.l.b16 %v613
      %v827 = vunpack.c.h.b16 %v613
      %v828 = vunpack.c.l.b16 %v614
      %v829 = vunpack.c.h.b16 %v614
      %v830 = vunpack.c.l.b16 %v615
      %v831 = vunpack.c.h.b16 %v615
      %v832 = vunpack.c.l.b16 %v616
      %v833 = vunpack.c.h.b16 %v616
      %v834 = vunpack.c.l.b16 %v617
      %v835 = vunpack.c.h.b16 %v617
      %v836 = vunpack.c.l.b16 %v618
      %v837 = vunpack.c.h.b16 %v618
      %v838 = vunpack.c.l.b16 %v619
      %v839 = vunpack.c.h.b16 %v619
      %v840 = vunpack.c.l.b16 %v620
      %v841 = vunpack.c.h.b16 %v620
      %v842 = vunpack.c.l.b16 %v621
      %v843 = vunpack.c.h.b16 %v621
      %v844 = vunpack.c.l.b16 %v622
      %v845 = vunpack.c.h.b16 %v622
      %v846 = vunpack.c.l.b16 %v623
      %v847 = vunpack.c.h.b16 %v623
      %v848 = vunpack.c.l.b16 %v624
      %v849 = vunpack.c.h.b16 %v624
      %v850 = vunpack.c.l.b16 %v625
      %v851 = vunpack.c.h.b16 %v625
      %v852 = vunpack.c.l.b16 %v626
      %v853 = vunpack.c.h.b16 %v626
      %v854 = vunpack.c.l.b16 %v627
      %v855 = vunpack.c.h.b16 %v627
      %v856 = vunpack.c.l.b16 %v628
      %v857 = vunpack.c.h.b16 %v628
      %v858 = vunpack.c.l.b16 %v629
      %v859 = vunpack.c.h.b16 %v629
      %v860 = vunpack.c.l.b16 %v630
      %v861 = vunpack.c.h.b16 %v630
      %v862 = vunpack.c.l.b16 %v631
      %v863 = vunpack.c.h.b16 %v631
      %v864 = vunpack.c.l.b16 %v632
      %v865 = vunpack.c.h.b16 %v632
      %v866 = vunpack.c.l.b16 %v633
      %v867 = vunpack.c.h.b16 %v633
      %v868 = vunpack.c.l.b16 %v634
      %v869 = vunpack.c.h.b16 %v634
      %v870 = vunpack.c.l.b16 %v635
      %v871 = vunpack.c.h.b16 %v635
      %v872 = vunpack.c.l.b16 %v636
      %v873 = vunpack.c.h.b16 %v636
      %v874 = vunpack.c.l.b16 %v637
      %v875 = vunpack.c.h.b16 %v637
      %v876 = vunpack.c.l.b16 %v638
      %v877 = vunpack.c.h.b16 %v638
      %v878 = vunpack.c.l.b16 %v639
      %v879 = vunpack.c.h.b16 %v639
      %v880 = vunpack.c.l.b16 %v640
      %v881 = vunpack.c.h.b16 %v640
      %v882 = vunpack.c.l.b16 %v641
      %v883 = vunpack.c.h.b16 %v641
      %v884 = vunpack.c.l.b16 %v642
      %v885 = vunpack.c.h.b16 %v642
      %v886 = vunpack.c.l.b16 %v643
      %v887 = vunpack.c.h.b16 %v643
      %v888 = vunpack.c.l.b16 %v644
      %v889 = vunpack.c.h.b16 %v644
      %v890 = vunpack.c.l.b16 %v645
      %v891 = vunpack.c.h.b16 %v645
      %v892 = vunpack.c.l.b16 %v646
      %v893 = vunpack.c.h.b16 %v646
      %v894 = vunpack.c.l.b16 %v647
      %v895 = vunpack.c.h.b16 %v647
      %v896 = vunpack.c.l.b16 %v648
      %v897 = vunpack.c.h.b16 %v648
      %v898 = vunpack.c.l.b16 %v649
      %v899 = vunpack.c.h.b16 %v649
      %v900 = vunpack.c.l.b16 %v650
      %v901 = vunpack.c.h.b16 %v650
      %v902 = vunpack.c.l.b16 %v651
      %v903 = vunpack.c.h.b16 %v651
      %v904 = vunpack.c.l.b16 %v652
      %v905 = vunpack.c.h.b16 %v652
      %v906 = vunpack.c.l.b16 %v653
      %v907 = vunpack.c.h.b16 %v653
      %v908 = vunpack.c.l.b16 %v654
      %v909 = vunpack.c.h.b16 %v654
      %v910 = vunpack.c.l.b16 %v655
      %v911 = vunpack.c.h.b16 %v655
      %v912 = vunpack.c.l.b16 %v656
      %v913 = vunpack.c.h.b16 %v656
      %v914 = vunpack.c.l.b16 %v657
      %v915 = vunpack.c.h.b16 %v657
      %v916 = vunpack.c.l.b16 %v658
      %v917 = vunpack.c.h.b16 %v658
      %v918 = vunpack.c.l.b16 %v659
      %v919 = vunpack.c.h.b16 %v659
      %v920 = vunpack.c.l.b16 %v660
      %v921 = vunpack.c.h.b16 %v660
      %v922 = vunpack.c.l.b16 %v661
      %v923 = vunpack.c.h.b16 %v661
      %v924 = vunpack.c.l.b16 %v662
      %v925 = vunpack.c.h.b16 %v662
      %v926 = vunpack.c.l.b16 %v663
      %v927 = vunpack.c.h.b16 %v663
      %v928 = vunpack.c.l.b16 %v664
      %v929 = vunpack.c.h.b16 %v664
      %v930 = vunpack.c.l.b16 %v665
      %v931 = vunpack.c.h.b16 %v665
      %v932 = vunpack.c.l.b16 %v666
      %v933 = vunpack.c.h.b16 %v666
      %v934 = vunpack.c.l.b16 %v667
      %v935 = vunpack.c.h.b16 %v667
      %v936 = vunpack.c.l.b16 %v668
      %v937 = vunpack.c.h.b16 %v668
      %v938 = vunpack.c.l.b16 %v669
      %v939 = vunpack.c.h.b16 %v669
      %v940 = vunpack.c.l.b16 %v670
      %v941 = vunpack.c.h.b16 %v670
      %v942 = vunpack.c.l.b16 %v671
      %v943 = vunpack.c.h.b16 %v671
      %v944 = vunpack.c.l.b16 %v672
      %v945 = vunpack.c.h.b16 %v672
      %v946 = vunpack.c.l.b16 %v673
      %v947 = vunpack.c.h.b16 %v673
      %v948 = vunpack.c.l.b16 %v674
      %v949 = vunpack.c.h.b16 %v674
      %v950 = vunpack.c.l.b16 %v675
      %v951 = vunpack.c.h.b16 %v675
      %v952 = vunpack.c.l.b16 %v676
      %v953 = vunpack.c.h.b16 %v676
      %v954 = vunpack.c.l.b16 %v677
      %v955 = vunpack.c.h.b16 %v677
      %v956 = vunpack.c.l.b16 %v678
      %v957 = vunpack.c.h.b16 %v678
      %v958 = vunpack.c.l.b16 %v679
      %v959 = vunpack.c.h.b16 %v679
      %v960 = vunpack.c.l.b16 %v680
      %v961 = vunpack.c.h.b16 %v680
      %v962 = vunpack.c.l.b16 %v681
      %v963 = vunpack.c.h.b16 %v681
      %v964 = vunpack.c.l.b16 %v682
      %v965 = vunpack.c.h.b16 %v682
      %v966 = vunpack.c.l.b16 %v683
      %v967 = vunpack.c.h.b16 %v683
      %v968 = vunpack.c.l.b16 %v684
      %v969 = vunpack.c.h.b16 %v684
      %v970 = vunpack.c.l.b16 %v685
      %v971 = vunpack.c.h.b16 %v685
      %v972 = vunpack.c.l.b16 %v686
      %v973 = vunpack.c.h.b16 %v686
      %v974 = vunpack.c.l.b16 %v687
      %v975 = vunpack.c.h.b16 %v687
      %v976 = vpack.c.b16 %v790, %v784
      %v977 = vpack.c.b16 %v791, %v785
      %v978 = vpack.c.b16 %v792, %v786
      %v979 = vpack.c.b16 %v793, %v787
      %v980 = vpack.c.b16 %v794, %v788
      %v981 = vpack.c.b16 %v795, %v789
      %v982 = vpack.c.b16 %v802, %v796
      %v983 = vpack.c.b16 %v803, %v797
      %v984 = vpack.c.b16 %v804, %v798
      %v985 = vpack.c.b16 %v805, %v799
      %v986 = vpack.c.b16 %v806, %v800
      %v987 = vpack.c.b16 %v807, %v801
      %v988 = vpack.c.b16 %v814, %v808
      %v989 = vpack.c.b16 %v815, %v809
      %v990 = vpack.c.b16 %v816, %v810
      %v991 = vpack.c.b16 %v817, %v811
      %v992 = vpack.c.b16 %v818, %v812
      %v993 = vpack.c.b16 %v819, %v813
      %v994 = vpack.c.b16 %v826, %v820
      %v995 = vpack.c.b16 %v827, %v821
      %v996 = vpack.c.b16 %v828, %v822
      %v997 = vpack.c.b16 %v829, %v823
      %v998 = vpack.c.b16 %v830, %v824
      %v999 = vpack.c.b16 %v831, %v825
      %v1000 = vpack.c.b16 %v838, %v832
      %v1001 = vpack.c.b16 %v839, %v833
      %v1002 = vpack.c.b16 %v840, %v834
      %v1003 = vpack.c.b16 %v841, %v835
      %v1004 = vpack.c.b16 %v842, %v836
      %v1005 = vpack.c.b16 %v843, %v837
      %v1006 = vpack.c.b16 %v850, %v844
      %v1007 = vpack.c.b16 %v851, %v845
      %v1008 = vpack.c.b16 %v852, %v846
      %v1009 = vpack.c.b16 %v853, %v847
      %v1010 = vpack.c.b16 %v854, %v848
      %v1011 = vpack.c.b16 %v855, %v849
      %v1012 = vpack.c.b16 %v862, %v856
      %v1013 = vpack.c.b16 %v863, %v857
      %v1014 = vpack.c.b16 %v864, %v858
      %v1015 = vpack.c.b16 %v865, %v859
      %v1016 = vpack.c.b16 %v866, %v860
      %v1017 = vpack.c.b16 %v867, %v861
      %v1018 = vpack.c.b16 %v874, %v868
      %v1019 = vpack.c.b16 %v875, %v869
      %v1020 = vpack.c.b16 %v876, %v870
      %v1021 = vpack.c.b16 %v877, %v871
      %v1022 = vpack.c.b16 %v878, %v872
      %v1023 = vpack.c.b16 %v879, %v873
      %v1024 = vpack.c.b16 %v886, %v880
      %v1025 = vpack.c.b16 %v887, %v881
      %v1026 = vpack.c.b16 %v888, %v882
      %v1027 = vpack.c.b16 %v889, %v883
      %v1028 = vpack.c.b16 %v890, %v884
      %v1029 = vpack.c.b16 %v891, %v885
      %v1030 = vpack.c.b16 %v898, %v892
      %v1031 = vpack.c.b16 %v899, %v893
      %v1032 = vpack.c.b16 %v900, %v894
      %v1033 = vpack.c.b16 %v901, %v895
      %v1034 = vpack.c.b16 %v902, %v896
      %v1035 = vpack.c.b16 %v903, %v897
      %v1036 = vpack.c.b16 %v910, %v904
      %v1037 = vpack.c.b16 %v911, %v905
      %v1038 = vpack.c.b16 %v912, %v906
      %v1039 = vpack.c.b16 %v913, %v907
      %v1040 = vpack.c.b16 %v914, %v908
      %v1041 = vpack.c.b16 %v915, %v909
      %v1042 = vpack.c.b16 %v922, %v916
      %v1043 = vpack.c.b16 %v923, %v917
      %v1044 = vpack.c.b16 %v924, %v918
      %v1045 = vpack.c.b16 %v925, %v919
      %v1046 = vpack.c.b16 %v926, %v920
      %v1047 = vpack.c.b16 %v927, %v921
      %v1048 = vpack.c.b16 %v934, %v928
      %v1049 = vpack.c.b16 %v935, %v929
      %v1050 = vpack.c.b16 %v936, %v930
      %v1051 = vpack.c.b16 %v937, %v931
      %v1052 = vpack.c.b16 %v938, %v932
      %v1053 = vpack.c.b16 %v939, %v933
      %v1054 = vpack.c.b16 %v946, %v940
      %v1055 = vpack.c.b16 %v947, %v941
      %v1056 = vpack.c.b16 %v948, %v942
      %v1057 = vpack.c.b16 %v949, %v943
      %v1058 = vpack.c.b16 %v950, %v944
      %v1059 = vpack.c.b16 %v951, %v945
      %v1060 = vpack.c.b16 %v958, %v952
      %v1061 = vpack.c.b16 %v959, %v953
      %v1062 = vpack.c.b16 %v960, %v954
      %v1063 = vpack.c.b16 %v961, %v955
      %v1064 = vpack.c.b16 %v962, %v956
      %v1065 = vpack.c.b16 %v963, %v957
      %v1066 = vpack.c.b16 %v970, %v964
      %v1067 = vpack.c.b16 %v971, %v965
      %v1068 = vpack.c.b16 %v972, %v966
      %v1069 = vpack.c.b16 %v973, %v967
      %v1070 = vpack.c.b16 %v974, %v968
      %v1071 = vpack.c.b16 %v975, %v969
      %1168 = vmatprep.subr.bf16.mxu0 %v977
      %1169 = vmatpush1.bf16.msra.mxu0 %v976
      %1170 = vmatprep.subr.bf16.mxu0 %v983
      %1171 = vmatpush1.bf16.msra.mxu0 %v982
      %1172 = vmatprep.subr.bf16.mxu0 %v989
      %1173 = vmatpush1.bf16.msra.mxu0 %v988
      %1174 = vmatprep.subr.bf16.mxu0 %v995
      %1175 = vmatpush1.bf16.msra.mxu0 %v994
      %1176 = vmatprep.subr.bf16.mxu0 %v1001
      %1177 = vmatpush1.bf16.msra.mxu0 %v1000
      %1178 = vmatprep.subr.bf16.mxu0 %v1007
      %1179 = vmatpush1.bf16.msra.mxu0 %v1006
      %1180 = vmatprep.subr.bf16.mxu0 %v1013
      %1181 = vmatpush1.bf16.msra.mxu0 %v1012
      %1182 = vmatprep.subr.bf16.mxu0 %v1019
      %1183 = vmatpush1.bf16.msra.mxu0 %v1018
      %1184 = vmatprep.subr.bf16.mxu0 %v1025
      %1185 = vmatpush1.bf16.msra.mxu0 %v1024
      %1186 = vmatprep.subr.bf16.mxu0 %v1031
      %1187 = vmatpush1.bf16.msra.mxu0 %v1030
      %1188 = vmatprep.subr.bf16.mxu0 %v1037
      %1189 = vmatpush1.bf16.msra.mxu0 %v1036
      %1190 = vmatprep.subr.bf16.mxu0 %v1043
      %1191 = vmatpush1.bf16.msra.mxu0 %v1042
      %1192 = vmatprep.subr.bf16.mxu0 %v1049
      %1193 = vmatpush1.bf16.msra.mxu0 %v1048
      %1194 = vmatprep.subr.bf16.mxu0 %v1055
      %1195 = vmatpush1.bf16.msra.mxu0 %v1054
      %1196 = vmatprep.subr.bf16.mxu0 %v1061
      %1197 = vmatpush1.bf16.msra.mxu0 %v1060
      %1198 = vmatprep.subr.bf16.mxu0 %v1067
      %1199 = vmatpush1.bf16.msra.mxu0 %v1066
      %1200 = vmatprep.mubr.bf16.mxu0 %v591
      %1201 = vmatmul.mubr.bf16.gmra.mrb[0].mxu0 %v590
      %v1202 = vpop.f32.mrb[0].mxu0
      %v1203 = vadd.f32 0.0, %v1202
      %v1204 = vpop.f32.mrb[0].mxu0
      %v1205 = vadd.f32 0.0, %v1204
      %v1206 = vpop.f32.mrb[0].mxu0
      %v1207 = vadd.f32 0.0, %v1206
      %v1208 = vpop.f32.mrb[0].mxu0
      %v1209 = vadd.f32 0.0, %v1208
      %1210 = vdwg.mxu0
      %1211 = vmatprep.subr.bf16.mxu0 %v979
      %1212 = vmatpush1.bf16.msra.mxu0 %v978
      %1213 = vmatprep.subr.bf16.mxu0 %v985
      %1214 = vmatpush1.bf16.msra.mxu0 %v984
      %1215 = vmatprep.subr.bf16.mxu0 %v991
      %1216 = vmatpush1.bf16.msra.mxu0 %v990
      %1217 = vmatprep.subr.bf16.mxu0 %v997
      %1218 = vmatpush1.bf16.msra.mxu0 %v996
      %1219 = vmatprep.subr.bf16.mxu0 %v1003
      %1220 = vmatpush1.bf16.msra.mxu0 %v1002
      %1221 = vmatprep.subr.bf16.mxu0 %v1009
      %1222 = vmatpush1.bf16.msra.mxu0 %v1008
      %1223 = vmatprep.subr.bf16.mxu0 %v1015
      %1224 = vmatpush1.bf16.msra.mxu0 %v1014
      %1225 = vmatprep.subr.bf16.mxu0 %v1021
      %1226 = vmatpush1.bf16.msra.mxu0 %v1020
      %1227 = vmatprep.subr.bf16.mxu0 %v1027
      %1228 = vmatpush1.bf16.msra.mxu0 %v1026
      %1229 = vmatprep.subr.bf16.mxu0 %v1033
      %1230 = vmatpush1.bf16.msra.mxu0 %v1032
      %1231 = vmatprep.subr.bf16.mxu0 %v1039
      %1232 = vmatpush1.bf16.msra.mxu0 %v1038
      %1233 = vmatprep.subr.bf16.mxu0 %v1045
      %1234 = vmatpush1.bf16.msra.mxu0 %v1044
      %1235 = vmatprep.subr.bf16.mxu0 %v1051
      %1236 = vmatpush1.bf16.msra.mxu0 %v1050
      %1237 = vmatprep.subr.bf16.mxu0 %v1057
      %1238 = vmatpush1.bf16.msra.mxu0 %v1056
      %1239 = vmatprep.subr.bf16.mxu0 %v1063
      %1240 = vmatpush1.bf16.msra.mxu0 %v1062
      %1241 = vmatprep.subr.bf16.mxu0 %v1069
      %1242 = vmatpush1.bf16.msra.mxu0 %v1068
      %1243 = vmatprep.mubr.bf16.mxu0 %v591
      %1244 = vmatmul.mubr.bf16.gmra.mrb[0].mxu0 %v590
      %v1245 = vpop.f32.mrb[0].mxu0
      %v1246 = vadd.f32 0.0, %v1245
      %v1247 = vpop.f32.mrb[0].mxu0
      %v1248 = vadd.f32 0.0, %v1247
      %v1249 = vpop.f32.mrb[0].mxu0
      %v1250 = vadd.f32 0.0, %v1249
      %v1251 = vpop.f32.mrb[0].mxu0
      %v1252 = vadd.f32 0.0, %v1251
      %1253 = vdwg.mxu0
      %1254 = vmatprep.subr.bf16.mxu0 %v981
      %1255 = vmatpush1.bf16.msra.mxu0 %v980
      %1256 = vmatprep.subr.bf16.mxu0 %v987
      %1257 = vmatpush1.bf16.msra.mxu0 %v986
      %1258 = vmatprep.subr.bf16.mxu0 %v993
      %1259 = vmatpush1.bf16.msra.mxu0 %v992
      %1260 = vmatprep.subr.bf16.mxu0 %v999
      %1261 = vmatpush1.bf16.msra.mxu0 %v998
      %1262 = vmatprep.subr.bf16.mxu0 %v1005
      %1263 = vmatpush1.bf16.msra.mxu0 %v1004
      %1264 = vmatprep.subr.bf16.mxu0 %v1011
      %1265 = vmatpush1.bf16.msra.mxu0 %v1010
      %1266 = vmatprep.subr.bf16.mxu0 %v1017
      %1267 = vmatpush1.bf16.msra.mxu0 %v1016
      %1268 = vmatprep.subr.bf16.mxu0 %v1023
      %1269 = vmatpush1.bf16.msra.mxu0 %v1022
      %1270 = vmatprep.subr.bf16.mxu0 %v1029
      %1271 = vmatpush1.bf16.msra.mxu0 %v1028
      %1272 = vmatprep.subr.bf16.mxu0 %v1035
      %1273 = vmatpush1.bf16.msra.mxu0 %v1034
      %1274 = vmatprep.subr.bf16.mxu0 %v1041
      %1275 = vmatpush1.bf16.msra.mxu0 %v1040
      %1276 = vmatprep.subr.bf16.mxu0 %v1047
      %1277 = vmatpush1.bf16.msra.mxu0 %v1046
      %1278 = vmatprep.subr.bf16.mxu0 %v1053
      %1279 = vmatpush1.bf16.msra.mxu0 %v1052
      %1280 = vmatprep.subr.bf16.mxu0 %v1059
      %1281 = vmatpush1.bf16.msra.mxu0 %v1058
      %1282 = vmatprep.subr.bf16.mxu0 %v1065
      %1283 = vmatpush1.bf16.msra.mxu0 %v1064
      %1284 = vmatprep.subr.bf16.mxu0 %v1071
      %1285 = vmatpush1.bf16.msra.mxu0 %v1070
      %1286 = vmatprep.mubr.bf16.mxu0 %v591
      %1287 = vmatmul.mubr.bf16.gmra.mrb[0].mxu0 %v590
      %v1288 = vpop.f32.mrb[0].mxu0
      %v1289 = vadd.f32 0.0, %v1288
      %v1290 = vpop.f32.mrb[0].mxu0
      %v1291 = vadd.f32 0.0, %v1290
      %v1292 = vpop.f32.mrb[0].mxu0
      %v1293 = vadd.f32 0.0, %v1292
      %v1294 = vpop.f32.mrb[0].mxu0
      %v1295 = vadd.f32 0.0, %v1294
      %1296 = vdwg.mxu0
      %v1297 = vadd.f32 %v578, %v1203
      %v1298 = vadd.f32 %v579, %v1205
      %v1299 = vadd.f32 %v584, %v1207
      %v1300 = vadd.f32 %v585, %v1209
      %v1301 = vxor.u32 %v1297, 2147483648
      %v1302 = vxor.u32 %v1298, 2147483648
      %v1303 = vxor.u32 %v1299, 2147483648
      %v1304 = vxor.u32 %v1300, 2147483648
      %v1305 = vmul.f32 %v1301, 1.442695
      %v1306 = vpow.pop %v1305
      %v1307 = vmul.f32 %v1302, 1.442695
      %v1308 = vpow.pop %v1307
      %v1309 = vmul.f32 %v1303, 1.442695
      %v1310 = vpow.pop %v1309
      %v1311 = vmul.f32 %v1304, 1.442695
      %v1312 = vpow.pop %v1311
      %v1313 = vadd.f32 %v1306, 1.0
      %v1314 = vadd.f32 %v1308, 1.0
      %v1315 = vadd.f32 %v1310, 1.0
      %v1316 = vadd.f32 %v1312, 1.0
      %v1317 = vrcp.pop %v1313
      %v1318 = vmul.f32 1.0, %v1317
      %v1319 = vrcp.pop %v1314
      %v1320 = vmul.f32 1.0, %v1319
      %v1321 = vrcp.pop %v1315
      %v1322 = vmul.f32 1.0, %v1321
      %v1323 = vrcp.pop %v1316
      %v1324 = vmul.f32 1.0, %v1323
      %v1325 = vadd.f32 %v580, %v1246
      %v1326 = vadd.f32 %v581, %v1248
      %v1327 = vadd.f32 %v586, %v1250
      %v1328 = vadd.f32 %v587, %v1252
      %v1329 = vxor.u32 %v1325, 2147483648
      %v1330 = vxor.u32 %v1326, 2147483648
      %v1331 = vxor.u32 %v1327, 2147483648
      %v1332 = vxor.u32 %v1328, 2147483648
      %v1333 = vmul.f32 %v1329, 1.442695
      %v1334 = vpow.pop %v1333
      %v1335 = vmul.f32 %v1330, 1.442695
      %v1336 = vpow.pop %v1335
      %v1337 = vmul.f32 %v1331, 1.442695
      %v1338 = vpow.pop %v1337
      %v1339 = vmul.f32 %v1332, 1.442695
      %v1340 = vpow.pop %v1339
      %v1341 = vadd.f32 %v1334, 1.0
      %v1342 = vadd.f32 %v1336, 1.0
      %v1343 = vadd.f32 %v1338, 1.0
      %v1344 = vadd.f32 %v1340, 1.0
      %v1345 = vrcp.pop %v1341
      %v1346 = vmul.f32 1.0, %v1345
      %v1347 = vrcp.pop %v1342
      %v1348 = vmul.f32 1.0, %v1347
      %v1349 = vrcp.pop %v1343
      %v1350 = vmul.f32 1.0, %v1349
      %v1351 = vrcp.pop %v1344
      %v1352 = vmul.f32 1.0, %v1351
      %v1353 = vld [vmem:[%s5] sm:$0x3]
      %v1355 = vlaneseq
      %v1356 = vshrl.u32 %v1355, 7
      %v1357 = vsub.s32 0, %v1356
      %v1358 = vrot.slane %v1353, %v1357
      %v1359 = vlaneseq
      %v1360 = vshrl.u32 %v1359, 7
      %v1361 = vsub.s32 1, %v1360
      %v1362 = vrot.slane %v1353, %v1361
      %v1365 = vadd.f32 %v1289, %v1358
      %v1366 = vadd.f32 %v1291, %v1362
      %v1367 = vadd.f32 %v1293, %v1358
      %v1368 = vadd.f32 %v1295, %v1362
      %v1369 = vmul.f32 %v1318, %v1365
      %v1370 = vmul.f32 %v1320, %v1366
      %v1371 = vmul.f32 %v1322, %v1367
      %v1372 = vmul.f32 %v1324, %v1368
      %v1373 = vadd.f32 %v582, %v1369
      %v1374 = vadd.f32 %v583, %v1370
      %v1375 = vadd.f32 %v588, %v1371
      %v1376 = vadd.f32 %v589, %v1372
      %v1377 = vtanh.pop %v1373
      %v1378 = vtanh.pop %v1374
      %v1379 = vtanh.pop %v1375
      %v1380 = vtanh.pop %v1376
      %v1381 = vsub.f32 1.0, %v1346
      %v1382 = vsub.f32 1.0, %v1348
      %v1383 = vsub.f32 1.0, %v1350
      %v1384 = vsub.f32 1.0, %v1352
      %v1385 = vmul.f32 %v1381, %v1377
      %v1386 = vmul.f32 %v1382, %v1378
      %v1387 = vmul.f32 %v1383, %v1379
      %v1388 = vmul.f32 %v1384, %v1380
      %v1389 = vmul.f32 %v1346, %v272
      %v1390 = vmul.f32 %v1348, %v273
      %v1391 = vmul.f32 %v1350, %v274
      %v1392 = vmul.f32 %v1352, %v275
      %v1393 = vadd.f32 %v1385, %v1389
      %v1394 = vadd.f32 %v1386, %v1390
      %v1395 = vadd.f32 %v1387, %v1391
      %v1396 = vadd.f32 %v1388, %v1392
      %1397 = vst [vmem:[%s6] sm:$0xff] %v1393
      %1398 = vst [vmem:[%s6 + $0x8] sm:$0xff] %v1394
      %1399 = vst [vmem:[%s6 + $0x10] sm:$0xff] %v1395
      %1400 = vst [vmem:[%s6 + $0x18] sm:$0xff] %v1396
      // Predicated region
      $region49: #{gruvae_forward.2} parent=43 // pred_check
        %p1401 = pneg %p166
      $region50: #{gruvae_forward.2} parent=43 // pred_check_branch
        %1403 = sbr.rel (%p1401) target = $region52
      $region51: #{gruvae_forward.2} parent=43 // pred_region
        _
      $region52: #{gruvae_forward.2} parent=43 // pred_fallthru
        _
      // Predicated region
      $region53: #{gruvae_forward.2} parent=43 // pred_check
        %p1404 = pneg %p166
      $region54: #{gruvae_forward.2} parent=43 // pred_check_branch
        %1406 = sbr.rel (%p1404) target = $region56
      $region55: #{gruvae_forward.2} parent=43 // pred_region
        _
      $region56: #{gruvae_forward.2} parent=43 // pred_fallthru
        _
    $region44: #{gruvae_forward.2} parent=5 // pred_fallthru
      _
    %p1407 = scmp.le.s32.totalorder 2, %s12
    // Predicated region
    $region57: #{gruvae_forward.2} parent=5 // pred_check
      %p1408 = pneg %p1407
    $region58: #{gruvae_forward.2} parent=5 // pred_check_branch
      %1410 = sbr.rel (%p1408) target = $region60
    $region59: #{gruvae_forward.2} parent=5 // pred_region
      %s1411 = ssub.s32 %s12, 2
    $region60: #{gruvae_forward.2} parent=5 // pred_fallthru
      _
  $region6: #{gruvae_forward.2} parent=0 // loop_footer
    %s16 = sadd.s32 1, %s12
  $region7: #{gruvae_forward.2} parent=0 // loop_footer_branch
    %11 = sbr.rel target = $region3
  $region8: #{gruvae_forward.2} parent=0 // loop_exit
    _

// kernel: gruvae_forward.3
$region0: #{gruvae_forward.3}
  #allocation0 [shape = 'u32[]', space=smem, size = 0x4, offset = 0x4, fixed_abs, tag = 'smem constant byte address 0x4 - core index']
  #allocation1 [shape = 'u32[144,128]{1,0:T(1,128)}', space=vmem, size = 0x12000, scoped, tag = 'internal scratch']
  #allocation2 [shape = 'f32[16,256]{1,0:T(8,128)}', space=vmem, size = 0x4000, scoped, tag = 'scratch operand']
  #allocation3 [shape = 'f32[16,768]{1,0:T(8,128)}', space=vmem, size = 0xc000, scoped, tag = 'scratch operand']
  %s0 = inlined_call_operand.vmem [shape: f32[128,768], index: 0, kind: input, shape index: {}]
  %s1 = inlined_call_operand.vmem [shape: f32[128,8], index: 1, kind: input, shape index: {}]
  %s2 = inlined_call_operand.vmem [shape: f32[8,768], index: 2, kind: input, shape index: {}]
  %s3 = inlined_call_operand.vmem [shape: f32[1,768], index: 3, kind: input, shape index: {}]
  %s4 = inlined_call_operand.vmem [shape: f32[16,256], index: 4, kind: input, shape index: {}]
  %s5 = inlined_call_operand.vmem [shape: f32[16,64], index: 5, kind: input, shape index: {}]
  %s6 = inlined_call_operand.vmem [shape: f32[256,128], index: 6, kind: input, shape index: {}]
  %s7 = inlined_call_operand.vmem [shape: f32[1,128], index: 7, kind: input, shape index: {}]
  %s8 = inlined_call_operand.vmem [shape: f32[64,256], index: 8, kind: input, shape index: {}]
  %s9 = inlined_call_operand.vmem [shape: f32[1,256], index: 9, kind: input, shape index: {}]
  %s10 = inlined_call_operand.vmem [shape: f32[64,768], index: 10, kind: input, shape index: {}]
  %s11 = inlined_call_operand.vmem [shape: bf16[256,768], index: 11, kind: input, shape index: {}]
  %s12 = inlined_call_operand.vmem [shape: f32[1,256], index: 12, kind: input, shape index: {}]
  %s13 = inlined_call_operand.vmem [shape: bf16[256,128], index: 13, kind: input, shape index: {}]
  %s14 = inlined_call_operand.vmem [shape: f32[1,128], index: 14, kind: input, shape index: {}]
  %s15 = inlined_call_operand.vmem [shape: f32[16,128], index: 15, kind: output, shape index: {0}]
  %s16 = inlined_call_operand.vmem [shape: f32[16,1024], index: 16, kind: output, shape index: {1}]
  %17 = xla_tuple %s15, %s16
  %s18 = sld [smem:[#allocation0]]
  $region139: #{gruvae_forward.3} parent=0
    _
  %s20 = ssub.s32 1, %s18
  %s21 = scalar_select 0, %s20, %s18
  $region1: #{gruvae_forward.3} parent=0
    #allocation4 [shape = 'u8[16384]{0}', space=vmem, size = 0x4000, scoped, tag = 'output window, operand 1']
    loop: start=0, step=1, limit=10
    $region2: #{gruvae_forward.3} parent=1 // loop_pre_header
      _
    $region3: #{gruvae_forward.3} parent=1 // loop_header
      %s23 = sphi 0, %s27
      %p24 = scmp.ge.s32.totalorder %s23, 10
      %s33 = sphi 0, %s35
      %s36 = sphi 0, %s33
      %s37 = sphi 0, %s36
      %s53 = sphi 0, %s37
      %s59 = sphi 0, %s61
      %s62 = sphi 0, %s59
      %s63 = sphi 0, %s62
      %s79 = sphi 0, %s63
      %s83 = sphi 0, %s83
      %s85 = sphi 0, %s83
      %s86 = sphi 0, %s85
      %s100 = sphi 0, %s86
      %s104 = sphi 0, %s104
      %s106 = sphi 0, %s104
      %s107 = sphi 0, %s106
      %s121 = sphi 0, %s107
      %s125 = sphi 0, %s125
      %s127 = sphi 0, %s125
      %s128 = sphi 0, %s127
      %s142 = sphi 0, %s128
      %s146 = sphi 0, %s146
      %s148 = sphi 0, %s146
      %s149 = sphi 0, %s148
      %s163 = sphi 0, %s149
      %s167 = sphi 0, %s167
      %s169 = sphi 0, %s167
      %s170 = sphi 0, %s169
      %s184 = sphi 0, %s170
      %s188 = sphi 0, %s188
      %s190 = sphi 0, %s188
      %s191 = sphi 0, %s190
      %s205 = sphi 0, %s191
      %s209 = sphi 0, %s209
      %s211 = sphi 0, %s209
      %s212 = sphi 0, %s211
      %s226 = sphi 0, %s212
      %s230 = sphi 0, %s230
      %s232 = sphi 0, %s230
      %s233 = sphi 0, %s232
      %s247 = sphi 0, %s233
      %s251 = sphi 0, %s251
      %s253 = sphi 0, %s251
      %s254 = sphi 0, %s253
      %s268 = sphi 0, %s254
      %s272 = sphi 0, %s272
      %s274 = sphi 0, %s272
      %s275 = sphi 0, %s274
      %s289 = sphi 0, %s275
      %s293 = sphi 0, %s293
      %s295 = sphi 0, %s293
      %s296 = sphi 0, %s295
      %s310 = sphi 0, %s296
      %s314 = sphi 0, %s314
      %s316 = sphi 0, %s314
      %s317 = sphi 0, %s316
      %s331 = sphi 0, %s317
      %s335 = sphi 0, %s335
      %s337 = sphi 0, %s335
      %s338 = sphi 0, %s337
      %s352 = sphi 0, %s338
      %s356 = sphi 0, %s356
      %s358 = sphi 0, %s356
      %s359 = sphi 0, %s358
      %s373 = sphi 0, %s359
      %s379 = sphi 0, %s381
      %s382 = sphi 0, %s379
      %s383 = sphi 0, %s382
      %s399 = sphi 0, %s383
    $region4: #{gruvae_forward.3} parent=1 // loop_header_branch
      %26 = sbr.rel (%p24) target = $region8
    $region5: #{gruvae_forward.3} parent=1 // loop_body
      %s28 = ssub.s32 %s23, 1
      %s29 = ssub.s32 %s23, 2
      %s30 = sadd.s32 %s23, 1
      %s31 = ssub.s32 %s23, %s30
      %p32 = scmp.eq.s32.totalorder %s31, 0
      %s34 = sadd.s32 %s33, 1
      %s35 = scalar_select %p32, %s33, %s34
      %p38 = pneg %p32
      %p39 = scmp.eq.s32.totalorder %s23, 7
      %p40 = por %p38, %p39
      %p41 = scmp.ne.s32.totalorder %s33, %s36
      %p42 = scmp.eq.s32.totalorder %s23, 0
      %p43 = por %p41, %p42
      %p44 = scmp.ne.s32.totalorder %s33, %s36
      %p45 = scmp.eq.s32.totalorder %s28, 7
      %p46 = por %p44, %p45
      %p47 = scmp.ne.s32.totalorder %s36, %s37
      %p48 = scmp.eq.s32.totalorder %s28, 0
      %p49 = por %p47, %p48
      %p50 = scmp.ne.s32.totalorder %s36, %s37
      %p51 = scmp.eq.s32.totalorder %s29, 7
      %p52 = por %p50, %p51
      %p54 = scmp.ne.s32.totalorder %s37, %s53
      %p55 = scmp.eq.s32.totalorder %s29, 0
      %p56 = por %p54, %p55
      %s57 = ssub.s32 %s23, %s30
      %p58 = scmp.eq.s32.totalorder %s57, 0
      %s60 = sadd.s32 %s59, 1
      %s61 = scalar_select %p58, %s59, %s60
      %p64 = pneg %p58
      %p65 = scmp.eq.s32.totalorder %s23, 7
      %p66 = por %p64, %p65
      %p67 = scmp.ne.s32.totalorder %s59, %s62
      %p68 = scmp.eq.s32.totalorder %s23, 0
      %p69 = por %p67, %p68
      %p70 = scmp.ne.s32.totalorder %s59, %s62
      %p71 = scmp.eq.s32.totalorder %s28, 7
      %p72 = por %p70, %p71
      %p73 = scmp.ne.s32.totalorder %s62, %s63
      %p74 = scmp.eq.s32.totalorder %s28, 0
      %p75 = por %p73, %p74
      %p76 = scmp.ne.s32.totalorder %s62, %s63
      %p77 = scmp.eq.s32.totalorder %s29, 7
      %p78 = por %p76, %p77
      %p80 = scmp.ne.s32.totalorder %s63, %s79
      %p81 = scmp.eq.s32.totalorder %s29, 0
      %p82 = por %p80, %p81
      %s84 = sadd.s32 %s83, 1
      %p87 = scmp.eq.s32.totalorder %s23, 7
      %p88 = scmp.ne.s32.totalorder %s83, %s85
      %p89 = scmp.eq.s32.totalorder %s23, 0
      %p90 = por %p88, %p89
      %p91 = scmp.ne.s32.totalorder %s83, %s85
      %p92 = scmp.eq.s32.totalorder %s28, 7
      %p93 = por %p91, %p92
      %p94 = scmp.ne.s32.totalorder %s85, %s86
      %p95 = scmp.eq.s32.totalorder %s28, 0
      %p96 = por %p94, %p95
      %p97 = scmp.ne.s32.totalorder %s85, %s86
      %p98 = scmp.eq.s32.totalorder %s29, 7
      %p99 = por %p97, %p98
      %p101 = scmp.ne.s32.totalorder %s86, %s100
      %p102 = scmp.eq.s32.totalorder %s29, 0
      %p103 = por %p101, %p102
      %s105 = sadd.s32 %s104, 1
      %p108 = scmp.eq.s32.totalorder %s23, 7
      %p109 = scmp.ne.s32.totalorder %s104, %s106
      %p110 = scmp.eq.s32.totalorder %s23, 0
      %p111 = por %p109, %p110
      %p112 = scmp.ne.s32.totalorder %s104, %s106
      %p113 = scmp.eq.s32.totalorder %s28, 7
      %p114 = por %p112, %p113
      %p115 = scmp.ne.s32.totalorder %s106, %s107
      %p116 = scmp.eq.s32.totalorder %s28, 0
      %p117 = por %p115, %p116
      %p118 = scmp.ne.s32.totalorder %s106, %s107
      %p119 = scmp.eq.s32.totalorder %s29, 7
      %p120 = por %p118, %p119
      %p122 = scmp.ne.s32.totalorder %s107, %s121
      %p123 = scmp.eq.s32.totalorder %s29, 0
      %p124 = por %p122, %p123
      %s126 = sadd.s32 %s125, 1
      %p129 = scmp.eq.s32.totalorder %s23, 7
      %p130 = scmp.ne.s32.totalorder %s125, %s127
      %p131 = scmp.eq.s32.totalorder %s23, 0
      %p132 = por %p130, %p131
      %p133 = scmp.ne.s32.totalorder %s125, %s127
      %p134 = scmp.eq.s32.totalorder %s28, 7
      %p135 = por %p133, %p134
      %p136 = scmp.ne.s32.totalorder %s127, %s128
      %p137 = scmp.eq.s32.totalorder %s28, 0
      %p138 = por %p136, %p137
      %p139 = scmp.ne.s32.totalorder %s127, %s128
      %p140 = scmp.eq.s32.totalorder %s29, 7
      %p141 = por %p139, %p140
      %p143 = scmp.ne.s32.totalorder %s128, %s142
      %p144 = scmp.eq.s32.totalorder %s29, 0
      %p145 = por %p143, %p144
      %s147 = sadd.s32 %s146, 1
      %p150 = scmp.eq.s32.totalorder %s23, 7
      %p151 = scmp.ne.s32.totalorder %s146, %s148
      %p152 = scmp.eq.s32.totalorder %s23, 0
      %p153 = por %p151, %p152
      %p154 = scmp.ne.s32.totalorder %s146, %s148
      %p155 = scmp.eq.s32.totalorder %s28, 7
      %p156 = por %p154, %p155
      %p157 = scmp.ne.s32.totalorder %s148, %s149
      %p158 = scmp.eq.s32.totalorder %s28, 0
      %p159 = por %p157, %p158
      %p160 = scmp.ne.s32.totalorder %s148, %s149
      %p161 = scmp.eq.s32.totalorder %s29, 7
      %p162 = por %p160, %p161
      %p164 = scmp.ne.s32.totalorder %s149, %s163
      %p165 = scmp.eq.s32.totalorder %s29, 0
      %p166 = por %p164, %p165
      %s168 = sadd.s32 %s167, 1
      %p171 = scmp.eq.s32.totalorder %s23, 7
      %p172 = scmp.ne.s32.totalorder %s167, %s169
      %p173 = scmp.eq.s32.totalorder %s23, 0
      %p174 = por %p172, %p173
      %p175 = scmp.ne.s32.totalorder %s167, %s169
      %p176 = scmp.eq.s32.totalorder %s28, 7
      %p177 = por %p175, %p176
      %p178 = scmp.ne.s32.totalorder %s169, %s170
      %p179 = scmp.eq.s32.totalorder %s28, 0
      %p180 = por %p178, %p179
      %p181 = scmp.ne.s32.totalorder %s169, %s170
      %p182 = scmp.eq.s32.totalorder %s29, 7
      %p183 = por %p181, %p182
      %p185 = scmp.ne.s32.totalorder %s170, %s184
      %p186 = scmp.eq.s32.totalorder %s29, 0
      %p187 = por %p185, %p186
      %s189 = sadd.s32 %s188, 1
      %p192 = scmp.eq.s32.totalorder %s23, 7
      %p193 = scmp.ne.s32.totalorder %s188, %s190
      %p194 = scmp.eq.s32.totalorder %s23, 0
      %p195 = por %p193, %p194
      %p196 = scmp.ne.s32.totalorder %s188, %s190
      %p197 = scmp.eq.s32.totalorder %s28, 7
      %p198 = por %p196, %p197
      %p199 = scmp.ne.s32.totalorder %s190, %s191
      %p200 = scmp.eq.s32.totalorder %s28, 0
      %p201 = por %p199, %p200
      %p202 = scmp.ne.s32.totalorder %s190, %s191
      %p203 = scmp.eq.s32.totalorder %s29, 7
      %p204 = por %p202, %p203
      %p206 = scmp.ne.s32.totalorder %s191, %s205
      %p207 = scmp.eq.s32.totalorder %s29, 0
      %p208 = por %p206, %p207
      %s210 = sadd.s32 %s209, 1
      %p213 = scmp.eq.s32.totalorder %s23, 7
      %p214 = scmp.ne.s32.totalorder %s209, %s211
      %p215 = scmp.eq.s32.totalorder %s23, 0
      %p216 = por %p214, %p215
      %p217 = scmp.ne.s32.totalorder %s209, %s211
      %p218 = scmp.eq.s32.totalorder %s28, 7
      %p219 = por %p217, %p218
      %p220 = scmp.ne.s32.totalorder %s211, %s212
      %p221 = scmp.eq.s32.totalorder %s28, 0
      %p222 = por %p220, %p221
      %p223 = scmp.ne.s32.totalorder %s211, %s212
      %p224 = scmp.eq.s32.totalorder %s29, 7
      %p225 = por %p223, %p224
      %p227 = scmp.ne.s32.totalorder %s212, %s226
      %p228 = scmp.eq.s32.totalorder %s29, 0
      %p229 = por %p227, %p228
      %s231 = sadd.s32 %s230, 1
      %p234 = scmp.eq.s32.totalorder %s23, 7
      %p235 = scmp.ne.s32.totalorder %s230, %s232
      %p236 = scmp.eq.s32.totalorder %s23, 0
      %p237 = por %p235, %p236
      %p238 = scmp.ne.s32.totalorder %s230, %s232
      %p239 = scmp.eq.s32.totalorder %s28, 7
      %p240 = por %p238, %p239
      %p241 = scmp.ne.s32.totalorder %s232, %s233
      %p242 = scmp.eq.s32.totalorder %s28, 0
      %p243 = por %p241, %p242
      %p244 = scmp.ne.s32.totalorder %s232, %s233
      %p245 = scmp.eq.s32.totalorder %s29, 7
      %p246 = por %p244, %p245
      %p248 = scmp.ne.s32.totalorder %s233, %s247
      %p249 = scmp.eq.s32.totalorder %s29, 0
      %p250 = por %p248, %p249
      %s252 = sadd.s32 %s251, 1
      %p255 = scmp.eq.s32.totalorder %s23, 7
      %p256 = scmp.ne.s32.totalorder %s251, %s253
      %p257 = scmp.eq.s32.totalorder %s23, 0
      %p258 = por %p256, %p257
      %p259 = scmp.ne.s32.totalorder %s251, %s253
      %p260 = scmp.eq.s32.totalorder %s28, 7
      %p261 = por %p259, %p260
      %p262 = scmp.ne.s32.totalorder %s253, %s254
      %p263 = scmp.eq.s32.totalorder %s28, 0
      %p264 = por %p262, %p263
      %p265 = scmp.ne.s32.totalorder %s253, %s254
      %p266 = scmp.eq.s32.totalorder %s29, 7
      %p267 = por %p265, %p266
      %p269 = scmp.ne.s32.totalorder %s254, %s268
      %p270 = scmp.eq.s32.totalorder %s29, 0
      %p271 = por %p269, %p270
      %s273 = sadd.s32 %s272, 1
      %p276 = scmp.eq.s32.totalorder %s23, 7
      %p277 = scmp.ne.s32.totalorder %s272, %s274
      %p278 = scmp.eq.s32.totalorder %s23, 0
      %p279 = por %p277, %p278
      %p280 = scmp.ne.s32.totalorder %s272, %s274
      %p281 = scmp.eq.s32.totalorder %s28, 7
      %p282 = por %p280, %p281
      %p283 = scmp.ne.s32.totalorder %s274, %s275
      %p284 = scmp.eq.s32.totalorder %s28, 0
      %p285 = por %p283, %p284
      %p286 = scmp.ne.s32.totalorder %s274, %s275
      %p287 = scmp.eq.s32.totalorder %s29, 7
      %p288 = por %p286, %p287
      %p290 = scmp.ne.s32.totalorder %s275, %s289
      %p291 = scmp.eq.s32.totalorder %s29, 0
      %p292 = por %p290, %p291
      %s294 = sadd.s32 %s293, 1
      %p297 = scmp.eq.s32.totalorder %s23, 7
      %p298 = scmp.ne.s32.totalorder %s293, %s295
      %p299 = scmp.eq.s32.totalorder %s23, 0
      %p300 = por %p298, %p299
      %p301 = scmp.ne.s32.totalorder %s293, %s295
      %p302 = scmp.eq.s32.totalorder %s28, 7
      %p303 = por %p301, %p302
      %p304 = scmp.ne.s32.totalorder %s295, %s296
      %p305 = scmp.eq.s32.totalorder %s28, 0
      %p306 = por %p304, %p305
      %p307 = scmp.ne.s32.totalorder %s295, %s296
      %p308 = scmp.eq.s32.totalorder %s29, 7
      %p309 = por %p307, %p308
      %p311 = scmp.ne.s32.totalorder %s296, %s310
      %p312 = scmp.eq.s32.totalorder %s29, 0
      %p313 = por %p311, %p312
      %s315 = sadd.s32 %s314, 1
      %p318 = scmp.eq.s32.totalorder %s23, 7
      %p319 = scmp.ne.s32.totalorder %s314, %s316
      %p320 = scmp.eq.s32.totalorder %s23, 0
      %p321 = por %p319, %p320
      %p322 = scmp.ne.s32.totalorder %s314, %s316
      %p323 = scmp.eq.s32.totalorder %s28, 7
      %p324 = por %p322, %p323
      %p325 = scmp.ne.s32.totalorder %s316, %s317
      %p326 = scmp.eq.s32.totalorder %s28, 0
      %p327 = por %p325, %p326
      %p328 = scmp.ne.s32.totalorder %s316, %s317
      %p329 = scmp.eq.s32.totalorder %s29, 7
      %p330 = por %p328, %p329
      %p332 = scmp.ne.s32.totalorder %s317, %s331
      %p333 = scmp.eq.s32.totalorder %s29, 0
      %p334 = por %p332, %p333
      %s336 = sadd.s32 %s335, 1
      %p339 = scmp.eq.s32.totalorder %s23, 7
      %p340 = scmp.ne.s32.totalorder %s335, %s337
      %p341 = scmp.eq.s32.totalorder %s23, 0
      %p342 = por %p340, %p341
      %p343 = scmp.ne.s32.totalorder %s335, %s337
      %p344 = scmp.eq.s32.totalorder %s28, 7
      %p345 = por %p343, %p344
      %p346 = scmp.ne.s32.totalorder %s337, %s338
      %p347 = scmp.eq.s32.totalorder %s28, 0
      %p348 = por %p346, %p347
      %p349 = scmp.ne.s32.totalorder %s337, %s338
      %p350 = scmp.eq.s32.totalorder %s29, 7
      %p351 = por %p349, %p350
      %p353 = scmp.ne.s32.totalorder %s338, %s352
      %p354 = scmp.eq.s32.totalorder %s29, 0
      %p355 = por %p353, %p354
      %s357 = sadd.s32 %s356, 1
      %p360 = scmp.eq.s32.totalorder %s23, 7
      %p361 = scmp.ne.s32.totalorder %s356, %s358
      %p362 = scmp.eq.s32.totalorder %s23, 0
      %p363 = por %p361, %p362
      %p364 = scmp.ne.s32.totalorder %s356, %s358
      %p365 = scmp.eq.s32.totalorder %s28, 7
      %p366 = por %p364, %p365
      %p367 = scmp.ne.s32.totalorder %s358, %s359
      %p368 = scmp.eq.s32.totalorder %s28, 0
      %p369 = por %p367, %p368
      %p370 = scmp.ne.s32.totalorder %s358, %s359
      %p371 = scmp.eq.s32.totalorder %s29, 7
      %p372 = por %p370, %p371
      %p374 = scmp.ne.s32.totalorder %s359, %s373
      %p375 = scmp.eq.s32.totalorder %s29, 0
      %p376 = por %p374, %p375
      %s377 = ssub.s32 %s23, %s30
      %p378 = scmp.eq.s32.totalorder %s377, 0
      %s380 = sadd.s32 %s379, 1
      %s381 = scalar_select %p378, %s379, %s380
      %p384 = pneg %p378
      %p385 = scmp.eq.s32.totalorder %s23, 7
      %p386 = por %p384, %p385
      %p387 = scmp.ne.s32.totalorder %s379, %s382
      %p388 = scmp.eq.s32.totalorder %s23, 0
      %p389 = por %p387, %p388
      %p390 = scmp.ne.s32.totalorder %s379, %s382
      %p391 = scmp.eq.s32.totalorder %s28, 7
      %p392 = por %p390, %p391
      %p393 = scmp.ne.s32.totalorder %s382, %s383
      %p394 = scmp.eq.s32.totalorder %s28, 0
      %p395 = por %p393, %p394
      %p396 = scmp.ne.s32.totalorder %s382, %s383
      %p397 = scmp.eq.s32.totalorder %s29, 7
      %p398 = por %p396, %p397
      %p400 = scmp.ne.s32.totalorder %s383, %s399
      %p401 = scmp.eq.s32.totalorder %s29, 0
      %p402 = por %p400, %p401
      %p403 = scmp.le.s32.totalorder 1, %s23
      %p404 = scmp.lt.s32.totalorder %s23, 9
      %p405 = pnand %p403, %p404
      %p406 = pneg %p405
      // Predicated region
      $region9: #{gruvae_forward.3} parent=5 // pred_check
        _
      $region10: #{gruvae_forward.3} parent=5 // pred_check_branch
        %408 = sbr.rel (%p405) target = $region12
      $region11: #{gruvae_forward.3} parent=5 // pred_region
        %s409 = ssub.s32 %s23, 1
        // Predicated region
        $region13: #{gruvae_forward.3} parent=11 // pred_check
          %p410 = pneg %p96
        $region14: #{gruvae_forward.3} parent=11 // pred_check_branch
          %412 = sbr.rel (%p410) target = $region16
        $region15: #{gruvae_forward.3} parent=11 // pred_region
          _
        $region16: #{gruvae_forward.3} parent=11 // pred_fallthru
          _
        // Predicated region
        $region17: #{gruvae_forward.3} parent=11 // pred_check
          %p413 = pneg %p117
        $region18: #{gruvae_forward.3} parent=11 // pred_check_branch
          %415 = sbr.rel (%p413) target = $region20
        $region19: #{gruvae_forward.3} parent=11 // pred_region
          _
        $region20: #{gruvae_forward.3} parent=11 // pred_fallthru
          _
        // Predicated region
        $region21: #{gruvae_forward.3} parent=11 // pred_check
          %p416 = pneg %p138
        $region22: #{gruvae_forward.3} parent=11 // pred_check_branch
          %418 = sbr.rel (%p416) target = $region24
        $region23: #{gruvae_forward.3} parent=11 // pred_region
          _
        $region24: #{gruvae_forward.3} parent=11 // pred_fallthru
          _
        // Predicated region
        $region25: #{gruvae_forward.3} parent=11 // pred_check
          %p419 = pneg %p159
        $region26: #{gruvae_forward.3} parent=11 // pred_check_branch
          %421 = sbr.rel (%p419) target = $region28
        $region27: #{gruvae_forward.3} parent=11 // pred_region
          _
        $region28: #{gruvae_forward.3} parent=11 // pred_fallthru
          _
        // Predicated region
        $region29: #{gruvae_forward.3} parent=11 // pred_check
          %p422 = pneg %p180
        $region30: #{gruvae_forward.3} parent=11 // pred_check_branch
          %424 = sbr.rel (%p422) target = $region32
        $region31: #{gruvae_forward.3} parent=11 // pred_region
          _
        $region32: #{gruvae_forward.3} parent=11 // pred_fallthru
          _
        // Predicated region
        $region33: #{gruvae_forward.3} parent=11 // pred_check
          %p425 = pneg %p201
        $region34: #{gruvae_forward.3} parent=11 // pred_check_branch
          %427 = sbr.rel (%p425) target = $region36
        $region35: #{gruvae_forward.3} parent=11 // pred_region
          _
        $region36: #{gruvae_forward.3} parent=11 // pred_fallthru
          _
        // Predicated region
        $region37: #{gruvae_forward.3} parent=11 // pred_check
          %p428 = pneg %p222
        $region38: #{gruvae_forward.3} parent=11 // pred_check_branch
          %430 = sbr.rel (%p428) target = $region40
        $region39: #{gruvae_forward.3} parent=11 // pred_region
          _
        $region40: #{gruvae_forward.3} parent=11 // pred_fallthru
          _
        // Predicated region
        $region41: #{gruvae_forward.3} parent=11 // pred_check
          %p431 = pneg %p243
        $region42: #{gruvae_forward.3} parent=11 // pred_check_branch
          %433 = sbr.rel (%p431) target = $region44
        $region43: #{gruvae_forward.3} parent=11 // pred_region
          _
        $region44: #{gruvae_forward.3} parent=11 // pred_fallthru
          _
        // Predicated region
        $region45: #{gruvae_forward.3} parent=11 // pred_check
          %p434 = pneg %p264
        $region46: #{gruvae_forward.3} parent=11 // pred_check_branch
          %436 = sbr.rel (%p434) target = $region48
        $region47: #{gruvae_forward.3} parent=11 // pred_region
          _
        $region48: #{gruvae_forward.3} parent=11 // pred_fallthru
          _
        // Predicated region
        $region49: #{gruvae_forward.3} parent=11 // pred_check
          %p437 = pneg %p285
        $region50: #{gruvae_forward.3} parent=11 // pred_check_branch
          %439 = sbr.rel (%p437) target = $region52
        $region51: #{gruvae_forward.3} parent=11 // pred_region
          _
        $region52: #{gruvae_forward.3} parent=11 // pred_fallthru
          _
        // Predicated region
        $region53: #{gruvae_forward.3} parent=11 // pred_check
          %p440 = pneg %p306
        $region54: #{gruvae_forward.3} parent=11 // pred_check_branch
          %442 = sbr.rel (%p440) target = $region56
        $region55: #{gruvae_forward.3} parent=11 // pred_region
          _
        $region56: #{gruvae_forward.3} parent=11 // pred_fallthru
          _
        // Predicated region
        $region57: #{gruvae_forward.3} parent=11 // pred_check
          %p443 = pneg %p327
        $region58: #{gruvae_forward.3} parent=11 // pred_check_branch
          %445 = sbr.rel (%p443) target = $region60
        $region59: #{gruvae_forward.3} parent=11 // pred_region
          _
        $region60: #{gruvae_forward.3} parent=11 // pred_fallthru
          _
        // Predicated region
        $region61: #{gruvae_forward.3} parent=11 // pred_check
          %p446 = pneg %p348
        $region62: #{gruvae_forward.3} parent=11 // pred_check_branch
          %448 = sbr.rel (%p446) target = $region64
        $region63: #{gruvae_forward.3} parent=11 // pred_region
          _
        $region64: #{gruvae_forward.3} parent=11 // pred_fallthru
          _
      $region12: #{gruvae_forward.3} parent=5 // pred_fallthru
        _
      %p449 = scmp.lt.s32.totalorder %s23, 8
      // Predicated region
      $region65: #{gruvae_forward.3} parent=5 // pred_check
        %p450 = pneg %p449
      $region66: #{gruvae_forward.3} parent=5 // pred_check_branch
        %452 = sbr.rel (%p450) target = $region68
      $region67: #{gruvae_forward.3} parent=5 // pred_region
        // Predicated region
        $region69: #{gruvae_forward.3} parent=67 // pred_check
          %p453 = pneg %p43
        $region70: #{gruvae_forward.3} parent=67 // pred_check_branch
          %455 = sbr.rel (%p453) target = $region72
        $region71: #{gruvae_forward.3} parent=67 // pred_region
          %s456 = smul.u32 2, %s23
          %p457 = scmp.lt.s32.totalorder %s456, 15
          %s458 = scalar_select %p457, %s456, 15
          %s459 = smul.addr %s458, 6
          %s460 = smul.addr %s459, 8
          %s461 = scalar_lea.vmem %s0, %s460
          %s462 = smul.u32 2, %s23
        $region72: #{gruvae_forward.3} parent=67 // pred_fallthru
          _
        // Predicated region
        $region73: #{gruvae_forward.3} parent=67 // pred_check
          %p463 = pneg %p69
        $region74: #{gruvae_forward.3} parent=67 // pred_check_branch
          %465 = sbr.rel (%p463) target = $region76
        $region75: #{gruvae_forward.3} parent=67 // pred_region
          %s466 = smul.u32 2, %s23
          %p467 = scmp.lt.s32.totalorder %s466, 15
          %s468 = scalar_select %p467, %s466, 15
          %s469 = smul.addr %s468, 8
          %s470 = scalar_lea.vmem %s1, %s469
          %s471 = smul.u32 2, %s23
        $region76: #{gruvae_forward.3} parent=67 // pred_fallthru
          _
      $region68: #{gruvae_forward.3} parent=5 // pred_fallthru
        _
      %p472 = scmp.le.s32.totalorder 1, %s23
      %p473 = scmp.lt.s32.totalorder %s23, 9
      %p474 = pnand %p472, %p473
      %p475 = pneg %p474
      // Predicated region
      $region77: #{gruvae_forward.3} parent=5 // pred_check
        _
      $region78: #{gruvae_forward.3} parent=5 // pred_check_branch
        %477 = sbr.rel (%p474) target = $region80
      $region79: #{gruvae_forward.3} parent=5 // pred_region
        %s478 = ssub.s32 %s23, 1
        %s479 = smul.u32 2, %s28
        %p480 = scmp.lt.s32.totalorder %s479, 15
        %s481 = scalar_select %p480, %s479, 15
        %s482 = smul.addr %s481, 6
        %s483 = smul.addr %s482, 8
        %s484 = scalar_lea.vmem %s0, %s483
        %p485 = pneg %p49
        %p486 = pneg %p46
        %s487 = smul.u32 2, %s28
        %p488 = scmp.lt.s32.totalorder %s487, 15
        %s489 = scalar_select %p488, %s487, 15
        %s490 = smul.addr %s489, 8
        %s491 = scalar_lea.vmem %s1, %s490
        %p492 = pneg %p75
        %p493 = pneg %p72
        %p494 = pneg %p96
        %p495 = pneg %p93
        %p496 = pneg %p117
        %p497 = pneg %p114
        %p498 = pneg %p138
        %p499 = pneg %p135
        %p500 = pneg %p159
        %p501 = pneg %p156
        %p502 = pneg %p180
        %p503 = pneg %p177
        %p504 = pneg %p201
        %p505 = pneg %p198
        %p506 = pneg %p222
        %p507 = pneg %p219
        %p508 = pneg %p243
        %p509 = pneg %p240
        %p510 = pneg %p264
        %p511 = pneg %p261
        %p512 = pneg %p285
        %p513 = pneg %p282
        %p514 = pneg %p306
        %p515 = pneg %p303
        %p516 = pneg %p327
        %p517 = pneg %p324
        %p518 = pneg %p348
        %p519 = pneg %p345
        %p520 = pneg %p369
        %p521 = pneg %p366
        %p522 = pneg %p395
        %p523 = pneg %p392
        %s524 = sand.u32 %s382, 1
        %s525 = sand.u32 %s382, 1
        %s526 = smul.addr %s525, 16
        %s527 = scalar_lea.vmem [#allocation4], %s526
        %s528 = smul.u32 2, %s28
        %p529 = scmp.lt.s32.totalorder %s528, 15
        %s530 = scalar_select %p529, %s528, 15
        %s531 = smul.addr %s530, 6
        %s532 = smul.addr %s531, 8
        %s533 = scalar_lea.vmem %s0, %s532
        %s534 = smul.u32 2, %s28
        %s535 = smul.u32 2, %s28
        %p536 = scmp.lt.s32.totalorder %s535, 15
        %s537 = scalar_select %p536, %s535, 15
        %s538 = smul.addr %s537, 8
        %s539 = scalar_lea.vmem %s1, %s538
        %s540 = smul.u32 2, %s28
        %p542 = scmp.eq.s32.totalorder %s28, 0
        // Predicated region
        $region81: #{gruvae_forward.3} parent=79 // pred_check
          %p543 = pneg %p542
        $region82: #{gruvae_forward.3} parent=79 // pred_check_branch
          %545 = sbr.rel (%p543) target = $region84
        $region83: #{gruvae_forward.3} parent=79 // pred_region
          %v546 = vld [vmem:[%s4] sm:$0xff]
          %v547 = vld [vmem:[%s4 + $0x8] sm:$0xff]
          %v548 = vld [vmem:[%s4 + $0x10] sm:$0xff]
          %v549 = vld [vmem:[%s4 + $0x18] sm:$0xff]
          %v550 = vld [vmem:[%s6] sm:$0xff]
          %v551 = vld [vmem:[%s6 + $0x8] sm:$0xff]
          %v552 = vld [vmem:[%s6 + $0x10] sm:$0xff]
          %v553 = vld [vmem:[%s6 + $0x18] sm:$0xff]
          %v554 = vld [vmem:[%s6 + $0x20] sm:$0xff]
          %v555 = vld [vmem:[%s6 + $0x28] sm:$0xff]
          %v556 = vld [vmem:[%s6 + $0x30] sm:$0xff]
          %v557 = vld [vmem:[%s6 + $0x38] sm:$0xff]
          %v558 = vld [vmem:[%s6 + $0x40] sm:$0xff]
          %v559 = vld [vmem:[%s6 + $0x48] sm:$0xff]
          %v560 = vld [vmem:[%s6 + $0x50] sm:$0xff]
          %v561 = vld [vmem:[%s6 + $0x58] sm:$0xff]
          %v562 = vld [vmem:[%s6 + $0x60] sm:$0xff]
          %v563 = vld [vmem:[%s6 + $0x68] sm:$0xff]
          %v564 = vld [vmem:[%s6 + $0x70] sm:$0xff]
          %v565 = vld [vmem:[%s6 + $0x78] sm:$0xff]
          %v566 = vld [vmem:[%s6 + $0x80] sm:$0xff]
          %v567 = vld [vmem:[%s6 + $0x88] sm:$0xff]
          %v568 = vld [vmem:[%s6 + $0x90] sm:$0xff]
          %v569 = vld [vmem:[%s6 + $0x98] sm:$0xff]
          %v570 = vld [vmem:[%s6 + $0xa0] sm:$0xff]
          %v571 = vld [vmem:[%s6 + $0xa8] sm:$0xff]
          %v572 = vld [vmem:[%s6 + $0xb0] sm:$0xff]
          %v573 = vld [vmem:[%s6 + $0xb8] sm:$0xff]
          %v574 = vld [vmem:[%s6 + $0xc0] sm:$0xff]
          %v575 = vld [vmem:[%s6 + $0xc8] sm:$0xff]
          %v576 = vld [vmem:[%s6 + $0xd0] sm:$0xff]
          %v577 = vld [vmem:[%s6 + $0xd8] sm:$0xff]
          %v578 = vld [vmem:[%s6 + $0xe0] sm:$0xff]
          %v579 = vld [vmem:[%s6 + $0xe8] sm:$0xff]
          %v580 = vld [vmem:[%s6 + $0xf0] sm:$0xff]
          %v581 = vld [vmem:[%s6 + $0xf8] sm:$0xff]
          %v582 = vld [vmem:[%s7] sm:$0x1]
          %v584 = vlaneseq
          %v585 = vshrl.u32 %v584, 7
          %v586 = vsub.s32 0, %v585
          %v587 = vrot.slane %v582, %v586
          %589 = vmatprep.subr.mxu0 0.0
          %590 = vmatpush1.msra.mxu0 %v550
          %591 = vmatprep.subr.mxu0 0.0
          %592 = vmatpush1.msra.mxu0 %v551
          %593 = vmatprep.subr.mxu0 0.0
          %594 = vmatpush1.msra.mxu0 %v552
          %595 = vmatprep.subr.mxu0 0.0
          %596 = vmatpush1.msra.mxu0 %v553
          %597 = vmatprep.subr.mxu0 0.0
          %598 = vmatpush1.msra.mxu0 %v554
          %599 = vmatprep.subr.mxu0 0.0
          %600 = vmatpush1.msra.mxu0 %v555
          %601 = vmatprep.subr.mxu0 0.0
          %602 = vmatpush1.msra.mxu0 %v556
          %603 = vmatprep.subr.mxu0 0.0
          %604 = vmatpush1.msra.mxu0 %v557
          %605 = vmatprep.subr.mxu0 0.0
          %606 = vmatpush1.msra.mxu0 %v558
          %607 = vmatprep.subr.mxu0 0.0
          %608 = vmatpush1.msra.mxu0 %v559
          %609 = vmatprep.subr.mxu0 0.0
          %610 = vmatpush1.msra.mxu0 %v560
          %611 = vmatprep.subr.mxu0 0.0
          %612 = vmatpush1.msra.mxu0 %v561
          %613 = vmatprep.subr.mxu0 0.0
          %614 = vmatpush1.msra.mxu0 %v562
          %615 = vmatprep.subr.mxu0 0.0
          %616 = vmatpush1.msra.mxu0 %v563
          %617 = vmatprep.subr.mxu0 0.0
          %618 = vmatpush1.msra.mxu0 %v564
          %619 = vmatprep.subr.mxu0 0.0
          %620 = vmatpush1.msra.mxu0 %v565
          %621 = vmatprep.subr.mxu0 0.0
          %622 = vmatpush1.msra.mxu0 %v566
          %623 = vmatprep.subr.mxu0 0.0
          %624 = vmatpush1.msra.mxu0 %v567
          %625 = vmatprep.subr.mxu0 0.0
          %626 = vmatpush1.msra.mxu0 %v568
          %627 = vmatprep.subr.mxu0 0.0
          %628 = vmatpush1.msra.mxu0 %v569
          %629 = vmatprep.subr.mxu0 0.0
          %630 = vmatpush1.msra.mxu0 %v570
          %631 = vmatprep.subr.mxu0 0.0
          %632 = vmatpush1.msra.mxu0 %v571
          %633 = vmatprep.subr.mxu0 0.0
          %634 = vmatpush1.msra.mxu0 %v572
          %635 = vmatprep.subr.mxu0 0.0
          %636 = vmatpush1.msra.mxu0 %v573
          %637 = vmatprep.subr.mxu0 0.0
          %638 = vmatpush1.msra.mxu0 %v574
          %639 = vmatprep.subr.mxu0 0.0
          %640 = vmatpush1.msra.mxu0 %v575
          %641 = vmatprep.subr.mxu0 0.0
          %642 = vmatpush1.msra.mxu0 %v576
          %643 = vmatprep.subr.mxu0 0.0
          %644 = vmatpush1.msra.mxu0 %v577
          %645 = vmatprep.subr.mxu0 0.0
          %646 = vmatpush1.msra.mxu0 %v578
          %647 = vmatprep.subr.mxu0 0.0
          %648 = vmatpush1.msra.mxu0 %v579
          %649 = vmatprep.subr.mxu0 0.0
          %650 = vmatpush1.msra.mxu0 %v580
          %651 = vmatprep.subr.mxu0 0.0
          %652 = vmatpush1.msra.mxu0 %v581
          %653 = vmatprep.mubr.f32.mxu0 %v547
          %654 = vmatmul.mubr.f32.gmra.mrb[0].mxu0 %v546
          %v655 = vpop.f32.mrb[0].mxu0
          %v656 = vadd.f32 %v587, %v655
          %v657 = vpop.f32.mrb[0].mxu0
          %658 = vmatprep.mubr.f32.mxu0 %v549
          %659 = vmatmul.mubr.f32.gmra.mrb[0].mxu0 %v548
          %v660 = vpop.f32.mrb[0].mxu0
          %v661 = vadd.f32 %v587, %v660
          %v662 = vpop.f32.mrb[0].mxu0
          %663 = vdwg.mxu0
          %v664 = vld [vmem:[%s5] sm:$0xff]
          %v665 = vld [vmem:[%s5 + $0x8] sm:$0xff]
          %v666 = vmul.f32 %v656, 0.5
          %v667 = vmul.f32 %v661, 0.5
          %v668 = vmul.f32 %v666, 1.442695
          %v669 = vpow.pop %v668
          %v670 = vmul.f32 %v667, 1.442695
          %v671 = vpow.pop %v670
          %674 = vrot.lane.b32.xlu0 %v669, 64
          %v675 = vpop.permute.xlu0 %674
          %676 = vrot.lane.b32.xlu0 %v671, 64
          %v677 = vpop.permute.xlu0 %676
          %v680 = vmul.f32 %v664, %v675
          %v681 = vmul.f32 %v665, %v677
          %v682 = vadd.f32 %v656, %v680
          %v683 = vadd.f32 %v661, %v681
          %684 = vst [vmem:[%s15] sm:$0xff] %v656
          %685 = vst [vmem:[%s15 + $0x8] sm:$0xff] %v661
          %v686 = vld [vmem:[%s8] sm:$0xff]
          %v687 = vld [vmem:[%s8 + $0x8] sm:$0xff]
          %v688 = vld [vmem:[%s8 + $0x10] sm:$0xff]
          %v689 = vld [vmem:[%s8 + $0x18] sm:$0xff]
          %v690 = vld [vmem:[%s8 + $0x20] sm:$0xff]
          %v691 = vld [vmem:[%s8 + $0x28] sm:$0xff]
          %v692 = vld [vmem:[%s8 + $0x30] sm:$0xff]
          %v693 = vld [vmem:[%s8 + $0x38] sm:$0xff]
          %v694 = vld [vmem:[%s8 + $0x40] sm:$0xff]
          %v695 = vld [vmem:[%s8 + $0x48] sm:$0xff]
          %v696 = vld [vmem:[%s8 + $0x50] sm:$0xff]
          %v697 = vld [vmem:[%s8 + $0x58] sm:$0xff]
          %v698 = vld [vmem:[%s8 + $0x60] sm:$0xff]
          %v699 = vld [vmem:[%s8 + $0x68] sm:$0xff]
          %v700 = vld [vmem:[%s8 + $0x70] sm:$0xff]
          %v701 = vld [vmem:[%s8 + $0x78] sm:$0xff]
          %v702 = vld [vmem:[%s9] sm:$0x3]
          %v704 = vlaneseq
          %v705 = vshrl.u32 %v704, 7
          %v706 = vsub.s32 0, %v705
          %v707 = vrot.slane %v702, %v706
          %v708 = vlaneseq
          %v709 = vshrl.u32 %v708, 7
          %v710 = vsub.s32 1, %v709
          %v711 = vrot.slane %v702, %v710
          %vm714 = vcmask 523264
          %v716 = vsel %vm714, %v682, 0
          %v719 = vsel %vm714, %v683, 0
          %721 = vmatprep.subr.mxu0 %v687
          %722 = vmatpush1.msra.mxu0 %v686
          %723 = vmatprep.subr.mxu0 %v689
          %724 = vmatpush1.msra.mxu0 %v688
          %725 = vmatprep.subr.mxu0 %v691
          %726 = vmatpush1.msra.mxu0 %v690
          %727 = vmatprep.subr.mxu0 %v693
          %728 = vmatpush1.msra.mxu0 %v692
          %729 = vmatprep.subr.mxu0 %v695
          %730 = vmatpush1.msra.mxu0 %v694
          %731 = vmatprep.subr.mxu0 %v697
          %732 = vmatpush1.msra.mxu0 %v696
          %733 = vmatprep.subr.mxu0 %v699
          %734 = vmatpush1.msra.mxu0 %v698
          %735 = vmatprep.subr.mxu0 %v701
          %736 = vmatpush1.msra.mxu0 %v700
          %737 = vmatprep.subr.mxu0 0.0
          %738 = vmatpush1.msra.mxu0 0.0
          %739 = vmatprep.subr.mxu0 0.0
          %740 = vmatpush1.msra.mxu0 0.0
          %741 = vmatprep.subr.mxu0 0.0
          %742 = vmatpush1.msra.mxu0 0.0
          %743 = vmatprep.subr.mxu0 0.0
          %744 = vmatpush1.msra.mxu0 0.0
          %745 = vmatprep.subr.mxu0 0.0
          %746 = vmatpush1.msra.mxu0 0.0
          %747 = vmatprep.subr.mxu0 0.0
          %748 = vmatpush1.msra.mxu0 0.0
          %749 = vmatprep.subr.mxu0 0.0
          %750 = vmatpush1.msra.mxu0 0.0
          %751 = vmatprep.subr.mxu0 0.0
          %752 = vmatpush1.msra.mxu0 0.0
          %753 = vmatprep.subr.mxu0 0.0
          %754 = vmatpush1.msra.mxu0 0.0
          %755 = vmatprep.subr.mxu0 0.0
          %756 = vmatpush1.msra.mxu0 0.0
          %757 = vmatprep.subr.mxu0 0.0
          %758 = vmatpush1.msra.mxu0 0.0
          %759 = vmatprep.subr.mxu0 0.0
          %760 = vmatpush1.msra.mxu0 0.0
          %761 = vmatprep.subr.mxu0 0.0
          %762 = vmatpush1.msra.mxu0 0.0
          %763 = vmatprep.subr.mxu0 0.0
          %764 = vmatpush1.msra.mxu0 0.0
          %765 = vmatprep.subr.mxu0 0.0
          %766 = vmatpush1.msra.mxu0 0.0
          %767 = vmatprep.subr.mxu0 0.0
          %768 = vmatpush1.msra.mxu0 0.0
          %769 = vmatprep.subr.mxu0 0.0
          %770 = vmatpush1.msra.mxu0 0.0
          %771 = vmatprep.subr.mxu0 0.0
          %772 = vmatpush1.msra.mxu0 0.0
          %773 = vmatprep.subr.mxu0 0.0
          %774 = vmatpush1.msra.mxu0 0.0
          %775 = vmatprep.subr.mxu0 0.0
          %776 = vmatpush1.msra.mxu0 0.0
          %777 = vmatprep.subr.mxu0 0.0
          %778 = vmatpush1.msra.mxu0 0.0
          %779 = vmatprep.subr.mxu0 0.0
          %780 = vmatpush1.msra.mxu0 0.0
          %781 = vmatprep.subr.mxu0 0.0
          %782 = vmatpush1.msra.mxu0 0.0
          %783 = vmatprep.subr.mxu0 0.0
          %784 = vmatpush1.msra.mxu0 0.0
          %785 = vmatprep.mubr.f32.mxu0 0.0
          %786 = vmatmul.mubr.f32.gmra.mrb[0].mxu0 %v716
          %v787 = vpop.f32.mrb[0].mxu0
          %v788 = vadd.f32 %v707, %v787
          %v789 = vpop.f32.mrb[0].mxu0
          %v790 = vadd.f32 %v711, %v789
          %791 = vmatprep.mubr.f32.mxu0 0.0
          %792 = vmatmul.mubr.f32.gmra.mrb[0].mxu0 %v719
          %v793 = vpop.f32.mrb[0].mxu0
          %v794 = vadd.f32 %v707, %v793
          %v795 = vpop.f32.mrb[0].mxu0
          %v796 = vadd.f32 %v711, %v795
          %797 = vdwg.mxu0
          %798 = vst [vmem:[#allocation2] sm:$0xff] %v788
          %799 = vst [vmem:[#allocation2 + $0x8] sm:$0xff] %v790
          %800 = vst [vmem:[#allocation2 + $0x10] sm:$0xff] %v794
          %801 = vst [vmem:[#allocation2 + $0x18] sm:$0xff] %v796
          %v802 = vld [vmem:[%s10] sm:$0xff]
          %v803 = vld [vmem:[%s10 + $0x8] sm:$0xff]
          %v804 = vld [vmem:[%s10 + $0x10] sm:$0xff]
          %v805 = vld [vmem:[%s10 + $0x18] sm:$0xff]
          %v806 = vld [vmem:[%s10 + $0x20] sm:$0xff]
          %v807 = vld [vmem:[%s10 + $0x28] sm:$0xff]
          %v808 = vld [vmem:[%s10 + $0x30] sm:$0xff]
          %v809 = vld [vmem:[%s10 + $0x38] sm:$0xff]
          %v810 = vld [vmem:[%s10 + $0x40] sm:$0xff]
          %v811 = vld [vmem:[%s10 + $0x48] sm:$0xff]
          %v812 = vld [vmem:[%s10 + $0x50] sm:$0xff]
          %v813 = vld [vmem:[%s10 + $0x58] sm:$0xff]
          %v814 = vld [vmem:[%s10 + $0x60] sm:$0xff]
          %v815 = vld [vmem:[%s10 + $0x68] sm:$0xff]
          %v816 = vld [vmem:[%s10 + $0x70] sm:$0xff]
          %v817 = vld [vmem:[%s10 + $0x78] sm:$0xff]
          %v818 = vld [vmem:[%s10 + $0x80] sm:$0xff]
          %v819 = vld [vmem:[%s10 + $0x88] sm:$0xff]
          %v820 = vld [vmem:[%s10 + $0x90] sm:$0xff]
          %v821 = vld [vmem:[%s10 + $0x98] sm:$0xff]
          %v822 = vld [vmem:[%s10 + $0xa0] sm:$0xff]
          %v823 = vld [vmem:[%s10 + $0xa8] sm:$0xff]
          %v824 = vld [vmem:[%s10 + $0xb0] sm:$0xff]
          %v825 = vld [vmem:[%s10 + $0xb8] sm:$0xff]
          %v826 = vld [vmem:[%s10 + $0xc0] sm:$0xff]
          %v827 = vld [vmem:[%s10 + $0xc8] sm:$0xff]
          %v828 = vld [vmem:[%s10 + $0xd0] sm:$0xff]
          %v829 = vld [vmem:[%s10 + $0xd8] sm:$0xff]
          %v830 = vld [vmem:[%s10 + $0xe0] sm:$0xff]
          %v831 = vld [vmem:[%s10 + $0xe8] sm:$0xff]
          %v832 = vld [vmem:[%s10 + $0xf0] sm:$0xff]
          %v833 = vld [vmem:[%s10 + $0xf8] sm:$0xff]
          %v834 = vld [vmem:[%s10 + $0x100] sm:$0xff]
          %v835 = vld [vmem:[%s10 + $0x108] sm:$0xff]
          %v836 = vld [vmem:[%s10 + $0x110] sm:$0xff]
          %v837 = vld [vmem:[%s10 + $0x118] sm:$0xff]
          %v838 = vld [vmem:[%s10 + $0x120] sm:$0xff]
          %v839 = vld [vmem:[%s10 + $0x128] sm:$0xff]
          %v840 = vld [vmem:[%s10 + $0x130] sm:$0xff]
          %v841 = vld [vmem:[%s10 + $0x138] sm:$0xff]
          %v842 = vld [vmem:[%s10 + $0x140] sm:$0xff]
          %v843 = vld [vmem:[%s10 + $0x148] sm:$0xff]
          %v844 = vld [vmem:[%s10 + $0x150] sm:$0xff]
          %v845 = vld [vmem:[%s10 + $0x158] sm:$0xff]
          %v846 = vld [vmem:[%s10 + $0x160] sm:$0xff]
          %v847 = vld [vmem:[%s10 + $0x168] sm:$0xff]
          %v848 = vld [vmem:[%s10 + $0x170] sm:$0xff]
          %v849 = vld [vmem:[%s10 + $0x178] sm:$0xff]
          %850 = vmatprep.subr.mxu0 %v803
          %851 = vmatpush1.msra.mxu0 %v802
          %852 = vmatprep.subr.mxu0 %v809
          %853 = vmatpush1.msra.mxu0 %v808
          %854 = vmatprep.subr.mxu0 %v815
          %855 = vmatpush1.msra.mxu0 %v814
          %856 = vmatprep.subr.mxu0 %v821
          %857 = vmatpush1.msra.mxu0 %v820
          %858 = vmatprep.subr.mxu0 %v827
          %859 = vmatpush1.msra.mxu0 %v826
          %860 = vmatprep.subr.mxu0 %v833
          %861 = vmatpush1.msra.mxu0 %v832
          %862 = vmatprep.subr.mxu0 %v839
          %863 = vmatpush1.msra.mxu0 %v838
          %864 = vmatprep.subr.mxu0 %v845
          %865 = vmatpush1.msra.mxu0 %v844
          %866 = vmatprep.subr.mxu0 0.0
          %867 = vmatpush1.msra.mxu0 0.0
          %868 = vmatprep.subr.mxu0 0.0
          %869 = vmatpush1.msra.mxu0 0.0
          %870 = vmatprep.subr.mxu0 0.0
          %871 = vmatpush1.msra.mxu0 0.0
          %872 = vmatprep.subr.mxu0 0.0
          %873 = vmatpush1.msra.mxu0 0.0
          %874 = vmatprep.subr.mxu0 0.0
          %875 = vmatpush1.msra.mxu0 0.0
          %876 = vmatprep.subr.mxu0 0.0
          %877 = vmatpush1.msra.mxu0 0.0
          %878 = vmatprep.subr.mxu0 0.0
          %879 = vmatpush1.msra.mxu0 0.0
          %880 = vmatprep.subr.mxu0 0.0
          %881 = vmatpush1.msra.mxu0 0.0
          %882 = vmatprep.subr.mxu0 0.0
          %883 = vmatpush1.msra.mxu0 0.0
          %884 = vmatprep.subr.mxu0 0.0
          %885 = vmatpush1.msra.mxu0 0.0
          %886 = vmatprep.subr.mxu0 0.0
          %887 = vmatpush1.msra.mxu0 0.0
          %888 = vmatprep.subr.mxu0 0.0
          %889 = vmatpush1.msra.mxu0 0.0
          %890 = vmatprep.subr.mxu0 0.0
          %891 = vmatpush1.msra.mxu0 0.0
          %892 = vmatprep.subr.mxu0 0.0
          %893 = vmatpush1.msra.mxu0 0.0
          %894 = vmatprep.subr.mxu0 0.0
          %895 = vmatpush1.msra.mxu0 0.0
          %896 = vmatprep.subr.mxu0 0.0
          %897 = vmatpush1.msra.mxu0 0.0
          %898 = vmatprep.subr.mxu0 0.0
          %899 = vmatpush1.msra.mxu0 0.0
          %900 = vmatprep.subr.mxu0 0.0
          %901 = vmatpush1.msra.mxu0 0.0
          %902 = vmatprep.subr.mxu0 0.0
          %903 = vmatpush1.msra.mxu0 0.0
          %904 = vmatprep.subr.mxu0 0.0
          %905 = vmatpush1.msra.mxu0 0.0
          %906 = vmatprep.subr.mxu0 0.0
          %907 = vmatpush1.msra.mxu0 0.0
          %908 = vmatprep.subr.mxu0 0.0
          %909 = vmatpush1.msra.mxu0 0.0
          %910 = vmatprep.subr.mxu0 0.0
          %911 = vmatpush1.msra.mxu0 0.0
          %912 = vmatprep.subr.mxu0 0.0
          %913 = vmatpush1.msra.mxu0 0.0
          %914 = vmatprep.mubr.f32.mxu0 0.0
          %915 = vmatmul.mubr.f32.gmra.mrb[0].mxu0 %v716
          %v916 = vpop.f32.mrb[0].mxu0
          %v917 = vadd.f32 0.0, %v916
          %v918 = vpop.f32.mrb[0].mxu0
          %v919 = vadd.f32 0.0, %v918
          %920 = vmatprep.mubr.f32.mxu0 0.0
          %921 = vmatmul.mubr.f32.gmra.mrb[0].mxu0 %v719
          %v922 = vpop.f32.mrb[0].mxu0
          %v923 = vadd.f32 0.0, %v922
          %v924 = vpop.f32.mrb[0].mxu0
          %v925 = vadd.f32 0.0, %v924
          %926 = vdwg.mxu0
          %927 = vmatprep.subr.mxu0 %v805
          %928 = vmatpush1.msra.mxu0 %v804
          %929 = vmatprep.subr.mxu0 %v811
          %930 = vmatpush1.msra.mxu0 %v810
          %931 = vmatprep.subr.mxu0 %v817
          %932 = vmatpush1.msra.mxu0 %v816
          %933 = vmatprep.subr.mxu0 %v823
          %934 = vmatpush1.msra.mxu0 %v822
          %935 = vmatprep.subr.mxu0 %v829
          %936 = vmatpush1.msra.mxu0 %v828
          %937 = vmatprep.subr.mxu0 %v835
          %938 = vmatpush1.msra.mxu0 %v834
          %939 = vmatprep.subr.mxu0 %v841
          %940 = vmatpush1.msra.mxu0 %v840
          %941 = vmatprep.subr.mxu0 %v847
          %942 = vmatpush1.msra.mxu0 %v846
          %943 = vmatprep.subr.mxu0 0.0
          %944 = vmatpush1.msra.mxu0 0.0
          %945 = vmatprep.subr.mxu0 0.0
          %946 = vmatpush1.msra.mxu0 0.0
          %947 = vmatprep.subr.mxu0 0.0
          %948 = vmatpush1.msra.mxu0 0.0
          %949 = vmatprep.subr.mxu0 0.0
          %950 = vmatpush1.msra.mxu0 0.0
          %951 = vmatprep.subr.mxu0 0.0
          %952 = vmatpush1.msra.mxu0 0.0
          %953 = vmatprep.subr.mxu0 0.0
          %954 = vmatpush1.msra.mxu0 0.0
          %955 = vmatprep.subr.mxu0 0.0
          %956 = vmatpush1.msra.mxu0 0.0
          %957 = vmatprep.subr.mxu0 0.0
          %958 = vmatpush1.msra.mxu0 0.0
          %959 = vmatprep.subr.mxu0 0.0
          %960 = vmatpush1.msra.mxu0 0.0
          %961 = vmatprep.subr.mxu0 0.0
          %962 = vmatpush1.msra.mxu0 0.0
          %963 = vmatprep.subr.mxu0 0.0
          %964 = vmatpush1.msra.mxu0 0.0
          %965 = vmatprep.subr.mxu0 0.0
          %966 = vmatpush1.msra.mxu0 0.0
          %967 = vmatprep.subr.mxu0 0.0
          %968 = vmatpush1.msra.mxu0 0.0
          %969 = vmatprep.subr.mxu0 0.0
          %970 = vmatpush1.msra.mxu0 0.0
          %971 = vmatprep.subr.mxu0 0.0
          %972 = vmatpush1.msra.mxu0 0.0
          %973 = vmatprep.subr.mxu0 0.0
          %974 = vmatpush1.msra.mxu0 0.0
          %975 = vmatprep.subr.mxu0 0.0
          %976 = vmatpush1.msra.mxu0 0.0
          %977 = vmatprep.subr.mxu0 0.0
          %978 = vmatpush1.msra.mxu0 0.0
          %979 = vmatprep.subr.mxu0 0.0
          %980 = vmatpush1.msra.mxu0 0.0
          %981 = vmatprep.subr.mxu0 0.0
          %982 = vmatpush1.msra.mxu0 0.0
          %983 = vmatprep.subr.mxu0 0.0
          %984 = vmatpush1.msra.mxu0 0.0
          %985 = vmatprep.subr.mxu0 0.0
          %986 = vmatpush1.msra.mxu0 0.0
          %987 = vmatprep.subr.mxu0 0.0
          %988 = vmatpush1.msra.mxu0 0.0
          %989 = vmatprep.subr.mxu0 0.0
          %990 = vmatpush1.msra.mxu0 0.0
          %991 = vmatprep.mubr.f32.mxu0 0.0
          %992 = vmatmul.mubr.f32.gmra.mrb[0].mxu0 %v716
          %v993 = vpop.f32.mrb[0].mxu0
          %v994 = vadd.f32 0.0, %v993
          %v995 = vpop.f32.mrb[0].mxu0
          %v996 = vadd.f32 0.0, %v995
          %997 = vmatprep.mubr.f32.mxu0 0.0
          %998 = vmatmul.mubr.f32.gmra.mrb[0].mxu0 %v719
          %v999 = vpop.f32.mrb[0].mxu0
          %v1000 = vadd.f32 0.0, %v999
          %v1001 = vpop.f32.mrb[0].mxu0
          %v1002 = vadd.f32 0.0, %v1001
          %1003 = vdwg.mxu0
          %1004 = vmatprep.subr.mxu0 %v807
          %1005 = vmatpush1.msra.mxu0 %v806
          %1006 = vmatprep.subr.mxu0 %v813
          %1007 = vmatpush1.msra.mxu0 %v812
          %1008 = vmatprep.subr.mxu0 %v819
          %1009 = vmatpush1.msra.mxu0 %v818
          %1010 = vmatprep.subr.mxu0 %v825
          %1011 = vmatpush1.msra.mxu0 %v824
          %1012 = vmatprep.subr.mxu0 %v831
          %1013 = vmatpush1.msra.mxu0 %v830
          %1014 = vmatprep.subr.mxu0 %v837
          %1015 = vmatpush1.msra.mxu0 %v836
          %1016 = vmatprep.subr.mxu0 %v843
          %1017 = vmatpush1.msra.mxu0 %v842
          %1018 = vmatprep.subr.mxu0 %v849
          %1019 = vmatpush1.msra.mxu0 %v848
          %1020 = vmatprep.subr.mxu0 0.0
          %1021 = vmatpush1.msra.mxu0 0.0
          %1022 = vmatprep.subr.mxu0 0.0
          %1023 = vmatpush1.msra.mxu0 0.0
          %1024 = vmatprep.subr.mxu0 0.0
          %1025 = vmatpush1.msra.mxu0 0.0
          %1026 = vmatprep.subr.mxu0 0.0
          %1027 = vmatpush1.msra.mxu0 0.0
          %1028 = vmatprep.subr.mxu0 0.0
          %1029 = vmatpush1.msra.mxu0 0.0
          %1030 = vmatprep.subr.mxu0 0.0
          %1031 = vmatpush1.msra.mxu0 0.0
          %1032 = vmatprep.subr.mxu0 0.0
          %1033 = vmatpush1.msra.mxu0 0.0
          %1034 = vmatprep.subr.mxu0 0.0
          %1035 = vmatpush1.msra.mxu0 0.0
          %1036 = vmatprep.subr.mxu0 0.0
          %1037 = vmatpush1.msra.mxu0 0.0
          %1038 = vmatprep.subr.mxu0 0.0
          %1039 = vmatpush1.msra.mxu0 0.0
          %1040 = vmatprep.subr.mxu0 0.0
          %1041 = vmatpush1.msra.mxu0 0.0
          %1042 = vmatprep.subr.mxu0 0.0
          %1043 = vmatpush1.msra.mxu0 0.0
          %1044 = vmatprep.subr.mxu0 0.0
          %1045 = vmatpush1.msra.mxu0 0.0
          %1046 = vmatprep.subr.mxu0 0.0
          %1047 = vmatpush1.msra.mxu0 0.0
          %1048 = vmatprep.subr.mxu0 0.0
          %1049 = vmatpush1.msra.mxu0 0.0
          %1050 = vmatprep.subr.mxu0 0.0
          %1051 = vmatpush1.msra.mxu0 0.0
          %1052 = vmatprep.subr.mxu0 0.0
          %1053 = vmatpush1.msra.mxu0 0.0
          %1054 = vmatprep.subr.mxu0 0.0
          %1055 = vmatpush1.msra.mxu0 0.0
          %1056 = vmatprep.subr.mxu0 0.0
          %1057 = vmatpush1.msra.mxu0 0.0
          %1058 = vmatprep.subr.mxu0 0.0
          %1059 = vmatpush1.msra.mxu0 0.0
          %1060 = vmatprep.subr.mxu0 0.0
          %1061 = vmatpush1.msra.mxu0 0.0
          %1062 = vmatprep.subr.mxu0 0.0
          %1063 = vmatpush1.msra.mxu0 0.0
          %1064 = vmatprep.subr.mxu0 0.0
          %1065 = vmatpush1.msra.mxu0 0.0
          %1066 = vmatprep.subr.mxu0 0.0
          %1067 = vmatpush1.msra.mxu0 0.0
          %1068 = vmatprep.mubr.f32.mxu0 0.0
          %1069 = vmatmul.mubr.f32.gmra.mrb[0].mxu0 %v716
          %v1070 = vpop.f32.mrb[0].mxu0
          %v1071 = vadd.f32 0.0, %v1070
          %v1072 = vpop.f32.mrb[0].mxu0
          %v1073 = vadd.f32 0.0, %v1072
          %1074 = vmatprep.mubr.f32.mxu0 0.0
          %1075 = vmatmul.mubr.f32.gmra.mrb[0].mxu0 %v719
          %v1076 = vpop.f32.mrb[0].mxu0
          %v1077 = vadd.f32 0.0, %v1076
          %v1078 = vpop.f32.mrb[0].mxu0
          %v1079 = vadd.f32 0.0, %v1078
          %1080 = vdwg.mxu0
          %1081 = vst [vmem:[#allocation3] sm:$0xff] %v917
          %1082 = vst [vmem:[#allocation3 + $0x8] sm:$0xff] %v919
          %1083 = vst [vmem:[#allocation3 + $0x10] sm:$0xff] %v994
          %1084 = vst [vmem:[#allocation3 + $0x18] sm:$0xff] %v996
          %1085 = vst [vmem:[#allocation3 + $0x20] sm:$0xff] %v1071
          %1086 = vst [vmem:[#allocation3 + $0x28] sm:$0xff] %v1073
          %1087 = vst [vmem:[#allocation3 + $0x30] sm:$0xff] %v923
          %1088 = vst [vmem:[#allocation3 + $0x38] sm:$0xff] %v925
          %1089 = vst [vmem:[#allocation3 + $0x40] sm:$0xff] %v1000
          %1090 = vst [vmem:[#allocation3 + $0x48] sm:$0xff] %v1002
          %1091 = vst [vmem:[#allocation3 + $0x50] sm:$0xff] %v1077
          %1092 = vst [vmem:[#allocation3 + $0x58] sm:$0xff] %v1079
        $region84: #{gruvae_forward.3} parent=79 // pred_fallthru
          _
        %v1093 = vld [vmem:[#allocation2] sm:$0xff]
        %v1094 = vld [vmem:[#allocation2 + $0x8] sm:$0xff]
        %v1095 = vld [vmem:[#allocation2 + $0x10] sm:$0xff]
        %v1096 = vld [vmem:[#allocation2 + $0x18] sm:$0xff]
        %v1097 = vld [vmem:[%s533] sm:$0xff]
        %v1098 = vld [vmem:[%s533 + $0x8] sm:$0xff]
        %v1099 = vld [vmem:[%s533 + $0x10] sm:$0xff]
        %v1100 = vld [vmem:[%s533 + $0x18] sm:$0xff]
        %v1101 = vld [vmem:[%s533 + $0x20] sm:$0xff]
        %v1102 = vld [vmem:[%s533 + $0x28] sm:$0xff]
        %v1103 = vld [vmem:[%s533 + $0x30] sm:$0xff]
        %v1104 = vld [vmem:[%s533 + $0x38] sm:$0xff]
        %v1105 = vld [vmem:[%s533 + $0x40] sm:$0xff]
        %v1106 = vld [vmem:[%s533 + $0x48] sm:$0xff]
        %v1107 = vld [vmem:[%s533 + $0x50] sm:$0xff]
        %v1108 = vld [vmem:[%s533 + $0x58] sm:$0xff]
        %v1109 = vld [vmem:[%s3] sm:$0x3f]
        %v1111 = vlaneseq
        %v1112 = vshrl.u32 %v1111, 7
        %v1113 = vsub.s32 0, %v1112
        %v1114 = vrot.slane %v1109, %v1113
        %v1115 = vlaneseq
        %v1116 = vshrl.u32 %v1115, 7
        %v1117 = vsub.s32 1, %v1116
        %v1118 = vrot.slane %v1109, %v1117
        %v1119 = vlaneseq
        %v1120 = vshrl.u32 %v1119, 7
        %v1121 = vsub.s32 2, %v1120
        %v1122 = vrot.slane %v1109, %v1121
        %v1123 = vlaneseq
        %v1124 = vshrl.u32 %v1123, 7
        %v1125 = vsub.s32 3, %v1124
        %v1126 = vrot.slane %v1109, %v1125
        %v1127 = vlaneseq
        %v1128 = vshrl.u32 %v1127, 7
        %v1129 = vsub.s32 4, %v1128
        %v1130 = vrot.slane %v1109, %v1129
        %v1131 = vlaneseq
        %v1132 = vshrl.u32 %v1131, 7
        %v1133 = vsub.s32 5, %v1132
        %v1134 = vrot.slane %v1109, %v1133
        %v1141 = vadd.f32 %v1097, %v1114
        %v1142 = vadd.f32 %v1098, %v1118
        %v1143 = vadd.f32 %v1099, %v1122
        %v1144 = vadd.f32 %v1100, %v1126
        %v1145 = vadd.f32 %v1101, %v1130
        %v1146 = vadd.f32 %v1102, %v1134
        %v1147 = vadd.f32 %v1103, %v1114
        %v1148 = vadd.f32 %v1104, %v1118
        %v1149 = vadd.f32 %v1105, %v1122
        %v1150 = vadd.f32 %v1106, %v1126
        %v1151 = vadd.f32 %v1107, %v1130
        %v1152 = vadd.f32 %v1108, %v1134
        %v1153 = vld [vmem:[#allocation3] sm:$0xff]
        %v1154 = vld [vmem:[#allocation3 + $0x8] sm:$0xff]
        %v1155 = vld [vmem:[#allocation3 + $0x10] sm:$0xff]
        %v1156 = vld [vmem:[#allocation3 + $0x18] sm:$0xff]
        %v1157 = vld [vmem:[#allocation3 + $0x20] sm:$0xff]
        %v1158 = vld [vmem:[#allocation3 + $0x28] sm:$0xff]
        %v1159 = vld [vmem:[#allocation3 + $0x30] sm:$0xff]
        %v1160 = vld [vmem:[#allocation3 + $0x38] sm:$0xff]
        %v1161 = vld [vmem:[#allocation3 + $0x40] sm:$0xff]
        %v1162 = vld [vmem:[#allocation3 + $0x48] sm:$0xff]
        %v1163 = vld [vmem:[#allocation3 + $0x50] sm:$0xff]
        %v1164 = vld [vmem:[#allocation3 + $0x58] sm:$0xff]
        %v1165 = vadd.f32 %v1141, %v1153
        %v1166 = vadd.f32 %v1142, %v1154
        %v1167 = vadd.f32 %v1143, %v1155
        %v1168 = vadd.f32 %v1144, %v1156
        %v1169 = vadd.f32 %v1145, %v1157
        %v1170 = vadd.f32 %v1146, %v1158
        %v1171 = vadd.f32 %v1147, %v1159
        %v1172 = vadd.f32 %v1148, %v1160
        %v1173 = vadd.f32 %v1149, %v1161
        %v1174 = vadd.f32 %v1150, %v1162
        %v1175 = vadd.f32 %v1151, %v1163
        %v1176 = vadd.f32 %v1152, %v1164
        %v1177 = vld [vmem:[%s539] sm:$0xff]
        %v1178 = vld [vmem:[%s539 + $0x8] sm:$0xff]
        %v1179 = vld [vmem:[%s2] sm:$0xff]
        %v1180 = vld [vmem:[%s2 + $0x8] sm:$0xff]
        %v1181 = vld [vmem:[%s2 + $0x10] sm:$0xff]
        %v1182 = vld [vmem:[%s2 + $0x18] sm:$0xff]
        %v1183 = vld [vmem:[%s2 + $0x20] sm:$0xff]
        %v1184 = vld [vmem:[%s2 + $0x28] sm:$0xff]
        %vm1185 = vcmask 64512
        %v1187 = vsel %vm1185, %v1177, 0
        %v1190 = vsel %vm1185, %v1178, 0
        %1192 = vmatprep.subr.mxu0 %v1180
        %1193 = vmatpush1.msra.mxu0 %v1179
        %1194 = vmatprep.subr.mxu0 0.0
        %1195 = vmatpush1.msra.mxu0 0.0
        %1196 = vmatprep.subr.mxu0 0.0
        %1197 = vmatpush1.msra.mxu0 0.0
        %1198 = vmatprep.subr.mxu0 0.0
        %1199 = vmatpush1.msra.mxu0 0.0
        %1200 = vmatprep.subr.mxu0 0.0
        %1201 = vmatpush1.msra.mxu0 0.0
        %1202 = vmatprep.subr.mxu0 0.0
        %1203 = vmatpush1.msra.mxu0 0.0
        %1204 = vmatprep.subr.mxu0 0.0
        %1205 = vmatpush1.msra.mxu0 0.0
        %1206 = vmatprep.subr.mxu0 0.0
        %1207 = vmatpush1.msra.mxu0 0.0
        %1208 = vmatprep.subr.mxu0 0.0
        %1209 = vmatpush1.msra.mxu0 0.0
        %1210 = vmatprep.subr.mxu0 0.0
        %1211 = vmatpush1.msra.mxu0 0.0
        %1212 = vmatprep.subr.mxu0 0.0
        %1213 = vmatpush1.msra.mxu0 0.0
        %1214 = vmatprep.subr.mxu0 0.0
        %1215 = vmatpush1.msra.mxu0 0.0
        %1216 = vmatprep.subr.mxu0 0.0
        %1217 = vmatpush1.msra.mxu0 0.0
        %1218 = vmatprep.subr.mxu0 0.0
        %1219 = vmatpush1.msra.mxu0 0.0
        %1220 = vmatprep.subr.mxu0 0.0
        %1221 = vmatpush1.msra.mxu0 0.0
        %1222 = vmatprep.subr.mxu0 0.0
        %1223 = vmatpush1.msra.mxu0 0.0
        %1224 = vmatprep.subr.mxu0 0.0
        %1225 = vmatpush1.msra.mxu0 0.0
        %1226 = vmatprep.subr.mxu0 0.0
        %1227 = vmatpush1.msra.mxu0 0.0
        %1228 = vmatprep.subr.mxu0 0.0
        %1229 = vmatpush1.msra.mxu0 0.0
        %1230 = vmatprep.subr.mxu0 0.0
        %1231 = vmatpush1.msra.mxu0 0.0
        %1232 = vmatprep.subr.mxu0 0.0
        %1233 = vmatpush1.msra.mxu0 0.0
        %1234 = vmatprep.subr.mxu0 0.0
        %1235 = vmatpush1.msra.mxu0 0.0
        %1236 = vmatprep.subr.mxu0 0.0
        %1237 = vmatpush1.msra.mxu0 0.0
        %1238 = vmatprep.subr.mxu0 0.0
        %1239 = vmatpush1.msra.mxu0 0.0
        %1240 = vmatprep.subr.mxu0 0.0
        %1241 = vmatpush1.msra.mxu0 0.0
        %1242 = vmatprep.subr.mxu0 0.0
        %1243 = vmatpush1.msra.mxu0 0.0
        %1244 = vmatprep.subr.mxu0 0.0
        %1245 = vmatpush1.msra.mxu0 0.0
        %1246 = vmatprep.subr.mxu0 0.0
        %1247 = vmatpush1.msra.mxu0 0.0
        %1248 = vmatprep.subr.mxu0 0.0
        %1249 = vmatpush1.msra.mxu0 0.0
        %1250 = vmatprep.subr.mxu0 0.0
        %1251 = vmatpush1.msra.mxu0 0.0
        %1252 = vmatprep.subr.mxu0 0.0
        %1253 = vmatpush1.msra.mxu0 0.0
        %1254 = vmatprep.subr.mxu0 0.0
        %1255 = vmatpush1.msra.mxu0 0.0
        %1256 = vmatprep.mubr.f32.mxu0 0.0
        %1257 = vmatmul.mubr.f32.gmra.mrb[0].mxu0 %v1187
        %v1258 = vpop.f32.mrb[0].mxu0
        %v1259 = vadd.f32 0.0, %v1258
        %v1260 = vpop.f32.mrb[0].mxu0
        %v1261 = vadd.f32 0.0, %v1260
        %1262 = vmatprep.mubr.f32.mxu0 0.0
        %1263 = vmatmul.mubr.f32.gmra.mrb[0].mxu0 %v1190
        %v1264 = vpop.f32.mrb[0].mxu0
        %v1265 = vadd.f32 0.0, %v1264
        %v1266 = vpop.f32.mrb[0].mxu0
        %v1267 = vadd.f32 0.0, %v1266
        %1268 = vdwg.mxu0
        %1269 = vmatprep.subr.mxu0 %v1182
        %1270 = vmatpush1.msra.mxu0 %v1181
        %1271 = vmatprep.subr.mxu0 0.0
        %1272 = vmatpush1.msra.mxu0 0.0
        %1273 = vmatprep.subr.mxu0 0.0
        %1274 = vmatpush1.msra.mxu0 0.0
        %1275 = vmatprep.subr.mxu0 0.0
        %1276 = vmatpush1.msra.mxu0 0.0
        %1277 = vmatprep.subr.mxu0 0.0
        %1278 = vmatpush1.msra.mxu0 0.0
        %1279 = vmatprep.subr.mxu0 0.0
        %1280 = vmatpush1.msra.mxu0 0.0
        %1281 = vmatprep.subr.mxu0 0.0
        %1282 = vmatpush1.msra.mxu0 0.0
        %1283 = vmatprep.subr.mxu0 0.0
        %1284 = vmatpush1.msra.mxu0 0.0
        %1285 = vmatprep.subr.mxu0 0.0
        %1286 = vmatpush1.msra.mxu0 0.0
        %1287 = vmatprep.subr.mxu0 0.0
        %1288 = vmatpush1.msra.mxu0 0.0
        %1289 = vmatprep.subr.mxu0 0.0
        %1290 = vmatpush1.msra.mxu0 0.0
        %1291 = vmatprep.subr.mxu0 0.0
        %1292 = vmatpush1.msra.mxu0 0.0
        %1293 = vmatprep.subr.mxu0 0.0
        %1294 = vmatpush1.msra.mxu0 0.0
        %1295 = vmatprep.subr.mxu0 0.0
        %1296 = vmatpush1.msra.mxu0 0.0
        %1297 = vmatprep.subr.mxu0 0.0
        %1298 = vmatpush1.msra.mxu0 0.0
        %1299 = vmatprep.subr.mxu0 0.0
        %1300 = vmatpush1.msra.mxu0 0.0
        %1301 = vmatprep.subr.mxu0 0.0
        %1302 = vmatpush1.msra.mxu0 0.0
        %1303 = vmatprep.subr.mxu0 0.0
        %1304 = vmatpush1.msra.mxu0 0.0
        %1305 = vmatprep.subr.mxu0 0.0
        %1306 = vmatpush1.msra.mxu0 0.0
        %1307 = vmatprep.subr.mxu0 0.0
        %1308 = vmatpush1.msra.mxu0 0.0
        %1309 = vmatprep.subr.mxu0 0.0
        %1310 = vmatpush1.msra.mxu0 0.0
        %1311 = vmatprep.subr.mxu0 0.0
        %1312 = vmatpush1.msra.mxu0 0.0
        %1313 = vmatprep.subr.mxu0 0.0
        %1314 = vmatpush1.msra.mxu0 0.0
        %1315 = vmatprep.subr.mxu0 0.0
        %1316 = vmatpush1.msra.mxu0 0.0
        %1317 = vmatprep.subr.mxu0 0.0
        %1318 = vmatpush1.msra.mxu0 0.0
        %1319 = vmatprep.subr.mxu0 0.0
        %1320 = vmatpush1.msra.mxu0 0.0
        %1321 = vmatprep.subr.mxu0 0.0
        %1322 = vmatpush1.msra.mxu0 0.0
        %1323 = vmatprep.subr.mxu0 0.0
        %1324 = vmatpush1.msra.mxu0 0.0
        %1325 = vmatprep.subr.mxu0 0.0
        %1326 = vmatpush1.msra.mxu0 0.0
        %1327 = vmatprep.subr.mxu0 0.0
        %1328 = vmatpush1.msra.mxu0 0.0
        %1329 = vmatprep.subr.mxu0 0.0
        %1330 = vmatpush1.msra.mxu0 0.0
        %1331 = vmatprep.subr.mxu0 0.0
        %1332 = vmatpush1.msra.mxu0 0.0
        %1333 = vmatprep.mubr.f32.mxu0 0.0
        %1334 = vmatmul.mubr.f32.gmra.mrb[0].mxu0 %v1187
        %v1335 = vpop.f32.mrb[0].mxu0
        %v1336 = vadd.f32 0.0, %v1335
        %v1337 = vpop.f32.mrb[0].mxu0
        %v1338 = vadd.f32 0.0, %v1337
        %1339 = vmatprep.mubr.f32.mxu0 0.0
        %1340 = vmatmul.mubr.f32.gmra.mrb[0].mxu0 %v1190
        %v1341 = vpop.f32.mrb[0].mxu0
        %v1342 = vadd.f32 0.0, %v1341
        %v1343 = vpop.f32.mrb[0].mxu0
        %v1344 = vadd.f32 0.0, %v1343
        %1345 = vdwg.mxu0
        %1346 = vmatprep.subr.mxu0 %v1184
        %1347 = vmatpush1.msra.mxu0 %v1183
        %1348 = vmatprep.subr.mxu0 0.0
        %1349 = vmatpush1.msra.mxu0 0.0
        %1350 = vmatprep.subr.mxu0 0.0
        %1351 = vmatpush1.msra.mxu0 0.0
        %1352 = vmatprep.subr.mxu0 0.0
        %1353 = vmatpush1.msra.mxu0 0.0
        %1354 = vmatprep.subr.mxu0 0.0
        %1355 = vmatpush1.msra.mxu0 0.0
        %1356 = vmatprep.subr.mxu0 0.0
        %1357 = vmatpush1.msra.mxu0 0.0
        %1358 = vmatprep.subr.mxu0 0.0
        %1359 = vmatpush1.msra.mxu0 0.0
        %1360 = vmatprep.subr.mxu0 0.0
        %1361 = vmatpush1.msra.mxu0 0.0
        %1362 = vmatprep.subr.mxu0 0.0
        %1363 = vmatpush1.msra.mxu0 0.0
        %1364 = vmatprep.subr.mxu0 0.0
        %1365 = vmatpush1.msra.mxu0 0.0
        %1366 = vmatprep.subr.mxu0 0.0
        %1367 = vmatpush1.msra.mxu0 0.0
        %1368 = vmatprep.subr.mxu0 0.0
        %1369 = vmatpush1.msra.mxu0 0.0
        %1370 = vmatprep.subr.mxu0 0.0
        %1371 = vmatpush1.msra.mxu0 0.0
        %1372 = vmatprep.subr.mxu0 0.0
        %1373 = vmatpush1.msra.mxu0 0.0
        %1374 = vmatprep.subr.mxu0 0.0
        %1375 = vmatpush1.msra.mxu0 0.0
        %1376 = vmatprep.subr.mxu0 0.0
        %1377 = vmatpush1.msra.mxu0 0.0
        %1378 = vmatprep.subr.mxu0 0.0
        %1379 = vmatpush1.msra.mxu0 0.0
        %1380 = vmatprep.subr.mxu0 0.0
        %1381 = vmatpush1.msra.mxu0 0.0
        %1382 = vmatprep.subr.mxu0 0.0
        %1383 = vmatpush1.msra.mxu0 0.0
        %1384 = vmatprep.subr.mxu0 0.0
        %1385 = vmatpush1.msra.mxu0 0.0
        %1386 = vmatprep.subr.mxu0 0.0
        %1387 = vmatpush1.msra.mxu0 0.0
        %1388 = vmatprep.subr.mxu0 0.0
        %1389 = vmatpush1.msra.mxu0 0.0
        %1390 = vmatprep.subr.mxu0 0.0
        %1391 = vmatpush1.msra.mxu0 0.0
        %1392 = vmatprep.subr.mxu0 0.0
        %1393 = vmatpush1.msra.mxu0 0.0
        %1394 = vmatprep.subr.mxu0 0.0
        %1395 = vmatpush1.msra.mxu0 0.0
        %1396 = vmatprep.subr.mxu0 0.0
        %1397 = vmatpush1.msra.mxu0 0.0
        %1398 = vmatprep.subr.mxu0 0.0
        %1399 = vmatpush1.msra.mxu0 0.0
        %1400 = vmatprep.subr.mxu0 0.0
        %1401 = vmatpush1.msra.mxu0 0.0
        %1402 = vmatprep.subr.mxu0 0.0
        %1403 = vmatpush1.msra.mxu0 0.0
        %1404 = vmatprep.subr.mxu0 0.0
        %1405 = vmatpush1.msra.mxu0 0.0
        %1406 = vmatprep.subr.mxu0 0.0
        %1407 = vmatpush1.msra.mxu0 0.0
        %1408 = vmatprep.subr.mxu0 0.0
        %1409 = vmatpush1.msra.mxu0 0.0
        %1410 = vmatprep.mubr.f32.mxu0 0.0
        %1411 = vmatmul.mubr.f32.gmra.mrb[0].mxu0 %v1187
        %v1412 = vpop.f32.mrb[0].mxu0
        %v1413 = vadd.f32 0.0, %v1412
        %v1414 = vpop.f32.mrb[0].mxu0
        %v1415 = vadd.f32 0.0, %v1414
        %1416 = vmatprep.mubr.f32.mxu0 0.0
        %1417 = vmatmul.mubr.f32.gmra.mrb[0].mxu0 %v1190
        %v1418 = vpop.f32.mrb[0].mxu0
        %v1419 = vadd.f32 0.0, %v1418
        %v1420 = vpop.f32.mrb[0].mxu0
        %v1421 = vadd.f32 0.0, %v1420
        %1422 = vdwg.mxu0
        %v1423 = vadd.f32 %v1165, %v1259
        %v1424 = vadd.f32 %v1166, %v1261
        %v1425 = vadd.f32 %v1167, %v1336
        %v1426 = vadd.f32 %v1168, %v1338
        %v1427 = vadd.f32 %v1169, %v1413
        %v1428 = vadd.f32 %v1170, %v1415
        %v1429 = vadd.f32 %v1171, %v1265
        %v1430 = vadd.f32 %v1172, %v1267
        %v1431 = vadd.f32 %v1173, %v1342
        %v1432 = vadd.f32 %v1174, %v1344
        %v1433 = vadd.f32 %v1175, %v1419
        %v1434 = vadd.f32 %v1176, %v1421
        %v1435 = vpack.c.bf16 %v1095, %v1093
        %v1436 = vpack.c.bf16 %v1096, %v1094
        %v1437 = vld [vmem:[%s11] sm:$0xff]
        %v1438 = vld [vmem:[%s11 + $0x8] sm:$0xff]
        %v1439 = vld [vmem:[%s11 + $0x10] sm:$0xff]
        %v1440 = vld [vmem:[%s11 + $0x18] sm:$0xff]
        %v1441 = vld [vmem:[%s11 + $0x20] sm:$0xff]
        %v1442 = vld [vmem:[%s11 + $0x28] sm:$0xff]
        %v1443 = vld [vmem:[%s11 + $0x30] sm:$0xff]
        %v1444 = vld [vmem:[%s11 + $0x38] sm:$0xff]
        %v1445 = vld [vmem:[%s11 + $0x40] sm:$0xff]
        %v1446 = vld [vmem:[%s11 + $0x48] sm:$0xff]
        %v1447 = vld [vmem:[%s11 + $0x50] sm:$0xff]
        %v1448 = vld [vmem:[%s11 + $0x58] sm:$0xff]
        %v1449 = vld [vmem:[%s11 + $0x60] sm:$0xff]
        %v1450 = vld [vmem:[%s11 + $0x68] sm:$0xff]
        %v1451 = vld [vmem:[%s11 + $0x70] sm:$0xff]
        %v1452 = vld [vmem:[%s11 + $0x78] sm:$0xff]
        %v1453 = vld [vmem:[%s11 + $0x80] sm:$0xff]
        %v1454 = vld [vmem:[%s11 + $0x88] sm:$0xff]
        %v1455 = vld [vmem:[%s11 + $0x90] sm:$0xff]
        %v1456 = vld [vmem:[%s11 + $0x98] sm:$0xff]
        %v1457 = vld [vmem:[%s11 + $0xa0] sm:$0xff]
        %v1458 = vld [vmem:[%s11 + $0xa8] sm:$0xff]
        %v1459 = vld [vmem:[%s11 + $0xb0] sm:$0xff]
        %v1460 = vld [vmem:[%s11 + $0xb8] sm:$0xff]
        %v1461 = vld [vmem:[%s11 + $0xc0] sm:$0xff]
        %v1462 = vld [vmem:[%s11 + $0xc8] sm:$0xff]
        %v1463 = vld [vmem:[%s11 + $0xd0] sm:$0xff]
        %v1464 = vld [vmem:[%s11 + $0xd8] sm:$0xff]
        %v1465 = vld [vmem:[%s11 + $0xe0] sm:$0xff]
        %v1466 = vld [vmem:[%s11 + $0xe8] sm:$0xff]
        %v1467 = vld [vmem:[%s11 + $0xf0] sm:$0xff]
        %v1468 = vld [vmem:[%s11 + $0xf8] sm:$0xff]
        %v1469 = vld [vmem:[%s11 + $0x100] sm:$0xff]
        %v1470 = vld [vmem:[%s11 + $0x108] sm:$0xff]
        %v1471 = vld [vmem:[%s11 + $0x110] sm:$0xff]
        %v1472 = vld [vmem:[%s11 + $0x118] sm:$0xff]
        %v1473 = vld [vmem:[%s11 + $0x120] sm:$0xff]
        %v1474 = vld [vmem:[%s11 + $0x128] sm:$0xff]
        %v1475 = vld [vmem:[%s11 + $0x130] sm:$0xff]
        %v1476 = vld [vmem:[%s11 + $0x138] sm:$0xff]
        %v1477 = vld [vmem:[%s11 + $0x140] sm:$0xff]
        %v1478 = vld [vmem:[%s11 + $0x148] sm:$0xff]
        %v1479 = vld [vmem:[%s11 + $0x150] sm:$0xff]
        %v1480 = vld [vmem:[%s11 + $0x158] sm:$0xff]
        %v1481 = vld [vmem:[%s11 + $0x160] sm:$0xff]
        %v1482 = vld [vmem:[%s11 + $0x168] sm:$0xff]
        %v1483 = vld [vmem:[%s11 + $0x170] sm:$0xff]
        %v1484 = vld [vmem:[%s11 + $0x178] sm:$0xff]
        %v1485 = vld [vmem:[%s11 + $0x180] sm:$0xff]
        %v1486 = vld [vmem:[%s11 + $0x188] sm:$0xff]
        %v1487 = vld [vmem:[%s11 + $0x190] sm:$0xff]
        %v1488 = vld [vmem:[%s11 + $0x198] sm:$0xff]
        %v1489 = vld [vmem:[%s11 + $0x1a0] sm:$0xff]
        %v1490 = vld [vmem:[%s11 + $0x1a8] sm:$0xff]
        %v1491 = vld [vmem:[%s11 + $0x1b0] sm:$0xff]
        %v1492 = vld [vmem:[%s11 + $0x1b8] sm:$0xff]
        %v1493 = vld [vmem:[%s11 + $0x1c0] sm:$0xff]
        %v1494 = vld [vmem:[%s11 + $0x1c8] sm:$0xff]
        %v1495 = vld [vmem:[%s11 + $0x1d0] sm:$0xff]
        %v1496 = vld [vmem:[%s11 + $0x1d8] sm:$0xff]
        %v1497 = vld [vmem:[%s11 + $0x1e0] sm:$0xff]
        %v1498 = vld [vmem:[%s11 + $0x1e8] sm:$0xff]
        %v1499 = vld [vmem:[%s11 + $0x1f0] sm:$0xff]
        %v1500 = vld [vmem:[%s11 + $0x1f8] sm:$0xff]
        %v1501 = vld [vmem:[%s11 + $0x200] sm:$0xff]
        %v1502 = vld [vmem:[%s11 + $0x208] sm:$0xff]
        %v1503 = vld [vmem:[%s11 + $0x210] sm:$0xff]
        %v1504 = vld [vmem:[%s11 + $0x218] sm:$0xff]
        %v1505 = vld [vmem:[%s11 + $0x220] sm:$0xff]
        %v1506 = vld [vmem:[%s11 + $0x228] sm:$0xff]
        %v1507 = vld [vmem:[%s11 + $0x230] sm:$0xff]
        %v1508 = vld [vmem:[%s11 + $0x238] sm:$0xff]
        %v1509 = vld [vmem:[%s11 + $0x240] sm:$0xff]
        %v1510 = vld [vmem:[%s11 + $0x248] sm:$0xff]
        %v1511 = vld [vmem:[%s11 + $0x250] sm:$0xff]
        %v1512 = vld [vmem:[%s11 + $0x258] sm:$0xff]
        %v1513 = vld [vmem:[%s11 + $0x260] sm:$0xff]
        %v1514 = vld [vmem:[%s11 + $0x268] sm:$0xff]
        %v1515 = vld [vmem:[%s11 + $0x270] sm:$0xff]
        %v1516 = vld [vmem:[%s11 + $0x278] sm:$0xff]
        %v1517 = vld [vmem:[%s11 + $0x280] sm:$0xff]
        %v1518 = vld [vmem:[%s11 + $0x288] sm:$0xff]
        %v1519 = vld [vmem:[%s11 + $0x290] sm:$0xff]
        %v1520 = vld [vmem:[%s11 + $0x298] sm:$0xff]
        %v1521 = vld [vmem:[%s11 + $0x2a0] sm:$0xff]
        %v1522 = vld [vmem:[%s11 + $0x2a8] sm:$0xff]
        %v1523 = vld [vmem:[%s11 + $0x2b0] sm:$0xff]
        %v1524 = vld [vmem:[%s11 + $0x2b8] sm:$0xff]
        %v1525 = vld [vmem:[%s11 + $0x2c0] sm:$0xff]
        %v1526 = vld [vmem:[%s11 + $0x2c8] sm:$0xff]
        %v1527 = vld [vmem:[%s11 + $0x2d0] sm:$0xff]
        %v1528 = vld [vmem:[%s11 + $0x2d8] sm:$0xff]
        %v1529 = vld [vmem:[%s11 + $0x2e0] sm:$0xff]
        %v1530 = vld [vmem:[%s11 + $0x2e8] sm:$0xff]
        %v1531 = vld [vmem:[%s11 + $0x2f0] sm:$0xff]
        %v1532 = vld [vmem:[%s11 + $0x2f8] sm:$0xff]
        %v1629 = vunpack.c.l.b16 %v1437
        %v1630 = vunpack.c.h.b16 %v1437
        %v1631 = vunpack.c.l.b16 %v1438
        %v1632 = vunpack.c.h.b16 %v1438
        %v1633 = vunpack.c.l.b16 %v1439
        %v1634 = vunpack.c.h.b16 %v1439
        %v1635 = vunpack.c.l.b16 %v1440
        %v1636 = vunpack.c.h.b16 %v1440
        %v1637 = vunpack.c.l.b16 %v1441
        %v1638 = vunpack.c.h.b16 %v1441
        %v1639 = vunpack.c.l.b16 %v1442
        %v1640 = vunpack.c.h.b16 %v1442
        %v1641 = vunpack.c.l.b16 %v1443
        %v1642 = vunpack.c.h.b16 %v1443
        %v1643 = vunpack.c.l.b16 %v1444
        %v1644 = vunpack.c.h.b16 %v1444
        %v1645 = vunpack.c.l.b16 %v1445
        %v1646 = vunpack.c.h.b16 %v1445
        %v1647 = vunpack.c.l.b16 %v1446
        %v1648 = vunpack.c.h.b16 %v1446
        %v1649 = vunpack.c.l.b16 %v1447
        %v1650 = vunpack.c.h.b16 %v1447
        %v1651 = vunpack.c.l.b16 %v1448
        %v1652 = vunpack.c.h.b16 %v1448
        %v1653 = vunpack.c.l.b16 %v1449
        %v1654 = vunpack.c.h.b16 %v1449
        %v1655 = vunpack.c.l.b16 %v1450
        %v1656 = vunpack.c.h.b16 %v1450
        %v1657 = vunpack.c.l.b16 %v1451
        %v1658 = vunpack.c.h.b16 %v1451
        %v1659 = vunpack.c.l.b16 %v1452
        %v1660 = vunpack.c.h.b16 %v1452
        %v1661 = vunpack.c.l.b16 %v1453
        %v1662 = vunpack.c.h.b16 %v1453
        %v1663 = vunpack.c.l.b16 %v1454
        %v1664 = vunpack.c.h.b16 %v1454
        %v1665 = vunpack.c.l.b16 %v1455
        %v1666 = vunpack.c.h.b16 %v1455
        %v1667 = vunpack.c.l.b16 %v1456
        %v1668 = vunpack.c.h.b16 %v1456
        %v1669 = vunpack.c.l.b16 %v1457
        %v1670 = vunpack.c.h.b16 %v1457
        %v1671 = vunpack.c.l.b16 %v1458
        %v1672 = vunpack.c.h.b16 %v1458
        %v1673 = vunpack.c.l.b16 %v1459
        %v1674 = vunpack.c.h.b16 %v1459
        %v1675 = vunpack.c.l.b16 %v1460
        %v1676 = vunpack.c.h.b16 %v1460
        %v1677 = vunpack.c.l.b16 %v1461
        %v1678 = vunpack.c.h.b16 %v1461
        %v1679 = vunpack.c.l.b16 %v1462
        %v1680 = vunpack.c.h.b16 %v1462
        %v1681 = vunpack.c.l.b16 %v1463
        %v1682 = vunpack.c.h.b16 %v1463
        %v1683 = vunpack.c.l.b16 %v1464
        %v1684 = vunpack.c.h.b16 %v1464
        %v1685 = vunpack.c.l.b16 %v1465
        %v1686 = vunpack.c.h.b16 %v1465
        %v1687 = vunpack.c.l.b16 %v1466
        %v1688 = vunpack.c.h.b16 %v1466
        %v1689 = vunpack.c.l.b16 %v1467
        %v1690 = vunpack.c.h.b16 %v1467
        %v1691 = vunpack.c.l.b16 %v1468
        %v1692 = vunpack.c.h.b16 %v1468
        %v1693 = vunpack.c.l.b16 %v1469
        %v1694 = vunpack.c.h.b16 %v1469
        %v1695 = vunpack.c.l.b16 %v1470
        %v1696 = vunpack.c.h.b16 %v1470
        %v1697 = vunpack.c.l.b16 %v1471
        %v1698 = vunpack.c.h.b16 %v1471
        %v1699 = vunpack.c.l.b16 %v1472
        %v1700 = vunpack.c.h.b16 %v1472
        %v1701 = vunpack.c.l.b16 %v1473
        %v1702 = vunpack.c.h.b16 %v1473
        %v1703 = vunpack.c.l.b16 %v1474
        %v1704 = vunpack.c.h.b16 %v1474
        %v1705 = vunpack.c.l.b16 %v1475
        %v1706 = vunpack.c.h.b16 %v1475
        %v1707 = vunpack.c.l.b16 %v1476
        %v1708 = vunpack.c.h.b16 %v1476
        %v1709 = vunpack.c.l.b16 %v1477
        %v1710 = vunpack.c.h.b16 %v1477
        %v1711 = vunpack.c.l.b16 %v1478
        %v1712 = vunpack.c.h.b16 %v1478
        %v1713 = vunpack.c.l.b16 %v1479
        %v1714 = vunpack.c.h.b16 %v1479
        %v1715 = vunpack.c.l.b16 %v1480
        %v1716 = vunpack.c.h.b16 %v1480
        %v1717 = vunpack.c.l.b16 %v1481
        %v1718 = vunpack.c.h.b16 %v1481
        %v1719 = vunpack.c.l.b16 %v1482
        %v1720 = vunpack.c.h.b16 %v1482
        %v1721 = vunpack.c.l.b16 %v1483
        %v1722 = vunpack.c.h.b16 %v1483
        %v1723 = vunpack.c.l.b16 %v1484
        %v1724 = vunpack.c.h.b16 %v1484
        %v1725 = vunpack.c.l.b16 %v1485
        %v1726 = vunpack.c.h.b16 %v1485
        %v1727 = vunpack.c.l.b16 %v1486
        %v1728 = vunpack.c.h.b16 %v1486
        %v1729 = vunpack.c.l.b16 %v1487
        %v1730 = vunpack.c.h.b16 %v1487
        %v1731 = vunpack.c.l.b16 %v1488
        %v1732 = vunpack.c.h.b16 %v1488
        %v1733 = vunpack.c.l.b16 %v1489
        %v1734 = vunpack.c.h.b16 %v1489
        %v1735 = vunpack.c.l.b16 %v1490
        %v1736 = vunpack.c.h.b16 %v1490
        %v1737 = vunpack.c.l.b16 %v1491
        %v1738 = vunpack.c.h.b16 %v1491
        %v1739 = vunpack.c.l.b16 %v1492
        %v1740 = vunpack.c.h.b16 %v1492
        %v1741 = vunpack.c.l.b16 %v1493
        %v1742 = vunpack.c.h.b16 %v1493
        %v1743 = vunpack.c.l.b16 %v1494
        %v1744 = vunpack.c.h.b16 %v1494
        %v1745 = vunpack.c.l.b16 %v1495
        %v1746 = vunpack.c.h.b16 %v1495
        %v1747 = vunpack.c.l.b16 %v1496
        %v1748 = vunpack.c.h.b16 %v1496
        %v1749 = vunpack.c.l.b16 %v1497
        %v1750 = vunpack.c.h.b16 %v1497
        %v1751 = vunpack.c.l.b16 %v1498
        %v1752 = vunpack.c.h.b16 %v1498
        %v1753 = vunpack.c.l.b16 %v1499
        %v1754 = vunpack.c.h.b16 %v1499
        %v1755 = vunpack.c.l.b16 %v1500
        %v1756 = vunpack.c.h.b16 %v1500
        %v1757 = vunpack.c.l.b16 %v1501
        %v1758 = vunpack.c.h.b16 %v1501
        %v1759 = vunpack.c.l.b16 %v1502
        %v1760 = vunpack.c.h.b16 %v1502
        %v1761 = vunpack.c.l.b16 %v1503
        %v1762 = vunpack.c.h.b16 %v1503
        %v1763 = vunpack.c.l.b16 %v1504
        %v1764 = vunpack.c.h.b16 %v1504
        %v1765 = vunpack.c.l.b16 %v1505
        %v1766 = vunpack.c.h.b16 %v1505
        %v1767 = vunpack.c.l.b16 %v1506
        %v1768 = vunpack.c.h.b16 %v1506
        %v1769 = vunpack.c.l.b16 %v1507
        %v1770 = vunpack.c.h.b16 %v1507
        %v1771 = vunpack.c.l.b16 %v1508
        %v1772 = vunpack.c.h.b16 %v1508
        %v1773 = vunpack.c.l.b16 %v1509
        %v1774 = vunpack.c.h.b16 %v1509
        %v1775 = vunpack.c.l.b16 %v1510
        %v1776 = vunpack.c.h.b16 %v1510
        %v1777 = vunpack.c.l.b16 %v1511
        %v1778 = vunpack.c.h.b16 %v1511
        %v1779 = vunpack.c.l.b16 %v1512
        %v1780 = vunpack.c.h.b16 %v1512
        %v1781 = vunpack.c.l.b16 %v1513
        %v1782 = vunpack.c.h.b16 %v1513
        %v1783 = vunpack.c.l.b16 %v1514
        %v1784 = vunpack.c.h.b16 %v1514
        %v1785 = vunpack.c.l.b16 %v1515
        %v1786 = vunpack.c.h.b16 %v1515
        %v1787 = vunpack.c.l.b16 %v1516
        %v1788 = vunpack.c.h.b16 %v1516
        %v1789 = vunpack.c.l.b16 %v1517
        %v1790 = vunpack.c.h.b16 %v1517
        %v1791 = vunpack.c.l.b16 %v1518
        %v1792 = vunpack.c.h.b16 %v1518
        %v1793 = vunpack.c.l.b16 %v1519
        %v1794 = vunpack.c.h.b16 %v1519
        %v1795 = vunpack.c.l.b16 %v1520
        %v1796 = vunpack.c.h.b16 %v1520
        %v1797 = vunpack.c.l.b16 %v1521
        %v1798 = vunpack.c.h.b16 %v1521
        %v1799 = vunpack.c.l.b16 %v1522
        %v1800 = vunpack.c.h.b16 %v1522
        %v1801 = vunpack.c.l.b16 %v1523
        %v1802 = vunpack.c.h.b16 %v1523
        %v1803 = vunpack.c.l.b16 %v1524
        %v1804 = vunpack.c.h.b16 %v1524
        %v1805 = vunpack.c.l.b16 %v1525
        %v1806 = vunpack.c.h.b16 %v1525
        %v1807 = vunpack.c.l.b16 %v1526
        %v1808 = vunpack.c.h.b16 %v1526
        %v1809 = vunpack.c.l.b16 %v1527
        %v1810 = vunpack.c.h.b16 %v1527
        %v1811 = vunpack.c.l.b16 %v1528
        %v1812 = vunpack.c.h.b16 %v1528
        %v1813 = vunpack.c.l.b16 %v1529
        %v1814 = vunpack.c.h.b16 %v1529
        %v1815 = vunpack.c.l.b16 %v1530
        %v1816 = vunpack.c.h.b16 %v1530
        %v1817 = vunpack.c.l.b16 %v1531
        %v1818 = vunpack.c.h.b16 %v1531
        %v1819 = vunpack.c.l.b16 %v1532
        %v1820 = vunpack.c.h.b16 %v1532
        %v1821 = vpack.c.b16 %v1635, %v1629
        %v1822 = vpack.c.b16 %v1636, %v1630
        %v1823 = vpack.c.b16 %v1637, %v1631
        %v1824 = vpack.c.b16 %v1638, %v1632
        %v1825 = vpack.c.b16 %v1639, %v1633
        %v1826 = vpack.c.b16 %v1640, %v1634
        %v1827 = vpack.c.b16 %v1647, %v1641
        %v1828 = vpack.c.b16 %v1648, %v1642
        %v1829 = vpack.c.b16 %v1649, %v1643
        %v1830 = vpack.c.b16 %v1650, %v1644
        %v1831 = vpack.c.b16 %v1651, %v1645
        %v1832 = vpack.c.b16 %v1652, %v1646
        %v1833 = vpack.c.b16 %v1659, %v1653
        %v1834 = vpack.c.b16 %v1660, %v1654
        %v1835 = vpack.c.b16 %v1661, %v1655
        %v1836 = vpack.c.b16 %v1662, %v1656
        %v1837 = vpack.c.b16 %v1663, %v1657
        %v1838 = vpack.c.b16 %v1664, %v1658
        %v1839 = vpack.c.b16 %v1671, %v1665
        %v1840 = vpack.c.b16 %v1672, %v1666
        %v1841 = vpack.c.b16 %v1673, %v1667
        %v1842 = vpack.c.b16 %v1674, %v1668
        %v1843 = vpack.c.b16 %v1675, %v1669
        %v1844 = vpack.c.b16 %v1676, %v1670
        %v1845 = vpack.c.b16 %v1683, %v1677
        %v1846 = vpack.c.b16 %v1684, %v1678
        %v1847 = vpack.c.b16 %v1685, %v1679
        %v1848 = vpack.c.b16 %v1686, %v1680
        %v1849 = vpack.c.b16 %v1687, %v1681
        %v1850 = vpack.c.b16 %v1688, %v1682
        %v1851 = vpack.c.b16 %v1695, %v1689
        %v1852 = vpack.c.b16 %v1696, %v1690
        %v1853 = vpack.c.b16 %v1697, %v1691
        %v1854 = vpack.c.b16 %v1698, %v1692
        %v1855 = vpack.c.b16 %v1699, %v1693
        %v1856 = vpack.c.b16 %v1700, %v1694
        %v1857 = vpack.c.b16 %v1707, %v1701
        %v1858 = vpack.c.b16 %v1708, %v1702
        %v1859 = vpack.c.b16 %v1709, %v1703
        %v1860 = vpack.c.b16 %v1710, %v1704
        %v1861 = vpack.c.b16 %v1711, %v1705
        %v1862 = vpack.c.b16 %v1712, %v1706
        %v1863 = vpack.c.b16 %v1719, %v1713
        %v1864 = vpack.c.b16 %v1720, %v1714
        %v1865 = vpack.c.b16 %v1721, %v1715
        %v1866 = vpack.c.b16 %v1722, %v1716
        %v1867 = vpack.c.b16 %v1723, %v1717
        %v1868 = vpack.c.b16 %v1724, %v1718
        %v1869 = vpack.c.b16 %v1731, %v1725
        %v1870 = vpack.c.b16 %v1732, %v1726
        %v1871 = vpack.c.b16 %v1733, %v1727
        %v1872 = vpack.c.b16 %v1734, %v1728
        %v1873 = vpack.c.b16 %v1735, %v1729
        %v1874 = vpack.c.b16 %v1736, %v1730
        %v1875 = vpack.c.b16 %v1743, %v1737
        %v1876 = vpack.c.b16 %v1744, %v1738
        %v1877 = vpack.c.b16 %v1745, %v1739
        %v1878 = vpack.c.b16 %v1746, %v1740
        %v1879 = vpack.c.b16 %v1747, %v1741
        %v1880 = vpack.c.b16 %v1748, %v1742
        %v1881 = vpack.c.b16 %v1755, %v1749
        %v1882 = vpack.c.b16 %v1756, %v1750
        %v1883 = vpack.c.b16 %v1757, %v1751
        %v1884 = vpack.c.b16 %v1758, %v1752
        %v1885 = vpack.c.b16 %v1759, %v1753
        %v1886 = vpack.c.b16 %v1760, %v1754
        %v1887 = vpack.c.b16 %v1767, %v1761
        %v1888 = vpack.c.b16 %v1768, %v1762
        %v1889 = vpack.c.b16 %v1769, %v1763
        %v1890 = vpack.c.b16 %v1770, %v1764
        %v1891 = vpack.c.b16 %v1771, %v1765
        %v1892 = vpack.c.b16 %v1772, %v1766
        %v1893 = vpack.c.b16 %v1779, %v1773
        %v1894 = vpack.c.b16 %v1780, %v1774
        %v1895 = vpack.c.b16 %v1781, %v1775
        %v1896 = vpack.c.b16 %v1782, %v1776
        %v1897 = vpack.c.b16 %v1783, %v1777
        %v1898 = vpack.c.b16 %v1784, %v1778
        %v1899 = vpack.c.b16 %v1791, %v1785
        %v1900 = vpack.c.b16 %v1792, %v1786
        %v1901 = vpack.c.b16 %v1793, %v1787
        %v1902 = vpack.c.b16 %v1794, %v1788
        %v1903 = vpack.c.b16 %v1795, %v1789
        %v1904 = vpack.c.b16 %v1796, %v1790
        %v1905 = vpack.c.b16 %v1803, %v1797
        %v1906 = vpack.c.b16 %v1804, %v1798
        %v1907 = vpack.c.b16 %v1805, %v1799
        %v1908 = vpack.c.b16 %v1806, %v1800
        %v1909 = vpack.c.b16 %v1807, %v1801
        %v1910 = vpack.c.b16 %v1808, %v1802
        %v1911 = vpack.c.b16 %v1815, %v1809
        %v1912 = vpack.c.b16 %v1816, %v1810
        %v1913 = vpack.c.b16 %v1817, %v1811
        %v1914 = vpack.c.b16 %v1818, %v1812
        %v1915 = vpack.c.b16 %v1819, %v1813
        %v1916 = vpack.c.b16 %v1820, %v1814
        %2013 = vmatprep.subr.bf16.mxu0 %v1822
        %2014 = vmatpush1.bf16.msra.mxu0 %v1821
        %2015 = vmatprep.subr.bf16.mxu0 %v1828
        %2016 = vmatpush1.bf16.msra.mxu0 %v1827
        %2017 = vmatprep.subr.bf16.mxu0 %v1834
        %2018 = vmatpush1.bf16.msra.mxu0 %v1833
        %2019 = vmatprep.subr.bf16.mxu0 %v1840
        %2020 = vmatpush1.bf16.msra.mxu0 %v1839
        %2021 = vmatprep.subr.bf16.mxu0 %v1846
        %2022 = vmatpush1.bf16.msra.mxu0 %v1845
        %2023 = vmatprep.subr.bf16.mxu0 %v1852
        %2024 = vmatpush1.bf16.msra.mxu0 %v1851
        %2025 = vmatprep.subr.bf16.mxu0 %v1858
        %2026 = vmatpush1.bf16.msra.mxu0 %v1857
        %2027 = vmatprep.subr.bf16.mxu0 %v1864
        %2028 = vmatpush1.bf16.msra.mxu0 %v1863
        %2029 = vmatprep.subr.bf16.mxu0 %v1870
        %2030 = vmatpush1.bf16.msra.mxu0 %v1869
        %2031 = vmatprep.subr.bf16.mxu0 %v1876
        %2032 = vmatpush1.bf16.msra.mxu0 %v1875
        %2033 = vmatprep.subr.bf16.mxu0 %v1882
        %2034 = vmatpush1.bf16.msra.mxu0 %v1881
        %2035 = vmatprep.subr.bf16.mxu0 %v1888
        %2036 = vmatpush1.bf16.msra.mxu0 %v1887
        %2037 = vmatprep.subr.bf16.mxu0 %v1894
        %2038 = vmatpush1.bf16.msra.mxu0 %v1893
        %2039 = vmatprep.subr.bf16.mxu0 %v1900
        %2040 = vmatpush1.bf16.msra.mxu0 %v1899
        %2041 = vmatprep.subr.bf16.mxu0 %v1906
        %2042 = vmatpush1.bf16.msra.mxu0 %v1905
        %2043 = vmatprep.subr.bf16.mxu0 %v1912
        %2044 = vmatpush1.bf16.msra.mxu0 %v1911
        %2045 = vmatprep.mubr.bf16.mxu0 %v1436
        %2046 = vmatmul.mubr.bf16.gmra.mrb[0].mxu0 %v1435
        %v2047 = vpop.f32.mrb[0].mxu0
        %v2048 = vadd.f32 0.0, %v2047
        %v2049 = vpop.f32.mrb[0].mxu0
        %v2050 = vadd.f32 0.0, %v2049
        %v2051 = vpop.f32.mrb[0].mxu0
        %v2052 = vadd.f32 0.0, %v2051
        %v2053 = vpop.f32.mrb[0].mxu0
        %v2054 = vadd.f32 0.0, %v2053
        %2055 = vdwg.mxu0
        %2056 = vmatprep.subr.bf16.mxu0 %v1824
        %2057 = vmatpush1.bf16.msra.mxu0 %v1823
        %2058 = vmatprep.subr.bf16.mxu0 %v1830
        %2059 = vmatpush1.bf16.msra.mxu0 %v1829
        %2060 = vmatprep.subr.bf16.mxu0 %v1836
        %2061 = vmatpush1.bf16.msra.mxu0 %v1835
        %2062 = vmatprep.subr.bf16.mxu0 %v1842
        %2063 = vmatpush1.bf16.msra.mxu0 %v1841
        %2064 = vmatprep.subr.bf16.mxu0 %v1848
        %2065 = vmatpush1.bf16.msra.mxu0 %v1847
        %2066 = vmatprep.subr.bf16.mxu0 %v1854
        %2067 = vmatpush1.bf16.msra.mxu0 %v1853
        %2068 = vmatprep.subr.bf16.mxu0 %v1860
        %2069 = vmatpush1.bf16.msra.mxu0 %v1859
        %2070 = vmatprep.subr.bf16.mxu0 %v1866
        %2071 = vmatpush1.bf16.msra.mxu0 %v1865
        %2072 = vmatprep.subr.bf16.mxu0 %v1872
        %2073 = vmatpush1.bf16.msra.mxu0 %v1871
        %2074 = vmatprep.subr.bf16.mxu0 %v1878
        %2075 = vmatpush1.bf16.msra.mxu0 %v1877
        %2076 = vmatprep.subr.bf16.mxu0 %v1884
        %2077 = vmatpush1.bf16.msra.mxu0 %v1883
        %2078 = vmatprep.subr.bf16.mxu0 %v1890
        %2079 = vmatpush1.bf16.msra.mxu0 %v1889
        %2080 = vmatprep.subr.bf16.mxu0 %v1896
        %2081 = vmatpush1.bf16.msra.mxu0 %v1895
        %2082 = vmatprep.subr.bf16.mxu0 %v1902
        %2083 = vmatpush1.bf16.msra.mxu0 %v1901
        %2084 = vmatprep.subr.bf16.mxu0 %v1908
        %2085 = vmatpush1.bf16.msra.mxu0 %v1907
        %2086 = vmatprep.subr.bf16.mxu0 %v1914
        %2087 = vmatpush1.bf16.msra.mxu0 %v1913
        %2088 = vmatprep.mubr.bf16.mxu0 %v1436
        %2089 = vmatmul.mubr.bf16.gmra.mrb[0].mxu0 %v1435
        %v2090 = vpop.f32.mrb[0].mxu0
        %v2091 = vadd.f32 0.0, %v2090
        %v2092 = vpop.f32.mrb[0].mxu0
        %v2093 = vadd.f32 0.0, %v2092
        %v2094 = vpop.f32.mrb[0].mxu0
        %v2095 = vadd.f32 0.0, %v2094
        %v2096 = vpop.f32.mrb[0].mxu0
        %v2097 = vadd.f32 0.0, %v2096
        %2098 = vdwg.mxu0
        %2099 = vmatprep.subr.bf16.mxu0 %v1826
        %2100 = vmatpush1.bf16.msra.mxu0 %v1825
        %2101 = vmatprep.subr.bf16.mxu0 %v1832
        %2102 = vmatpush1.bf16.msra.mxu0 %v1831
        %2103 = vmatprep.subr.bf16.mxu0 %v1838
        %2104 = vmatpush1.bf16.msra.mxu0 %v1837
        %2105 = vmatprep.subr.bf16.mxu0 %v1844
        %2106 = vmatpush1.bf16.msra.mxu0 %v1843
        %2107 = vmatprep.subr.bf16.mxu0 %v1850
        %2108 = vmatpush1.bf16.msra.mxu0 %v1849
        %2109 = vmatprep.subr.bf16.mxu0 %v1856
        %2110 = vmatpush1.bf16.msra.mxu0 %v1855
        %2111 = vmatprep.subr.bf16.mxu0 %v1862
        %2112 = vmatpush1.bf16.msra.mxu0 %v1861
        %2113 = vmatprep.subr.bf16.mxu0 %v1868
        %2114 = vmatpush1.bf16.msra.mxu0 %v1867
        %2115 = vmatprep.subr.bf16.mxu0 %v1874
        %2116 = vmatpush1.bf16.msra.mxu0 %v1873
        %2117 = vmatprep.subr.bf16.mxu0 %v1880
        %2118 = vmatpush1.bf16.msra.mxu0 %v1879
        %2119 = vmatprep.subr.bf16.mxu0 %v1886
        %2120 = vmatpush1.bf16.msra.mxu0 %v1885
        %2121 = vmatprep.subr.bf16.mxu0 %v1892
        %2122 = vmatpush1.bf16.msra.mxu0 %v1891
        %2123 = vmatprep.subr.bf16.mxu0 %v1898
        %2124 = vmatpush1.bf16.msra.mxu0 %v1897
        %2125 = vmatprep.subr.bf16.mxu0 %v1904
        %2126 = vmatpush1.bf16.msra.mxu0 %v1903
        %2127 = vmatprep.subr.bf16.mxu0 %v1910
        %2128 = vmatpush1.bf16.msra.mxu0 %v1909
        %2129 = vmatprep.subr.bf16.mxu0 %v1916
        %2130 = vmatpush1.bf16.msra.mxu0 %v1915
        %2131 = vmatprep.mubr.bf16.mxu0 %v1436
        %2132 = vmatmul.mubr.bf16.gmra.mrb[0].mxu0 %v1435
        %v2133 = vpop.f32.mrb[0].mxu0
        %v2134 = vadd.f32 0.0, %v2133
        %v2135 = vpop.f32.mrb[0].mxu0
        %v2136 = vadd.f32 0.0, %v2135
        %v2137 = vpop.f32.mrb[0].mxu0
        %v2138 = vadd.f32 0.0, %v2137
        %v2139 = vpop.f32.mrb[0].mxu0
        %v2140 = vadd.f32 0.0, %v2139
        %2141 = vdwg.mxu0
        %v2142 = vadd.f32 %v1423, %v2048
        %v2143 = vadd.f32 %v1424, %v2050
        %v2144 = vadd.f32 %v1429, %v2052
        %v2145 = vadd.f32 %v1430, %v2054
        %v2146 = vxor.u32 %v2142, 2147483648
        %v2147 = vxor.u32 %v2143, 2147483648
        %v2148 = vxor.u32 %v2144, 2147483648
        %v2149 = vxor.u32 %v2145, 2147483648
        %v2150 = vmul.f32 %v2146, 1.442695
        %v2151 = vpow.pop %v2150
        %v2152 = vmul.f32 %v2147, 1.442695
        %v2153 = vpow.pop %v2152
        %v2154 = vmul.f32 %v2148, 1.442695
        %v2155 = vpow.pop %v2154
        %v2156 = vmul.f32 %v2149, 1.442695
        %v2157 = vpow.pop %v2156
        %v2158 = vadd.f32 %v2151, 1.0
        %v2159 = vadd.f32 %v2153, 1.0
        %v2160 = vadd.f32 %v2155, 1.0
        %v2161 = vadd.f32 %v2157, 1.0
        %v2162 = vrcp.pop %v2158
        %v2163 = vmul.f32 1.0, %v2162
        %v2164 = vrcp.pop %v2159
        %v2165 = vmul.f32 1.0, %v2164
        %v2166 = vrcp.pop %v2160
        %v2167 = vmul.f32 1.0, %v2166
        %v2168 = vrcp.pop %v2161
        %v2169 = vmul.f32 1.0, %v2168
        %v2170 = vadd.f32 %v1425, %v2091
        %v2171 = vadd.f32 %v1426, %v2093
        %v2172 = vadd.f32 %v1431, %v2095
        %v2173 = vadd.f32 %v1432, %v2097
        %v2174 = vxor.u32 %v2170, 2147483648
        %v2175 = vxor.u32 %v2171, 2147483648
        %v2176 = vxor.u32 %v2172, 2147483648
        %v2177 = vxor.u32 %v2173, 2147483648
        %v2178 = vmul.f32 %v2174, 1.442695
        %v2179 = vpow.pop %v2178
        %v2180 = vmul.f32 %v2175, 1.442695
        %v2181 = vpow.pop %v2180
        %v2182 = vmul.f32 %v2176, 1.442695
        %v2183 = vpow.pop %v2182
        %v2184 = vmul.f32 %v2177, 1.442695
        %v2185 = vpow.pop %v2184
        %v2186 = vadd.f32 %v2179, 1.0
        %v2187 = vadd.f32 %v2181, 1.0
        %v2188 = vadd.f32 %v2183, 1.0
        %v2189 = vadd.f32 %v2185, 1.0
        %v2190 = vrcp.pop %v2186
        %v2191 = vmul.f32 1.0, %v2190
        %v2192 = vrcp.pop %v2187
        %v2193 = vmul.f32 1.0, %v2192
        %v2194 = vrcp.pop %v2188
        %v2195 = vmul.f32 1.0, %v2194
        %v2196 = vrcp.pop %v2189
        %v2197 = vmul.f32 1.0, %v2196
        %v2198 = vld [vmem:[%s12] sm:$0x3]
        %v2200 = vlaneseq
        %v2201 = vshrl.u32 %v2200, 7
        %v2202 = vsub.s32 0, %v2201
        %v2203 = vrot.slane %v2198, %v2202
        %v2204 = vlaneseq
        %v2205 = vshrl.u32 %v2204, 7
        %v2206 = vsub.s32 1, %v2205
        %v2207 = vrot.slane %v2198, %v2206
        %v2210 = vadd.f32 %v2134, %v2203
        %v2211 = vadd.f32 %v2136, %v2207
        %v2212 = vadd.f32 %v2138, %v2203
        %v2213 = vadd.f32 %v2140, %v2207
        %v2214 = vmul.f32 %v2163, %v2210
        %v2215 = vmul.f32 %v2165, %v2211
        %v2216 = vmul.f32 %v2167, %v2212
        %v2217 = vmul.f32 %v2169, %v2213
        %v2218 = vadd.f32 %v1427, %v2214
        %v2219 = vadd.f32 %v1428, %v2215
        %v2220 = vadd.f32 %v1433, %v2216
        %v2221 = vadd.f32 %v1434, %v2217
        %v2222 = vtanh.pop %v2218
        %v2223 = vtanh.pop %v2219
        %v2224 = vtanh.pop %v2220
        %v2225 = vtanh.pop %v2221
        %v2226 = vsub.f32 1.0, %v2191
        %v2227 = vsub.f32 1.0, %v2193
        %v2228 = vsub.f32 1.0, %v2195
        %v2229 = vsub.f32 1.0, %v2197
        %v2230 = vmul.f32 %v2226, %v2222
        %v2231 = vmul.f32 %v2227, %v2223
        %v2232 = vmul.f32 %v2228, %v2224
        %v2233 = vmul.f32 %v2229, %v2225
        %v2234 = vmul.f32 %v2191, %v1093
        %v2235 = vmul.f32 %v2193, %v1094
        %v2236 = vmul.f32 %v2195, %v1095
        %v2237 = vmul.f32 %v2197, %v1096
        %v2238 = vadd.f32 %v2230, %v2234
        %v2239 = vadd.f32 %v2231, %v2235
        %v2240 = vadd.f32 %v2232, %v2236
        %v2241 = vadd.f32 %v2233, %v2237
        %2242 = vst [vmem:[#allocation2] sm:$0xff] %v2238
        %2243 = vst [vmem:[#allocation2 + $0x8] sm:$0xff] %v2239
        %2244 = vst [vmem:[#allocation2 + $0x10] sm:$0xff] %v2240
        %2245 = vst [vmem:[#allocation2 + $0x18] sm:$0xff] %v2241
        %v2246 = vpack.c.bf16 %v2240, %v2238
        %v2247 = vpack.c.bf16 %v2241, %v2239
        %v2248 = vld [vmem:[%s13] sm:$0xf]
        %v2249 = vld [vmem:[%s13 + $0x4] sm:$0xf]
        %v2250 = vld [vmem:[%s13 + $0x8] sm:$0xf]
        %v2251 = vld [vmem:[%s13 + $0xc] sm:$0xf]
        %v2252 = vld [vmem:[%s13 + $0x10] sm:$0xf]
        %v2253 = vld [vmem:[%s13 + $0x14] sm:$0xf]
        %v2254 = vld [vmem:[%s13 + $0x18] sm:$0xf]
        %v2255 = vld [vmem:[%s13 + $0x1c] sm:$0xf]
        %v2256 = vld [vmem:[%s13 + $0x20] sm:$0xf]
        %v2257 = vld [vmem:[%s13 + $0x24] sm:$0xf]
        %v2258 = vld [vmem:[%s13 + $0x28] sm:$0xf]
        %v2259 = vld [vmem:[%s13 + $0x2c] sm:$0xf]
        %v2260 = vld [vmem:[%s13 + $0x30] sm:$0xf]
        %v2261 = vld [vmem:[%s13 + $0x34] sm:$0xf]
        %v2262 = vld [vmem:[%s13 + $0x38] sm:$0xf]
        %v2263 = vld [vmem:[%s13 + $0x3c] sm:$0xf]
        %v2264 = vld [vmem:[%s13 + $0x40] sm:$0xf]
        %v2265 = vld [vmem:[%s13 + $0x44] sm:$0xf]
        %v2266 = vld [vmem:[%s13 + $0x48] sm:$0xf]
        %v2267 = vld [vmem:[%s13 + $0x4c] sm:$0xf]
        %v2268 = vld [vmem:[%s13 + $0x50] sm:$0xf]
        %v2269 = vld [vmem:[%s13 + $0x54] sm:$0xf]
        %v2270 = vld [vmem:[%s13 + $0x58] sm:$0xf]
        %v2271 = vld [vmem:[%s13 + $0x5c] sm:$0xf]
        %v2272 = vld [vmem:[%s13 + $0x60] sm:$0xf]
        %v2273 = vld [vmem:[%s13 + $0x64] sm:$0xf]
        %v2274 = vld [vmem:[%s13 + $0x68] sm:$0xf]
        %v2275 = vld [vmem:[%s13 + $0x6c] sm:$0xf]
        %v2276 = vld [vmem:[%s13 + $0x70] sm:$0xf]
        %v2277 = vld [vmem:[%s13 + $0x74] sm:$0xf]
        %v2278 = vld [vmem:[%s13 + $0x78] sm:$0xf]
        %v2279 = vld [vmem:[%s13 + $0x7c] sm:$0xf]
        %v2280 = vld [vmem:[%s14] sm:$0x1]
        %v2282 = vlaneseq
        %v2283 = vshrl.u32 %v2282, 7
        %v2284 = vsub.s32 0, %v2283
        %v2285 = vrot.slane %v2280, %v2284
        %v2319 = vunpack.c.l.b16 %v2248
        %v2320 = vunpack.c.l.b16 %v2249
        %v2321 = vunpack.c.l.b16 %v2250
        %v2322 = vunpack.c.l.b16 %v2251
        %v2323 = vunpack.c.l.b16 %v2252
        %v2324 = vunpack.c.l.b16 %v2253
        %v2325 = vunpack.c.l.b16 %v2254
        %v2326 = vunpack.c.l.b16 %v2255
        %v2327 = vunpack.c.l.b16 %v2256
        %v2328 = vunpack.c.l.b16 %v2257
        %v2329 = vunpack.c.l.b16 %v2258
        %v2330 = vunpack.c.l.b16 %v2259
        %v2331 = vunpack.c.l.b16 %v2260
        %v2332 = vunpack.c.l.b16 %v2261
        %v2333 = vunpack.c.l.b16 %v2262
        %v2334 = vunpack.c.l.b16 %v2263
        %v2335 = vunpack.c.l.b16 %v2264
        %v2336 = vunpack.c.l.b16 %v2265
        %v2337 = vunpack.c.l.b16 %v2266
        %v2338 = vunpack.c.l.b16 %v2267
        %v2339 = vunpack.c.l.b16 %v2268
        %v2340 = vunpack.c.l.b16 %v2269
        %v2341 = vunpack.c.l.b16 %v2270
        %v2342 = vunpack.c.l.b16 %v2271
        %v2343 = vunpack.c.l.b16 %v2272
        %v2344 = vunpack.c.l.b16 %v2273
        %v2345 = vunpack.c.l.b16 %v2274
        %v2346 = vunpack.c.l.b16 %v2275
        %v2347 = vunpack.c.l.b16 %v2276
        %v2348 = vunpack.c.l.b16 %v2277
        %v2349 = vunpack.c.l.b16 %v2278
        %v2350 = vunpack.c.l.b16 %v2279
        %v2351 = vpack.c.b16 %v2320, %v2319
        %v2352 = vpack.c.b16 %v2322, %v2321
        %v2353 = vpack.c.b16 %v2324, %v2323
        %v2354 = vpack.c.b16 %v2326, %v2325
        %v2355 = vpack.c.b16 %v2328, %v2327
        %v2356 = vpack.c.b16 %v2330, %v2329
        %v2357 = vpack.c.b16 %v2332, %v2331
        %v2358 = vpack.c.b16 %v2334, %v2333
        %v2359 = vpack.c.b16 %v2336, %v2335
        %v2360 = vpack.c.b16 %v2338, %v2337
        %v2361 = vpack.c.b16 %v2340, %v2339
        %v2362 = vpack.c.b16 %v2342, %v2341
        %v2363 = vpack.c.b16 %v2344, %v2343
        %v2364 = vpack.c.b16 %v2346, %v2345
        %v2365 = vpack.c.b16 %v2348, %v2347
        %v2366 = vpack.c.b16 %v2350, %v2349
        %2383 = vmatprep.subr.bf16.mxu0 0
        %2384 = vmatpush1.bf16.msra.mxu0 %v2351
        %2385 = vmatprep.subr.bf16.mxu0 0
        %2386 = vmatpush1.bf16.msra.mxu0 %v2352
        %2387 = vmatprep.subr.bf16.mxu0 0
        %2388 = vmatpush1.bf16.msra.mxu0 %v2353
        %2389 = vmatprep.subr.bf16.mxu0 0
        %2390 = vmatpush1.bf16.msra.mxu0 %v2354
        %2391 = vmatprep.subr.bf16.mxu0 0
        %2392 = vmatpush1.bf16.msra.mxu0 %v2355
        %2393 = vmatprep.subr.bf16.mxu0 0
        %2394 = vmatpush1.bf16.msra.mxu0 %v2356
        %2395 = vmatprep.subr.bf16.mxu0 0
        %2396 = vmatpush1.bf16.msra.mxu0 %v2357
        %2397 = vmatprep.subr.bf16.mxu0 0
        %2398 = vmatpush1.bf16.msra.mxu0 %v2358
        %2399 = vmatprep.subr.bf16.mxu0 0
        %2400 = vmatpush1.bf16.msra.mxu0 %v2359
        %2401 = vmatprep.subr.bf16.mxu0 0
        %2402 = vmatpush1.bf16.msra.mxu0 %v2360
        %2403 = vmatprep.subr.bf16.mxu0 0
        %2404 = vmatpush1.bf16.msra.mxu0 %v2361
        %2405 = vmatprep.subr.bf16.mxu0 0
        %2406 = vmatpush1.bf16.msra.mxu0 %v2362
        %2407 = vmatprep.subr.bf16.mxu0 0
        %2408 = vmatpush1.bf16.msra.mxu0 %v2363
        %2409 = vmatprep.subr.bf16.mxu0 0
        %2410 = vmatpush1.bf16.msra.mxu0 %v2364
        %2411 = vmatprep.subr.bf16.mxu0 0
        %2412 = vmatpush1.bf16.msra.mxu0 %v2365
        %2413 = vmatprep.subr.bf16.mxu0 0
        %2414 = vmatpush1.bf16.msra.mxu0 %v2366
        %2415 = vmatprep.mubr.bf16.mxu0 %v2247
        %2416 = vmatmul.mubr.bf16.gmra.mrb[0].mxu0 %v2246
        %v2417 = vpop.f32.mrb[0].mxu0
        %v2418 = vadd.f32 %v2285, %v2417
        %v2419 = vpop.f32.mrb[0].mxu0
        %v2420 = vpop.f32.mrb[0].mxu0
        %v2421 = vadd.f32 %v2285, %v2420
        %v2422 = vpop.f32.mrb[0].mxu0
        %2423 = vdwg.mxu0
        %2424 = vst [vmem:[%s527] sm:$0xff] %v2418
        %2425 = vst [vmem:[%s527 + $0x8] sm:$0xff] %v2421
        %s2426 = sand.u32 %s382, 1
        %s2427 = sand.u32 %s382, 1
        %s2428 = smul.addr %s2427, 16
        %s2429 = scalar_lea.vmem [#allocation4], %s2428
        // Predicated region
        $region85: #{gruvae_forward.3} parent=79 // pred_check
          %p2430 = pneg %p366
        $region86: #{gruvae_forward.3} parent=79 // pred_check_branch
          %2432 = sbr.rel (%p2430) target = $region88
        $region87: #{gruvae_forward.3} parent=79 // pred_region
          _
        $region88: #{gruvae_forward.3} parent=79 // pred_fallthru
          _
        // Predicated region
        $region89: #{gruvae_forward.3} parent=79 // pred_check
          %p2433 = pneg %p392
        $region90: #{gruvae_forward.3} parent=79 // pred_check_branch
          %2435 = sbr.rel (%p2433) target = $region92
        $region91: #{gruvae_forward.3} parent=79 // pred_region
          %s2436 = smul.addr %s28, 8
          %s2437 = scalar_lea.vmem %s16, %s2436
          // Predicated region
          $region93: #{gruvae_forward.3} parent=91 // pred_check
            _
          $region94: #{gruvae_forward.3} parent=91 // pred_check_branch
            %2439 = sbr.rel (0) target = $region96
          $region95: #{gruvae_forward.3} parent=91 // pred_region
            // Predicated region
            $region97: #{gruvae_forward.3} parent=95 // pred_check
              _
            $region98: #{gruvae_forward.3} parent=95 // pred_check_branch
              %2441 = sbr.rel (0) target = $region100
            $region99: #{gruvae_forward.3} parent=95 // pred_region
              // Predicated region
              $region112: #{gruvae_forward.3} parent=99 // pred_check
                _
              $region113: #{gruvae_forward.3} parent=99 // pred_check_branch
                %2458 = sbr.rel (0) target = $region115
              $region114: #{gruvae_forward.3} parent=99 // pred_region
                loop: start=0, step=1, limit=1
                $region116: #{gruvae_forward.3} parent=114 // loop_pre_header
                  _
                $region117: #{gruvae_forward.3} parent=114 // loop_header
                  %s2460 = sphi 0, %s2464
                  %p2461 = scmp.ge.s32.totalorder %s2460, 1
                  %s2465 = sphi %s2429, %s2429
                  %s2466 = sphi %s2437, %s2437
                $region118: #{gruvae_forward.3} parent=114 // loop_header_branch
                  %2463 = sbr.rel (%p2461) target = $region122
                $region119: #{gruvae_forward.3} parent=114 // loop_body
                  %v2467 = vld [vmem:[%s2465] sm:$0xff]
                  %2468 = vst [vmem:[%s2466] sm:$0xff] %v2467
                  %v2469 = vld [vmem:[%s2465 + $0x8] sm:$0xff]
                  %2470 = vst [vmem:[%s2466 + $0x40] sm:$0xff] %v2469
                $region120: #{gruvae_forward.3} parent=114 // loop_footer
                  %s2464 = sadd.s32 1, %s2460
                $region121: #{gruvae_forward.3} parent=114 // loop_footer_branch
                  %2459 = sbr.rel target = $region117
                $region122: #{gruvae_forward.3} parent=114 // loop_exit
                  _
              $region115: #{gruvae_forward.3} parent=99 // pred_fallthru
                _
              // Predicated region
              $region123: #{gruvae_forward.3} parent=99 // pred_check
                _
              $region124: #{gruvae_forward.3} parent=99 // pred_check_branch
                %2472 = sbr.rel target = $region126
              $region125: #{gruvae_forward.3} parent=99 // pred_region
                _
              $region126: #{gruvae_forward.3} parent=99 // pred_fallthru
                _
            $region100: #{gruvae_forward.3} parent=95 // pred_fallthru
              _
            // Predicated region
            $region101: #{gruvae_forward.3} parent=95 // pred_check
              _
            $region102: #{gruvae_forward.3} parent=95 // pred_check_branch
              %2443 = sbr.rel target = $region104
            $region103: #{gruvae_forward.3} parent=95 // pred_region
              loop: start=0, step=1, limit=1
              $region105: #{gruvae_forward.3} parent=103 // loop_pre_header
                _
              $region106: #{gruvae_forward.3} parent=103 // loop_header
                %s2446 = sphi 0, %s2450
                %p2447 = scmp.ge.s32.totalorder %s2446, 1
                %s2451 = sphi %s2429, %s2429
                %s2452 = sphi %s2437, %s2437
              $region107: #{gruvae_forward.3} parent=103 // loop_header_branch
                %2449 = sbr.rel (%p2447) target = $region111
              $region108: #{gruvae_forward.3} parent=103 // loop_body
                %v2453 = vld [vmem:[%s2451] sm:$0xff]
                %2454 = vst [vmem:[%s2452] sm:$0xff] %v2453
                %v2455 = vld [vmem:[%s2451 + $0x8] sm:$0xff]
                %2456 = vst [vmem:[%s2452 + $0x40] sm:$0xff] %v2455
              $region109: #{gruvae_forward.3} parent=103 // loop_footer
                %s2450 = sadd.s32 1, %s2446
              $region110: #{gruvae_forward.3} parent=103 // loop_footer_branch
                %2445 = sbr.rel target = $region106
              $region111: #{gruvae_forward.3} parent=103 // loop_exit
                _
            $region104: #{gruvae_forward.3} parent=95 // pred_fallthru
              _
          $region96: #{gruvae_forward.3} parent=91 // pred_fallthru
            _
          %2473 = vnop
        $region92: #{gruvae_forward.3} parent=79 // pred_fallthru
          _
        // Predicated region
        $region127: #{gruvae_forward.3} parent=79 // pred_check
          %p2474 = pneg %p366
        $region128: #{gruvae_forward.3} parent=79 // pred_check_branch
          %2476 = sbr.rel (%p2474) target = $region130
        $region129: #{gruvae_forward.3} parent=79 // pred_region
          _
        $region130: #{gruvae_forward.3} parent=79 // pred_fallthru
          _
      $region80: #{gruvae_forward.3} parent=5 // pred_fallthru
        _
      %p2477 = scmp.le.s32.totalorder 2, %s23
      // Predicated region
      $region131: #{gruvae_forward.3} parent=5 // pred_check
        %p2478 = pneg %p2477
      $region132: #{gruvae_forward.3} parent=5 // pred_check_branch
        %2480 = sbr.rel (%p2478) target = $region134
      $region133: #{gruvae_forward.3} parent=5 // pred_region
        %s2481 = ssub.s32 %s23, 2
        // Predicated region
        $region135: #{gruvae_forward.3} parent=133 // pred_check
          %p2482 = pneg %p398
        $region136: #{gruvae_forward.3} parent=133 // pred_check_branch
          %2484 = sbr.rel (%p2482) target = $region138
        $region137: #{gruvae_forward.3} parent=133 // pred_region
          %s2485 = sand.u32 %s383, 1
          %s2486 = sand.u32 %s383, 1
          %s2487 = smul.addr %s2486, 16
          %s2488 = scalar_lea.vmem [#allocation4], %s2487
        $region138: #{gruvae_forward.3} parent=133 // pred_fallthru
          _
      $region134: #{gruvae_forward.3} parent=5 // pred_fallthru
        _
    $region6: #{gruvae_forward.3} parent=1 // loop_footer
      %s27 = sadd.s32 1, %s23
    $region7: #{gruvae_forward.3} parent=1 // loop_footer_branch
      %22 = sbr.rel target = $region3
    $region8: #{gruvae_forward.3} parent=1 // loop_exit
      _

</llo_original>
